<compile_context>
chip_gen: v5e
topology: v5e:2x2
jax: 0.10.0
libtpu: 0.0.40
codegen_flags: <defaults>
</compile_context>

<pallas_src>
import functools

import jax
import jax.numpy as jnp
from jax.experimental import pallas as pl
from jax.experimental.pallas import tpu as pltpu


def _round_up(x, m):
    return ((x + m - 1) // m) * m


# --------------------------------------------------------------------------
# Fused kernel: all LSTM layers + final FC, grid = ().
# Ref order: x, (W_ih^T, W_hh^T, bias) * num_layers, W_fc^T, b_fc, out,
#            then scratch: gates_scr (f32), seq_scr (bf16).
# Weights are pre-padded/transposed to (in_p, 4*Hp), gate-permuted [i,f,o,g].
# --------------------------------------------------------------------------
def _fused_apt_lstm_kernel(*refs, T, B, H, num_layers, unroll):
    n = num_layers
    x_ref = refs[0]
    lyr = refs[1:1 + 3 * n]
    w_fc_ref = refs[1 + 3 * n]
    b_fc_ref = refs[2 + 3 * n]
    out_ref = refs[3 + 3 * n]
    gates_scr, seq_scr = refs[4 + 3 * n:]

    cur = x_ref[...]                                    # (T*B, Dp) bf16

    h_last = jnp.zeros((B, H), jnp.float32)
    for l in range(n):
        w_ih = lyr[3 * l][...]                          # (Dp/Hp, 4Hp) bf16
        w_hh = lyr[3 * l + 1][...]                      # (Hp,    4Hp) bf16
        b = lyr[3 * l + 2][...]                         # (1,     4Hp) f32

        # Hoisted input projection: one big MXU matmul for all timesteps.
        gx = jnp.dot(cur, w_ih, preferred_element_type=jnp.float32) + b
        gates_scr[...] = gx.reshape(T, B, 4 * H)        # layout-preserving (B%8==0)

        def step(t, carry, _w_hh=w_hh, _l=l):
            h_prev, c_prev = carry                      # f32 vregs, no VMEM round-trip
            g = gates_scr[t] + jnp.dot(h_prev.astype(jnp.bfloat16), _w_hh,
                                       preferred_element_type=jnp.float32)
            # Gate order [i, f, o, g]: one wide sigmoid + one tanh (EUP),
            # every slice is whole-vreg aligned because H % 128 == 0.
            sig = jax.nn.sigmoid(g[:, :3 * H])
            g_t = jnp.tanh(g[:, 3 * H:])
            i_g = sig[:, 0 * H:1 * H]
            f_g = sig[:, 1 * H:2 * H]
            o_g = sig[:, 2 * H:3 * H]
            c_new = f_g * c_prev + i_g * g_t
            h_new = o_g * jnp.tanh(c_new)
            if _l < n - 1:                              # only next layer's input
                seq_scr[t] = h_new.astype(seq_scr.dtype)
            return (h_new, c_new)

        h0 = jnp.zeros((B, H), jnp.float32)
        c0 = jnp.zeros((B, H), jnp.float32)
        h_last, _ = jax.lax.fori_loop(0, T, step, (h0, c0), unroll=unroll)

        if l < n - 1:
            cur = seq_scr[...].reshape(T * B, H)        # bf16, layout-preserving

    # Final FC on h_T of the last layer (== lstm_out[:, -1, :]).
    out_ref[...] = (jnp.dot(h_last.astype(jnp.bfloat16), w_fc_ref[...],
                            preferred_element_type=jnp.float32)
                    + b_fc_ref[...])


# --------------------------------------------------------------------------
# One-time weight prep: gate permute [i,f,g,o]->[i,f,o,g], transpose to
# (in, 4H), pad in-dim/H to lane multiples, fold biases, cast MXU operands bf16.
# --------------------------------------------------------------------------
def prep_params(params, input_dim, hidden_dim, output_dim):
    H = hidden_dim
    Hp = _round_up(H, 128)
    Dp = _round_up(input_dim, 128)
    Op = _round_up(output_dim, 128)
    gate_src = [0, 1, 3, 2]                             # dst blocks [i,f,o,g]

    prepped = []
    in_d, in_dp = input_dim, Dp
    for (w_ih, w_hh, b_ih, b_hh) in params["lstm"]:
        wi = w_ih.astype(jnp.float32)                   # (4H, in_d)
        wh = w_hh.astype(jnp.float32)                   # (4H, H)
        bb = (b_ih + b_hh).astype(jnp.float32)          # (4H,)
        w_ih_p = jnp.zeros((in_dp, 4 * Hp), jnp.float32)
        w_hh_p = jnp.zeros((Hp, 4 * Hp), jnp.float32)
        b_p = jnp.zeros((1, 4 * Hp), jnp.float32)
        for dst, src in enumerate(gate_src):
            w_ih_p = w_ih_p.at[:in_d, dst * Hp:dst * Hp + H].set(
                wi[src * H:(src + 1) * H].T)
            w_hh_p = w_hh_p.at[:H, dst * Hp:dst * Hp + H].set(
                wh[src * H:(src + 1) * H].T)
            b_p = b_p.at[0, dst * Hp:dst * Hp + H].set(bb[src * H:(src + 1) * H])
        prepped.extend([w_ih_p.astype(jnp.bfloat16),
                        w_hh_p.astype(jnp.bfloat16),
                        b_p])
        in_d, in_dp = H, Hp

    w_fc, b_fc = params["fc"]
    w_fc_p = jnp.zeros((Hp, Op), jnp.float32).at[:H, :output_dim].set(
        w_fc.T.astype(jnp.float32))
    b_fc_p = jnp.zeros((1, Op), jnp.float32).at[0, :output_dim].set(
        b_fc.astype(jnp.float32))
    prepped.append(w_fc_p.astype(jnp.bfloat16))
    prepped.append(b_fc_p)
    return tuple(prepped), dict(Hp=Hp, Dp=Dp, Op=Op)


# --------------------------------------------------------------------------
# Forward pass (= APTLSTM.forward, eval semantics)
# --------------------------------------------------------------------------
def apt_lstm_forward(prepped, x, *, output_dim, num_layers, Hp, Dp, Op):
    """x: (B, T, input_dim), batch_first like the PyTorch module."""
    B, T, D = x.shape
    Bp = _round_up(B, 8)

    # Zero-pad batch/feature dims, go time-major, flatten so the per-layer
    # input projection is one big matmul. bf16 at the kernel boundary.
    xp = jnp.zeros((Bp, T, Dp), jnp.float32).at[:B, :, :D].set(
        x.astype(jnp.float32))
    x_tb = jnp.transpose(xp, (1, 0, 2)).reshape(T * Bp, Dp).astype(jnp.bfloat16)

    args = [x_tb, *prepped]

    # VMEM budget sized from the actual buffers (no pipelining: single copy),
    # capped below v7x's 64 MiB physical VMEM.
    scratch_bytes = T * Bp * 4 * Hp * 4 + T * Bp * Hp * 2
    arg_bytes = sum(int(a.size) * a.dtype.itemsize for a in args)
    out_bytes = Bp * Op * 4
    vmem_limit = int(min(max(arg_bytes + out_bytes + scratch_bytes + (2 << 20),
                             8 << 20),
                         60 << 20))

    unroll = T if T <= 16 else 8
    kernel = functools.partial(_fused_apt_lstm_kernel, T=T, B=Bp, H=Hp,
                               num_layers=num_layers, unroll=unroll)
    vmem = pltpu.MemorySpace.VMEM
    out_p = pl.pallas_call(
        kernel,
        out_shape=jax.ShapeDtypeStruct((Bp, Op), jnp.float32),
        in_specs=[pl.BlockSpec(memory_space=vmem)] * len(args),
        out_specs=pl.BlockSpec(memory_space=vmem),
        scratch_shapes=[
            pltpu.VMEM((T, Bp, 4 * Hp), jnp.float32),   # precomputed input gates
            pltpu.VMEM((T, Bp, Hp), jnp.bfloat16),      # inter-layer hidden seq
        ],
        compiler_params=pltpu.CompilerParams(vmem_limit_bytes=vmem_limit),
    )(*args)
    return out_p[:B, :output_dim]


# --------------------------------------------------------------------------
# Parameter init (PyTorch-style uniform(-1/sqrt(H), 1/sqrt(H))), deterministic
# --------------------------------------------------------------------------
def init_params(key, input_dim, hidden_dim, output_dim, num_layers):
    k = 1.0 / float(hidden_dim) ** 0.5
    lstm_params = []
    for layer in range(num_layers):
        in_d = input_dim if layer == 0 else hidden_dim
        key, k1, k2, k3, k4 = jax.random.split(key, 5)
        w_ih = jax.random.uniform(k1, (4 * hidden_dim, in_d),
                                  minval=-k, maxval=k, dtype=jnp.float32)
        w_hh = jax.random.uniform(k2, (4 * hidden_dim, hidden_dim),
                                  minval=-k, maxval=k, dtype=jnp.float32)
        b_ih = jax.random.uniform(k3, (4 * hidden_dim,),
                                  minval=-k, maxval=k, dtype=jnp.float32)
        b_hh = jax.random.uniform(k4, (4 * hidden_dim,),
                                  minval=-k, maxval=k, dtype=jnp.float32)
        lstm_params.append((w_ih, w_hh, b_ih, b_hh))
    key, k5, k6 = jax.random.split(key, 3)
    w_fc = jax.random.uniform(k5, (output_dim, hidden_dim),
                              minval=-k, maxval=k, dtype=jnp.float32)
    b_fc = jax.random.uniform(k6, (output_dim,),
                              minval=-k, maxval=k, dtype=jnp.float32)
    return {"lstm": lstm_params, "fc": (w_fc, b_fc)}


# --------------------------------------------------------------------------
# Pure-JAX reference for validation (standard [i, f, g, o] gate order, f32)
# --------------------------------------------------------------------------
def ref_forward(params, x):
    xb = x.astype(jnp.float32)
    B, T, _ = xb.shape
    H = params["lstm"][0][1].shape[1]
    inp = xb
    for (w_ih, w_hh, b_ih, b_hh) in params["lstm"]:
        h = jnp.zeros((B, H), jnp.float32)
        c = jnp.zeros((B, H), jnp.float32)
        outs = []
        for t in range(T):
            g = inp[:, t] @ w_ih.T + b_ih + h @ w_hh.T + b_hh
            i, f, gg, o = jnp.split(g, 4, axis=-1)
            i = jax.nn.sigmoid(i)
            f = jax.nn.sigmoid(f)
            gg = jnp.tanh(gg)
            o = jax.nn.sigmoid(o)
            c = f * c + i * gg
            h = o * jnp.tanh(c)
            outs.append(h)
        inp = jnp.stack(outs, axis=1)
    w_fc, b_fc = params["fc"]
    return inp[:, -1] @ w_fc.T + b_fc


if __name__ == "__main__":
    # Small shapes consistent with the module's forward.
    B, T = 2, 8
    input_dim, hidden_dim, output_dim, num_layers = 4, 32, 4, 2
    dropout_rate = 0.1  # TODO(synk): nn.LSTM dropout is train-only; eval semantics here.

    key = jax.random.PRNGKey(0)
    key, pkey, xkey = jax.random.split(key, 3)
    params = init_params(pkey, input_dim, hidden_dim, output_dim, num_layers)
    x = jax.random.normal(xkey, (B, T, input_dim), dtype=jnp.float32)

    # One-time parameter prep (hoisted out of the per-call forward).
    prepped, dims = prep_params(params, input_dim, hidden_dim, output_dim)

    fwd = jax.jit(functools.partial(apt_lstm_forward,
                                    output_dim=output_dim,
                                    num_layers=num_layers,
                                    **dims))
    out = fwd(prepped, x)
    out = jax.block_until_ready(out)

    ref = ref_forward(params, x)
    assert out.shape == (B, output_dim)
    max_err = float(jnp.max(jnp.abs(out - ref)))
    # bf16 MXU operands -> relaxed tolerance vs. the f32 reference.
    assert jnp.allclose(out, ref, atol=2e-2, rtol=2e-2), \
        f"mismatch vs reference (max abs err {max_err})"

    print("KERNEL_OK")
</pallas_src>

<mosaic_0001>
module attributes {stable_mosaic.version = 11 : i64} {
  func.func @_fused_apt_lstm_kernel(%arg0: memref<64x128xbf16, #tpu.memory_space<vmem>>, %arg1: memref<128x512xbf16, #tpu.memory_space<vmem>>, %arg2: memref<128x512xbf16, #tpu.memory_space<vmem>>, %arg3: memref<1x512xf32, #tpu.memory_space<vmem>>, %arg4: memref<128x512xbf16, #tpu.memory_space<vmem>>, %arg5: memref<128x512xbf16, #tpu.memory_space<vmem>>, %arg6: memref<1x512xf32, #tpu.memory_space<vmem>>, %arg7: memref<128x128xbf16, #tpu.memory_space<vmem>>, %arg8: memref<1x128xf32, #tpu.memory_space<vmem>>, %arg9: memref<8x128xf32, #tpu.memory_space<vmem>>, %arg10: memref<8x8x512xf32, #tpu.memory_space<vmem>>, %arg11: memref<8x8x128xbf16, #tpu.memory_space<vmem>>) attributes {dimension_semantics = [], scalar_prefetch = 0 : i64, scratch_operands = 2 : i64, tpu.core_type = #tpu.core_type<tc>} {
    %c0 = arith.constant 0 : index
    %c0_0 = arith.constant 0 : index
    %0 = vector.load %arg0[%c0, %c0_0] : memref<64x128xbf16, #tpu.memory_space<vmem>>, vector<64x128xbf16>
    %c0_1 = arith.constant 0 : index
    %c0_2 = arith.constant 0 : index
    %1 = vector.load %arg1[%c0_1, %c0_2] : memref<128x512xbf16, #tpu.memory_space<vmem>>, vector<128x512xbf16>
    %c0_3 = arith.constant 0 : index
    %c0_4 = arith.constant 0 : index
    %2 = vector.load %arg2[%c0_3, %c0_4] : memref<128x512xbf16, #tpu.memory_space<vmem>>, vector<128x512xbf16>
    %c0_5 = arith.constant 0 : index
    %c0_6 = arith.constant 0 : index
    %3 = vector.load %arg3[%c0_5, %c0_6] : memref<1x512xf32, #tpu.memory_space<vmem>>, vector<1x512xf32>
    %cst = arith.constant dense<0.000000e+00> : vector<64x512xf32>
    %4 = tpu.matmul %0, %1, %cst {dimension_numbers = #tpu.dot_dimension_numbers<[1], [0], [0], [1], [0, 0, 1, 1], [], []>} : vector<64x128xbf16>, vector<128x512xbf16>, vector<64x512xf32> -> vector<64x512xf32>
    %5 = vector.broadcast %3 : vector<1x512xf32> to vector<64x512xf32>
    %6 = arith.addf %4, %5 : vector<64x512xf32>
    %7 = vector.shape_cast %6 : vector<64x512xf32> to vector<8x8x512xf32>
    %c0_7 = arith.constant 0 : index
    %c0_8 = arith.constant 0 : index
    %c0_9 = arith.constant 0 : index
    %8 = vector.load %arg10[%c0_7, %c0_8, %c0_9] : memref<8x8x512xf32, #tpu.memory_space<vmem>>, vector<8x8x512xf32>
    tpu.vector_store %arg10[%c0_7, %c0_8, %c0_9], %7 {strides = array<i32>} : memref<8x8x512xf32, #tpu.memory_space<vmem>>, vector<8x8x512xf32>,
    %cst_10 = arith.constant 0.000000e+00 : f32
    %9 = vector.broadcast %cst_10 : f32 to vector<8x128xf32>
    %cst_11 = arith.constant 0.000000e+00 : f32
    %10 = vector.broadcast %cst_11 : f32 to vector<8x128xf32>
    %c0_i32 = arith.constant 0 : i32
    %11 = arith.index_cast %c0_i32 : i32 to index
    %c0_12 = arith.constant 0 : index
    %c0_13 = arith.constant 0 : index
    %12 = vector.load %arg10[%11, %c0_12, %c0_13] : memref<8x8x512xf32, #tpu.memory_space<vmem>>, vector<1x8x512xf32>
    %13 = vector.shape_cast %12 : vector<1x8x512xf32> to vector<8x512xf32>
    %14 = arith.truncf %9 : vector<8x128xf32> to vector<8x128xbf16>
    %cst_14 = arith.constant dense<0.000000e+00> : vector<8x512xf32>
    %15 = tpu.matmul %14, %2, %cst_14 {dimension_numbers = #tpu.dot_dimension_numbers<[1], [0], [0], [1], [0, 0, 1, 1], [], []>} : vector<8x128xbf16>, vector<128x512xbf16>, vector<8x512xf32> -> vector<8x512xf32>
    %16 = arith.addf %13, %15 : vector<8x512xf32>
    %17 = vector.extract_strided_slice %16 {offsets = [0, 0], sizes = [8, 384], strides = [1, 1]} : vector<8x512xf32> to vector<8x384xf32>
    %18 = arith.negf %17 : vector<8x384xf32>
    %19 = math.exp %18 : vector<8x384xf32>
    %cst_15 = arith.constant 1.000000e+00 : f32
    %20 = vector.broadcast %cst_15 : f32 to vector<8x384xf32>
    %21 = arith.addf %20, %19 : vector<8x384xf32>
    %22 = arith.divf %20, %21 : vector<8x384xf32>
    %23 = vector.extract_strided_slice %16 {offsets = [0, 384], sizes = [8, 128], strides = [1, 1]} : vector<8x512xf32> to vector<8x128xf32>
    %24 = math.tanh %23 : vector<8x128xf32>
    %25 = vector.extract_strided_slice %22 {offsets = [0, 0], sizes = [8, 128], strides = [1, 1]} : vector<8x384xf32> to vector<8x128xf32>
    %26 = vector.extract_strided_slice %22 {offsets = [0, 128], sizes = [8, 128], strides = [1, 1]} : vector<8x384xf32> to vector<8x128xf32>
    %27 = vector.extract_strided_slice %22 {offsets = [0, 256], sizes = [8, 128], strides = [1, 1]} : vector<8x384xf32> to vector<8x128xf32>
    %28 = arith.mulf %26, %10 : vector<8x128xf32>
    %29 = arith.mulf %25, %24 : vector<8x128xf32>
    %30 = arith.addf %28, %29 : vector<8x128xf32>
    %31 = math.tanh %30 : vector<8x128xf32>
    %32 = arith.mulf %27, %31 : vector<8x128xf32>
    %33 = arith.truncf %32 : vector<8x128xf32> to vector<8x128xbf16>
    %34 = arith.index_cast %c0_i32 : i32 to index
    %c0_16 = arith.constant 0 : index
    %c0_17 = arith.constant 0 : index
    %35 = vector.load %arg11[%34, %c0_16, %c0_17] : memref<8x8x128xbf16, #tpu.memory_space<vmem>>, vector<1x8x128xbf16>
    %36 = vector.shape_cast %35 : vector<1x8x128xbf16> to vector<8x128xbf16>
    %37 = vector.shape_cast %33 : vector<8x128xbf16> to vector<1x8x128xbf16>
    tpu.vector_store %arg11[%34, %c0_16, %c0_17], %37 {strides = array<i32>} : memref<8x8x128xbf16, #tpu.memory_space<vmem>>, vector<1x8x128xbf16>,
    %c1_i32 = arith.constant 1 : i32
    %38 = arith.index_cast %c1_i32 : i32 to index
    %c0_18 = arith.constant 0 : index
    %c0_19 = arith.constant 0 : index
    %39 = vector.load %arg10[%38, %c0_18, %c0_19] : memref<8x8x512xf32, #tpu.memory_space<vmem>>, vector<1x8x512xf32>
    %40 = vector.shape_cast %39 : vector<1x8x512xf32> to vector<8x512xf32>
    %41 = arith.truncf %32 : vector<8x128xf32> to vector<8x128xbf16>
    %cst_20 = arith.constant dense<0.000000e+00> : vector<8x512xf32>
    %42 = tpu.matmul %41, %2, %cst_20 {dimension_numbers = #tpu.dot_dimension_numbers<[1], [0], [0], [1], [0, 0, 1, 1], [], []>} : vector<8x128xbf16>, vector<128x512xbf16>, vector<8x512xf32> -> vector<8x512xf32>
    %43 = arith.addf %40, %42 : vector<8x512xf32>
    %44 = vector.extract_strided_slice %43 {offsets = [0, 0], sizes = [8, 384], strides = [1, 1]} : vector<8x512xf32> to vector<8x384xf32>
    %45 = arith.negf %44 : vector<8x384xf32>
    %46 = math.exp %45 : vector<8x384xf32>
    %cst_21 = arith.constant 1.000000e+00 : f32
    %47 = vector.broadcast %cst_21 : f32 to vector<8x384xf32>
    %48 = arith.addf %47, %46 : vector<8x384xf32>
    %49 = arith.divf %47, %48 : vector<8x384xf32>
    %50 = vector.extract_strided_slice %43 {offsets = [0, 384], sizes = [8, 128], strides = [1, 1]} : vector<8x512xf32> to vector<8x128xf32>
    %51 = math.tanh %50 : vector<8x128xf32>
    %52 = vector.extract_strided_slice %49 {offsets = [0, 0], sizes = [8, 128], strides = [1, 1]} : vector<8x384xf32> to vector<8x128xf32>
    %53 = vector.extract_strided_slice %49 {offsets = [0, 128], sizes = [8, 128], strides = [1, 1]} : vector<8x384xf32> to vector<8x128xf32>
    %54 = vector.extract_strided_slice %49 {offsets = [0, 256], sizes = [8, 128], strides = [1, 1]} : vector<8x384xf32> to vector<8x128xf32>
    %55 = arith.mulf %53, %30 : vector<8x128xf32>
    %56 = arith.mulf %52, %51 : vector<8x128xf32>
    %57 = arith.addf %55, %56 : vector<8x128xf32>
    %58 = math.tanh %57 : vector<8x128xf32>
    %59 = arith.mulf %54, %58 : vector<8x128xf32>
    %60 = arith.truncf %59 : vector<8x128xf32> to vector<8x128xbf16>
    %61 = arith.index_cast %c1_i32 : i32 to index
    %c0_22 = arith.constant 0 : index
    %c0_23 = arith.constant 0 : index
    %62 = vector.load %arg11[%61, %c0_22, %c0_23] : memref<8x8x128xbf16, #tpu.memory_space<vmem>>, vector<1x8x128xbf16>
    %63 = vector.shape_cast %62 : vector<1x8x128xbf16> to vector<8x128xbf16>
    %64 = vector.shape_cast %60 : vector<8x128xbf16> to vector<1x8x128xbf16>
    tpu.vector_store %arg11[%61, %c0_22, %c0_23], %64 {strides = array<i32>} : memref<8x8x128xbf16, #tpu.memory_space<vmem>>, vector<1x8x128xbf16>,
    %c2_i32 = arith.constant 2 : i32
    %65 = arith.index_cast %c2_i32 : i32 to index
    %c0_24 = arith.constant 0 : index
    %c0_25 = arith.constant 0 : index
    %66 = vector.load %arg10[%65, %c0_24, %c0_25] : memref<8x8x512xf32, #tpu.memory_space<vmem>>, vector<1x8x512xf32>
    %67 = vector.shape_cast %66 : vector<1x8x512xf32> to vector<8x512xf32>
    %68 = arith.truncf %59 : vector<8x128xf32> to vector<8x128xbf16>
    %cst_26 = arith.constant dense<0.000000e+00> : vector<8x512xf32>
    %69 = tpu.matmul %68, %2, %cst_26 {dimension_numbers = #tpu.dot_dimension_numbers<[1], [0], [0], [1], [0, 0, 1, 1], [], []>} : vector<8x128xbf16>, vector<128x512xbf16>, vector<8x512xf32> -> vector<8x512xf32>
    %70 = arith.addf %67, %69 : vector<8x512xf32>
    %71 = vector.extract_strided_slice %70 {offsets = [0, 0], sizes = [8, 384], strides = [1, 1]} : vector<8x512xf32> to vector<8x384xf32>
    %72 = arith.negf %71 : vector<8x384xf32>
    %73 = math.exp %72 : vector<8x384xf32>
    %cst_27 = arith.constant 1.000000e+00 : f32
    %74 = vector.broadcast %cst_27 : f32 to vector<8x384xf32>
    %75 = arith.addf %74, %73 : vector<8x384xf32>
    %76 = arith.divf %74, %75 : vector<8x384xf32>
    %77 = vector.extract_strided_slice %70 {offsets = [0, 384], sizes = [8, 128], strides = [1, 1]} : vector<8x512xf32> to vector<8x128xf32>
    %78 = math.tanh %77 : vector<8x128xf32>
    %79 = vector.extract_strided_slice %76 {offsets = [0, 0], sizes = [8, 128], strides = [1, 1]} : vector<8x384xf32> to vector<8x128xf32>
    %80 = vector.extract_strided_slice %76 {offsets = [0, 128], sizes = [8, 128], strides = [1, 1]} : vector<8x384xf32> to vector<8x128xf32>
    %81 = vector.extract_strided_slice %76 {offsets = [0, 256], sizes = [8, 128], strides = [1, 1]} : vector<8x384xf32> to vector<8x128xf32>
    %82 = arith.mulf %80, %57 : vector<8x128xf32>
    %83 = arith.mulf %79, %78 : vector<8x128xf32>
    %84 = arith.addf %82, %83 : vector<8x128xf32>
    %85 = math.tanh %84 : vector<8x128xf32>
    %86 = arith.mulf %81, %85 : vector<8x128xf32>
    %87 = arith.truncf %86 : vector<8x128xf32> to vector<8x128xbf16>
    %88 = arith.index_cast %c2_i32 : i32 to index
    %c0_28 = arith.constant 0 : index
    %c0_29 = arith.constant 0 : index
    %89 = vector.load %arg11[%88, %c0_28, %c0_29] : memref<8x8x128xbf16, #tpu.memory_space<vmem>>, vector<1x8x128xbf16>
    %90 = vector.shape_cast %89 : vector<1x8x128xbf16> to vector<8x128xbf16>
    %91 = vector.shape_cast %87 : vector<8x128xbf16> to vector<1x8x128xbf16>
    tpu.vector_store %arg11[%88, %c0_28, %c0_29], %91 {strides = array<i32>} : memref<8x8x128xbf16, #tpu.memory_space<vmem>>, vector<1x8x128xbf16>,
    %c3_i32 = arith.constant 3 : i32
    %92 = arith.index_cast %c3_i32 : i32 to index
    %c0_30 = arith.constant 0 : index
    %c0_31 = arith.constant 0 : index
    %93 = vector.load %arg10[%92, %c0_30, %c0_31] : memref<8x8x512xf32, #tpu.memory_space<vmem>>, vector<1x8x512xf32>
    %94 = vector.shape_cast %93 : vector<1x8x512xf32> to vector<8x512xf32>
    %95 = arith.truncf %86 : vector<8x128xf32> to vector<8x128xbf16>
    %cst_32 = arith.constant dense<0.000000e+00> : vector<8x512xf32>
    %96 = tpu.matmul %95, %2, %cst_32 {dimension_numbers = #tpu.dot_dimension_numbers<[1], [0], [0], [1], [0, 0, 1, 1], [], []>} : vector<8x128xbf16>, vector<128x512xbf16>, vector<8x512xf32> -> vector<8x512xf32>
    %97 = arith.addf %94, %96 : vector<8x512xf32>
    %98 = vector.extract_strided_slice %97 {offsets = [0, 0], sizes = [8, 384], strides = [1, 1]} : vector<8x512xf32> to vector<8x384xf32>
    %99 = arith.negf %98 : vector<8x384xf32>
    %100 = math.exp %99 : vector<8x384xf32>
    %cst_33 = arith.constant 1.000000e+00 : f32
    %101 = vector.broadcast %cst_33 : f32 to vector<8x384xf32>
    %102 = arith.addf %101, %100 : vector<8x384xf32>
    %103 = arith.divf %101, %102 : vector<8x384xf32>
    %104 = vector.extract_strided_slice %97 {offsets = [0, 384], sizes = [8, 128], strides = [1, 1]} : vector<8x512xf32> to vector<8x128xf32>
    %105 = math.tanh %104 : vector<8x128xf32>
    %106 = vector.extract_strided_slice %103 {offsets = [0, 0], sizes = [8, 128], strides = [1, 1]} : vector<8x384xf32> to vector<8x128xf32>
    %107 = vector.extract_strided_slice %103 {offsets = [0, 128], sizes = [8, 128], strides = [1, 1]} : vector<8x384xf32> to vector<8x128xf32>
    %108 = vector.extract_strided_slice %103 {offsets = [0, 256], sizes = [8, 128], strides = [1, 1]} : vector<8x384xf32> to vector<8x128xf32>
    %109 = arith.mulf %107, %84 : vector<8x128xf32>
    %110 = arith.mulf %106, %105 : vector<8x128xf32>
    %111 = arith.addf %109, %110 : vector<8x128xf32>
    %112 = math.tanh %111 : vector<8x128xf32>
    %113 = arith.mulf %108, %112 : vector<8x128xf32>
    %114 = arith.truncf %113 : vector<8x128xf32> to vector<8x128xbf16>
    %115 = arith.index_cast %c3_i32 : i32 to index
    %c0_34 = arith.constant 0 : index
    %c0_35 = arith.constant 0 : index
    %116 = vector.load %arg11[%115, %c0_34, %c0_35] : memref<8x8x128xbf16, #tpu.memory_space<vmem>>, vector<1x8x128xbf16>
    %117 = vector.shape_cast %116 : vector<1x8x128xbf16> to vector<8x128xbf16>
    %118 = vector.shape_cast %114 : vector<8x128xbf16> to vector<1x8x128xbf16>
    tpu.vector_store %arg11[%115, %c0_34, %c0_35], %118 {strides = array<i32>} : memref<8x8x128xbf16, #tpu.memory_space<vmem>>, vector<1x8x128xbf16>,
    %c4_i32 = arith.constant 4 : i32
    %119 = arith.index_cast %c4_i32 : i32 to index
    %c0_36 = arith.constant 0 : index
    %c0_37 = arith.constant 0 : index
    %120 = vector.load %arg10[%119, %c0_36, %c0_37] : memref<8x8x512xf32, #tpu.memory_space<vmem>>, vector<1x8x512xf32>
    %121 = vector.shape_cast %120 : vector<1x8x512xf32> to vector<8x512xf32>
    %122 = arith.truncf %113 : vector<8x128xf32> to vector<8x128xbf16>
    %cst_38 = arith.constant dense<0.000000e+00> : vector<8x512xf32>
    %123 = tpu.matmul %122, %2, %cst_38 {dimension_numbers = #tpu.dot_dimension_numbers<[1], [0], [0], [1], [0, 0, 1, 1], [], []>} : vector<8x128xbf16>, vector<128x512xbf16>, vector<8x512xf32> -> vector<8x512xf32>
    %124 = arith.addf %121, %123 : vector<8x512xf32>
    %125 = vector.extract_strided_slice %124 {offsets = [0, 0], sizes = [8, 384], strides = [1, 1]} : vector<8x512xf32> to vector<8x384xf32>
    %126 = arith.negf %125 : vector<8x384xf32>
    %127 = math.exp %126 : vector<8x384xf32>
    %cst_39 = arith.constant 1.000000e+00 : f32
    %128 = vector.broadcast %cst_39 : f32 to vector<8x384xf32>
    %129 = arith.addf %128, %127 : vector<8x384xf32>
    %130 = arith.divf %128, %129 : vector<8x384xf32>
    %131 = vector.extract_strided_slice %124 {offsets = [0, 384], sizes = [8, 128], strides = [1, 1]} : vector<8x512xf32> to vector<8x128xf32>
    %132 = math.tanh %131 : vector<8x128xf32>
    %133 = vector.extract_strided_slice %130 {offsets = [0, 0], sizes = [8, 128], strides = [1, 1]} : vector<8x384xf32> to vector<8x128xf32>
    %134 = vector.extract_strided_slice %130 {offsets = [0, 128], sizes = [8, 128], strides = [1, 1]} : vector<8x384xf32> to vector<8x128xf32>
    %135 = vector.extract_strided_slice %130 {offsets = [0, 256], sizes = [8, 128], strides = [1, 1]} : vector<8x384xf32> to vector<8x128xf32>
    %136 = arith.mulf %134, %111 : vector<8x128xf32>
    %137 = arith.mulf %133, %132 : vector<8x128xf32>
    %138 = arith.addf %136, %137 : vector<8x128xf32>
    %139 = math.tanh %138 : vector<8x128xf32>
    %140 = arith.mulf %135, %139 : vector<8x128xf32>
    %141 = arith.truncf %140 : vector<8x128xf32> to vector<8x128xbf16>
    %142 = arith.index_cast %c4_i32 : i32 to index
    %c0_40 = arith.constant 0 : index
    %c0_41 = arith.constant 0 : index
    %143 = vector.load %arg11[%142, %c0_40, %c0_41] : memref<8x8x128xbf16, #tpu.memory_space<vmem>>, vector<1x8x128xbf16>
    %144 = vector.shape_cast %143 : vector<1x8x128xbf16> to vector<8x128xbf16>
    %145 = vector.shape_cast %141 : vector<8x128xbf16> to vector<1x8x128xbf16>
    tpu.vector_store %arg11[%142, %c0_40, %c0_41], %145 {strides = array<i32>} : memref<8x8x128xbf16, #tpu.memory_space<vmem>>, vector<1x8x128xbf16>,
    %c5_i32 = arith.constant 5 : i32
    %146 = arith.index_cast %c5_i32 : i32 to index
    %c0_42 = arith.constant 0 : index
    %c0_43 = arith.constant 0 : index
    %147 = vector.load %arg10[%146, %c0_42, %c0_43] : memref<8x8x512xf32, #tpu.memory_space<vmem>>, vector<1x8x512xf32>
    %148 = vector.shape_cast %147 : vector<1x8x512xf32> to vector<8x512xf32>
    %149 = arith.truncf %140 : vector<8x128xf32> to vector<8x128xbf16>
    %cst_44 = arith.constant dense<0.000000e+00> : vector<8x512xf32>
    %150 = tpu.matmul %149, %2, %cst_44 {dimension_numbers = #tpu.dot_dimension_numbers<[1], [0], [0], [1], [0, 0, 1, 1], [], []>} : vector<8x128xbf16>, vector<128x512xbf16>, vector<8x512xf32> -> vector<8x512xf32>
    %151 = arith.addf %148, %150 : vector<8x512xf32>
    %152 = vector.extract_strided_slice %151 {offsets = [0, 0], sizes = [8, 384], strides = [1, 1]} : vector<8x512xf32> to vector<8x384xf32>
    %153 = arith.negf %152 : vector<8x384xf32>
    %154 = math.exp %153 : vector<8x384xf32>
    %cst_45 = arith.constant 1.000000e+00 : f32
    %155 = vector.broadcast %cst_45 : f32 to vector<8x384xf32>
    %156 = arith.addf %155, %154 : vector<8x384xf32>
    %157 = arith.divf %155, %156 : vector<8x384xf32>
    %158 = vector.extract_strided_slice %151 {offsets = [0, 384], sizes = [8, 128], strides = [1, 1]} : vector<8x512xf32> to vector<8x128xf32>
    %159 = math.tanh %158 : vector<8x128xf32>
    %160 = vector.extract_strided_slice %157 {offsets = [0, 0], sizes = [8, 128], strides = [1, 1]} : vector<8x384xf32> to vector<8x128xf32>
    %161 = vector.extract_strided_slice %157 {offsets = [0, 128], sizes = [8, 128], strides = [1, 1]} : vector<8x384xf32> to vector<8x128xf32>
    %162 = vector.extract_strided_slice %157 {offsets = [0, 256], sizes = [8, 128], strides = [1, 1]} : vector<8x384xf32> to vector<8x128xf32>
    %163 = arith.mulf %161, %138 : vector<8x128xf32>
    %164 = arith.mulf %160, %159 : vector<8x128xf32>
    %165 = arith.addf %163, %164 : vector<8x128xf32>
    %166 = math.tanh %165 : vector<8x128xf32>
    %167 = arith.mulf %162, %166 : vector<8x128xf32>
    %168 = arith.truncf %167 : vector<8x128xf32> to vector<8x128xbf16>
    %169 = arith.index_cast %c5_i32 : i32 to index
    %c0_46 = arith.constant 0 : index
    %c0_47 = arith.constant 0 : index
    %170 = vector.load %arg11[%169, %c0_46, %c0_47] : memref<8x8x128xbf16, #tpu.memory_space<vmem>>, vector<1x8x128xbf16>
    %171 = vector.shape_cast %170 : vector<1x8x128xbf16> to vector<8x128xbf16>
    %172 = vector.shape_cast %168 : vector<8x128xbf16> to vector<1x8x128xbf16>
    tpu.vector_store %arg11[%169, %c0_46, %c0_47], %172 {strides = array<i32>} : memref<8x8x128xbf16, #tpu.memory_space<vmem>>, vector<1x8x128xbf16>,
    %c6_i32 = arith.constant 6 : i32
    %173 = arith.index_cast %c6_i32 : i32 to index
    %c0_48 = arith.constant 0 : index
    %c0_49 = arith.constant 0 : index
    %174 = vector.load %arg10[%173, %c0_48, %c0_49] : memref<8x8x512xf32, #tpu.memory_space<vmem>>, vector<1x8x512xf32>
    %175 = vector.shape_cast %174 : vector<1x8x512xf32> to vector<8x512xf32>
    %176 = arith.truncf %167 : vector<8x128xf32> to vector<8x128xbf16>
    %cst_50 = arith.constant dense<0.000000e+00> : vector<8x512xf32>
    %177 = tpu.matmul %176, %2, %cst_50 {dimension_numbers = #tpu.dot_dimension_numbers<[1], [0], [0], [1], [0, 0, 1, 1], [], []>} : vector<8x128xbf16>, vector<128x512xbf16>, vector<8x512xf32> -> vector<8x512xf32>
    %178 = arith.addf %175, %177 : vector<8x512xf32>
    %179 = vector.extract_strided_slice %178 {offsets = [0, 0], sizes = [8, 384], strides = [1, 1]} : vector<8x512xf32> to vector<8x384xf32>
    %180 = arith.negf %179 : vector<8x384xf32>
    %181 = math.exp %180 : vector<8x384xf32>
    %cst_51 = arith.constant 1.000000e+00 : f32
    %182 = vector.broadcast %cst_51 : f32 to vector<8x384xf32>
    %183 = arith.addf %182, %181 : vector<8x384xf32>
    %184 = arith.divf %182, %183 : vector<8x384xf32>
    %185 = vector.extract_strided_slice %178 {offsets = [0, 384], sizes = [8, 128], strides = [1, 1]} : vector<8x512xf32> to vector<8x128xf32>
    %186 = math.tanh %185 : vector<8x128xf32>
    %187 = vector.extract_strided_slice %184 {offsets = [0, 0], sizes = [8, 128], strides = [1, 1]} : vector<8x384xf32> to vector<8x128xf32>
    %188 = vector.extract_strided_slice %184 {offsets = [0, 128], sizes = [8, 128], strides = [1, 1]} : vector<8x384xf32> to vector<8x128xf32>
    %189 = vector.extract_strided_slice %184 {offsets = [0, 256], sizes = [8, 128], strides = [1, 1]} : vector<8x384xf32> to vector<8x128xf32>
    %190 = arith.mulf %188, %165 : vector<8x128xf32>
    %191 = arith.mulf %187, %186 : vector<8x128xf32>
    %192 = arith.addf %190, %191 : vector<8x128xf32>
    %193 = math.tanh %192 : vector<8x128xf32>
    %194 = arith.mulf %189, %193 : vector<8x128xf32>
    %195 = arith.truncf %194 : vector<8x128xf32> to vector<8x128xbf16>
    %196 = arith.index_cast %c6_i32 : i32 to index
    %c0_52 = arith.constant 0 : index
    %c0_53 = arith.constant 0 : index
    %197 = vector.load %arg11[%196, %c0_52, %c0_53] : memref<8x8x128xbf16, #tpu.memory_space<vmem>>, vector<1x8x128xbf16>
    %198 = vector.shape_cast %197 : vector<1x8x128xbf16> to vector<8x128xbf16>
    %199 = vector.shape_cast %195 : vector<8x128xbf16> to vector<1x8x128xbf16>
    tpu.vector_store %arg11[%196, %c0_52, %c0_53], %199 {strides = array<i32>} : memref<8x8x128xbf16, #tpu.memory_space<vmem>>, vector<1x8x128xbf16>,
    %c7_i32 = arith.constant 7 : i32
    %200 = arith.index_cast %c7_i32 : i32 to index
    %c0_54 = arith.constant 0 : index
    %c0_55 = arith.constant 0 : index
    %201 = vector.load %arg10[%200, %c0_54, %c0_55] : memref<8x8x512xf32, #tpu.memory_space<vmem>>, vector<1x8x512xf32>
    %202 = vector.shape_cast %201 : vector<1x8x512xf32> to vector<8x512xf32>
    %203 = arith.truncf %194 : vector<8x128xf32> to vector<8x128xbf16>
    %cst_56 = arith.constant dense<0.000000e+00> : vector<8x512xf32>
    %204 = tpu.matmul %203, %2, %cst_56 {dimension_numbers = #tpu.dot_dimension_numbers<[1], [0], [0], [1], [0, 0, 1, 1], [], []>} : vector<8x128xbf16>, vector<128x512xbf16>, vector<8x512xf32> -> vector<8x512xf32>
    %205 = arith.addf %202, %204 : vector<8x512xf32>
    %206 = vector.extract_strided_slice %205 {offsets = [0, 0], sizes = [8, 384], strides = [1, 1]} : vector<8x512xf32> to vector<8x384xf32>
    %207 = arith.negf %206 : vector<8x384xf32>
    %208 = math.exp %207 : vector<8x384xf32>
    %cst_57 = arith.constant 1.000000e+00 : f32
    %209 = vector.broadcast %cst_57 : f32 to vector<8x384xf32>
    %210 = arith.addf %209, %208 : vector<8x384xf32>
    %211 = arith.divf %209, %210 : vector<8x384xf32>
    %212 = vector.extract_strided_slice %205 {offsets = [0, 384], sizes = [8, 128], strides = [1, 1]} : vector<8x512xf32> to vector<8x128xf32>
    %213 = math.tanh %212 : vector<8x128xf32>
    %214 = vector.extract_strided_slice %211 {offsets = [0, 0], sizes = [8, 128], strides = [1, 1]} : vector<8x384xf32> to vector<8x128xf32>
    %215 = vector.extract_strided_slice %211 {offsets = [0, 128], sizes = [8, 128], strides = [1, 1]} : vector<8x384xf32> to vector<8x128xf32>
    %216 = vector.extract_strided_slice %211 {offsets = [0, 256], sizes = [8, 128], strides = [1, 1]} : vector<8x384xf32> to vector<8x128xf32>
    %217 = arith.mulf %215, %192 : vector<8x128xf32>
    %218 = arith.mulf %214, %213 : vector<8x128xf32>
    %219 = arith.addf %217, %218 : vector<8x128xf32>
    %220 = math.tanh %219 : vector<8x128xf32>
    %221 = arith.mulf %216, %220 : vector<8x128xf32>
    %222 = arith.truncf %221 : vector<8x128xf32> to vector<8x128xbf16>
    %223 = arith.index_cast %c7_i32 : i32 to index
    %c0_58 = arith.constant 0 : index
    %c0_59 = arith.constant 0 : index
    %224 = vector.load %arg11[%223, %c0_58, %c0_59] : memref<8x8x128xbf16, #tpu.memory_space<vmem>>, vector<1x8x128xbf16>
    %225 = vector.shape_cast %224 : vector<1x8x128xbf16> to vector<8x128xbf16>
    %226 = vector.shape_cast %222 : vector<8x128xbf16> to vector<1x8x128xbf16>
    tpu.vector_store %arg11[%223, %c0_58, %c0_59], %226 {strides = array<i32>} : memref<8x8x128xbf16, #tpu.memory_space<vmem>>, vector<1x8x128xbf16>,
    %c8_i32 = arith.constant 8 : i32
    %c0_60 = arith.constant 0 : index
    %c0_61 = arith.constant 0 : index
    %c0_62 = arith.constant 0 : index
    %227 = vector.load %arg11[%c0_60, %c0_61, %c0_62] : memref<8x8x128xbf16, #tpu.memory_space<vmem>>, vector<8x8x128xbf16>
    %228 = vector.shape_cast %227 : vector<8x8x128xbf16> to vector<64x128xbf16>
    %c0_63 = arith.constant 0 : index
    %c0_64 = arith.constant 0 : index
    %229 = vector.load %arg4[%c0_63, %c0_64] : memref<128x512xbf16, #tpu.memory_space<vmem>>, vector<128x512xbf16>
    %c0_65 = arith.constant 0 : index
    %c0_66 = arith.constant 0 : index
    %230 = vector.load %arg5[%c0_65, %c0_66] : memref<128x512xbf16, #tpu.memory_space<vmem>>, vector<128x512xbf16>
    %c0_67 = arith.constant 0 : index
    %c0_68 = arith.constant 0 : index
    %231 = vector.load %arg6[%c0_67, %c0_68] : memref<1x512xf32, #tpu.memory_space<vmem>>, vector<1x512xf32>
    %cst_69 = arith.constant dense<0.000000e+00> : vector<64x512xf32>
    %232 = tpu.matmul %228, %229, %cst_69 {dimension_numbers = #tpu.dot_dimension_numbers<[1], [0], [0], [1], [0, 0, 1, 1], [], []>} : vector<64x128xbf16>, vector<128x512xbf16>, vector<64x512xf32> -> vector<64x512xf32>
    %233 = vector.broadcast %231 : vector<1x512xf32> to vector<64x512xf32>
    %234 = arith.addf %232, %233 : vector<64x512xf32>
    %235 = vector.shape_cast %234 : vector<64x512xf32> to vector<8x8x512xf32>
    %c0_70 = arith.constant 0 : index
    %c0_71 = arith.constant 0 : index
    %c0_72 = arith.constant 0 : index
    %236 = vector.load %arg10[%c0_70, %c0_71, %c0_72] : memref<8x8x512xf32, #tpu.memory_space<vmem>>, vector<8x8x512xf32>
    tpu.vector_store %arg10[%c0_70, %c0_71, %c0_72], %235 {strides = array<i32>} : memref<8x8x512xf32, #tpu.memory_space<vmem>>, vector<8x8x512xf32>,
    %cst_73 = arith.constant 0.000000e+00 : f32
    %237 = vector.broadcast %cst_73 : f32 to vector<8x128xf32>
    %cst_74 = arith.constant 0.000000e+00 : f32
    %238 = vector.broadcast %cst_74 : f32 to vector<8x128xf32>
    %c0_i32_75 = arith.constant 0 : i32
    %239 = arith.index_cast %c0_i32_75 : i32 to index
    %c0_76 = arith.constant 0 : index
    %c0_77 = arith.constant 0 : index
    %240 = vector.load %arg10[%239, %c0_76, %c0_77] : memref<8x8x512xf32, #tpu.memory_space<vmem>>, vector<1x8x512xf32>
    %241 = vector.shape_cast %240 : vector<1x8x512xf32> to vector<8x512xf32>
    %242 = arith.truncf %237 : vector<8x128xf32> to vector<8x128xbf16>
    %cst_78 = arith.constant dense<0.000000e+00> : vector<8x512xf32>
    %243 = tpu.matmul %242, %230, %cst_78 {dimension_numbers = #tpu.dot_dimension_numbers<[1], [0], [0], [1], [0, 0, 1, 1], [], []>} : vector<8x128xbf16>, vector<128x512xbf16>, vector<8x512xf32> -> vector<8x512xf32>
    %244 = arith.addf %241, %243 : vector<8x512xf32>
    %245 = vector.extract_strided_slice %244 {offsets = [0, 0], sizes = [8, 384], strides = [1, 1]} : vector<8x512xf32> to vector<8x384xf32>
    %246 = arith.negf %245 : vector<8x384xf32>
    %247 = math.exp %246 : vector<8x384xf32>
    %cst_79 = arith.constant 1.000000e+00 : f32
    %248 = vector.broadcast %cst_79 : f32 to vector<8x384xf32>
    %249 = arith.addf %248, %247 : vector<8x384xf32>
    %250 = arith.divf %248, %249 : vector<8x384xf32>
    %251 = vector.extract_strided_slice %244 {offsets = [0, 384], sizes = [8, 128], strides = [1, 1]} : vector<8x512xf32> to vector<8x128xf32>
    %252 = math.tanh %251 : vector<8x128xf32>
    %253 = vector.extract_strided_slice %250 {offsets = [0, 0], sizes = [8, 128], strides = [1, 1]} : vector<8x384xf32> to vector<8x128xf32>
    %254 = vector.extract_strided_slice %250 {offsets = [0, 128], sizes = [8, 128], strides = [1, 1]} : vector<8x384xf32> to vector<8x128xf32>
    %255 = vector.extract_strided_slice %250 {offsets = [0, 256], sizes = [8, 128], strides = [1, 1]} : vector<8x384xf32> to vector<8x128xf32>
    %256 = arith.mulf %254, %238 : vector<8x128xf32>
    %257 = arith.mulf %253, %252 : vector<8x128xf32>
    %258 = arith.addf %256, %257 : vector<8x128xf32>
    %259 = math.tanh %258 : vector<8x128xf32>
    %260 = arith.mulf %255, %259 : vector<8x128xf32>
    %c1_i32_80 = arith.constant 1 : i32
    %261 = arith.index_cast %c1_i32_80 : i32 to index
    %c0_81 = arith.constant 0 : index
    %c0_82 = arith.constant 0 : index
    %262 = vector.load %arg10[%261, %c0_81, %c0_82] : memref<8x8x512xf32, #tpu.memory_space<vmem>>, vector<1x8x512xf32>
    %263 = vector.shape_cast %262 : vector<1x8x512xf32> to vector<8x512xf32>
    %264 = arith.truncf %260 : vector<8x128xf32> to vector<8x128xbf16>
    %cst_83 = arith.constant dense<0.000000e+00> : vector<8x512xf32>
    %265 = tpu.matmul %264, %230, %cst_83 {dimension_numbers = #tpu.dot_dimension_numbers<[1], [0], [0], [1], [0, 0, 1, 1], [], []>} : vector<8x128xbf16>, vector<128x512xbf16>, vector<8x512xf32> -> vector<8x512xf32>
    %266 = arith.addf %263, %265 : vector<8x512xf32>
    %267 = vector.extract_strided_slice %266 {offsets = [0, 0], sizes = [8, 384], strides = [1, 1]} : vector<8x512xf32> to vector<8x384xf32>
    %268 = arith.negf %267 : vector<8x384xf32>
    %269 = math.exp %268 : vector<8x384xf32>
    %cst_84 = arith.constant 1.000000e+00 : f32
    %270 = vector.broadcast %cst_84 : f32 to vector<8x384xf32>
    %271 = arith.addf %270, %269 : vector<8x384xf32>
    %272 = arith.divf %270, %271 : vector<8x384xf32>
    %273 = vector.extract_strided_slice %266 {offsets = [0, 384], sizes = [8, 128], strides = [1, 1]} : vector<8x512xf32> to vector<8x128xf32>
    %274 = math.tanh %273 : vector<8x128xf32>
    %275 = vector.extract_strided_slice %272 {offsets = [0, 0], sizes = [8, 128], strides = [1, 1]} : vector<8x384xf32> to vector<8x128xf32>
    %276 = vector.extract_strided_slice %272 {offsets = [0, 128], sizes = [8, 128], strides = [1, 1]} : vector<8x384xf32> to vector<8x128xf32>
    %277 = vector.extract_strided_slice %272 {offsets = [0, 256], sizes = [8, 128], strides = [1, 1]} : vector<8x384xf32> to vector<8x128xf32>
    %278 = arith.mulf %276, %258 : vector<8x128xf32>
    %279 = arith.mulf %275, %274 : vector<8x128xf32>
    %280 = arith.addf %278, %279 : vector<8x128xf32>
    %281 = math.tanh %280 : vector<8x128xf32>
    %282 = arith.mulf %277, %281 : vector<8x128xf32>
    %c2_i32_85 = arith.constant 2 : i32
    %283 = arith.index_cast %c2_i32_85 : i32 to index
    %c0_86 = arith.constant 0 : index
    %c0_87 = arith.constant 0 : index
    %284 = vector.load %arg10[%283, %c0_86, %c0_87] : memref<8x8x512xf32, #tpu.memory_space<vmem>>, vector<1x8x512xf32>
    %285 = vector.shape_cast %284 : vector<1x8x512xf32> to vector<8x512xf32>
    %286 = arith.truncf %282 : vector<8x128xf32> to vector<8x128xbf16>
    %cst_88 = arith.constant dense<0.000000e+00> : vector<8x512xf32>
    %287 = tpu.matmul %286, %230, %cst_88 {dimension_numbers = #tpu.dot_dimension_numbers<[1], [0], [0], [1], [0, 0, 1, 1], [], []>} : vector<8x128xbf16>, vector<128x512xbf16>, vector<8x512xf32> -> vector<8x512xf32>
    %288 = arith.addf %285, %287 : vector<8x512xf32>
    %289 = vector.extract_strided_slice %288 {offsets = [0, 0], sizes = [8, 384], strides = [1, 1]} : vector<8x512xf32> to vector<8x384xf32>
    %290 = arith.negf %289 : vector<8x384xf32>
    %291 = math.exp %290 : vector<8x384xf32>
    %cst_89 = arith.constant 1.000000e+00 : f32
    %292 = vector.broadcast %cst_89 : f32 to vector<8x384xf32>
    %293 = arith.addf %292, %291 : vector<8x384xf32>
    %294 = arith.divf %292, %293 : vector<8x384xf32>
    %295 = vector.extract_strided_slice %288 {offsets = [0, 384], sizes = [8, 128], strides = [1, 1]} : vector<8x512xf32> to vector<8x128xf32>
    %296 = math.tanh %295 : vector<8x128xf32>
    %297 = vector.extract_strided_slice %294 {offsets = [0, 0], sizes = [8, 128], strides = [1, 1]} : vector<8x384xf32> to vector<8x128xf32>
    %298 = vector.extract_strided_slice %294 {offsets = [0, 128], sizes = [8, 128], strides = [1, 1]} : vector<8x384xf32> to vector<8x128xf32>
    %299 = vector.extract_strided_slice %294 {offsets = [0, 256], sizes = [8, 128], strides = [1, 1]} : vector<8x384xf32> to vector<8x128xf32>
    %300 = arith.mulf %298, %280 : vector<8x128xf32>
    %301 = arith.mulf %297, %296 : vector<8x128xf32>
    %302 = arith.addf %300, %301 : vector<8x128xf32>
    %303 = math.tanh %302 : vector<8x128xf32>
    %304 = arith.mulf %299, %303 : vector<8x128xf32>
    %c3_i32_90 = arith.constant 3 : i32
    %305 = arith.index_cast %c3_i32_90 : i32 to index
    %c0_91 = arith.constant 0 : index
    %c0_92 = arith.constant 0 : index
    %306 = vector.load %arg10[%305, %c0_91, %c0_92] : memref<8x8x512xf32, #tpu.memory_space<vmem>>, vector<1x8x512xf32>
    %307 = vector.shape_cast %306 : vector<1x8x512xf32> to vector<8x512xf32>
    %308 = arith.truncf %304 : vector<8x128xf32> to vector<8x128xbf16>
    %cst_93 = arith.constant dense<0.000000e+00> : vector<8x512xf32>
    %309 = tpu.matmul %308, %230, %cst_93 {dimension_numbers = #tpu.dot_dimension_numbers<[1], [0], [0], [1], [0, 0, 1, 1], [], []>} : vector<8x128xbf16>, vector<128x512xbf16>, vector<8x512xf32> -> vector<8x512xf32>
    %310 = arith.addf %307, %309 : vector<8x512xf32>
    %311 = vector.extract_strided_slice %310 {offsets = [0, 0], sizes = [8, 384], strides = [1, 1]} : vector<8x512xf32> to vector<8x384xf32>
    %312 = arith.negf %311 : vector<8x384xf32>
    %313 = math.exp %312 : vector<8x384xf32>
    %cst_94 = arith.constant 1.000000e+00 : f32
    %314 = vector.broadcast %cst_94 : f32 to vector<8x384xf32>
    %315 = arith.addf %314, %313 : vector<8x384xf32>
    %316 = arith.divf %314, %315 : vector<8x384xf32>
    %317 = vector.extract_strided_slice %310 {offsets = [0, 384], sizes = [8, 128], strides = [1, 1]} : vector<8x512xf32> to vector<8x128xf32>
    %318 = math.tanh %317 : vector<8x128xf32>
    %319 = vector.extract_strided_slice %316 {offsets = [0, 0], sizes = [8, 128], strides = [1, 1]} : vector<8x384xf32> to vector<8x128xf32>
    %320 = vector.extract_strided_slice %316 {offsets = [0, 128], sizes = [8, 128], strides = [1, 1]} : vector<8x384xf32> to vector<8x128xf32>
    %321 = vector.extract_strided_slice %316 {offsets = [0, 256], sizes = [8, 128], strides = [1, 1]} : vector<8x384xf32> to vector<8x128xf32>
    %322 = arith.mulf %320, %302 : vector<8x128xf32>
    %323 = arith.mulf %319, %318 : vector<8x128xf32>
    %324 = arith.addf %322, %323 : vector<8x128xf32>
    %325 = math.tanh %324 : vector<8x128xf32>
    %326 = arith.mulf %321, %325 : vector<8x128xf32>
    %c4_i32_95 = arith.constant 4 : i32
    %327 = arith.index_cast %c4_i32_95 : i32 to index
    %c0_96 = arith.constant 0 : index
    %c0_97 = arith.constant 0 : index
    %328 = vector.load %arg10[%327, %c0_96, %c0_97] : memref<8x8x512xf32, #tpu.memory_space<vmem>>, vector<1x8x512xf32>
    %329 = vector.shape_cast %328 : vector<1x8x512xf32> to vector<8x512xf32>
    %330 = arith.truncf %326 : vector<8x128xf32> to vector<8x128xbf16>
    %cst_98 = arith.constant dense<0.000000e+00> : vector<8x512xf32>
    %331 = tpu.matmul %330, %230, %cst_98 {dimension_numbers = #tpu.dot_dimension_numbers<[1], [0], [0], [1], [0, 0, 1, 1], [], []>} : vector<8x128xbf16>, vector<128x512xbf16>, vector<8x512xf32> -> vector<8x512xf32>
    %332 = arith.addf %329, %331 : vector<8x512xf32>
    %333 = vector.extract_strided_slice %332 {offsets = [0, 0], sizes = [8, 384], strides = [1, 1]} : vector<8x512xf32> to vector<8x384xf32>
    %334 = arith.negf %333 : vector<8x384xf32>
    %335 = math.exp %334 : vector<8x384xf32>
    %cst_99 = arith.constant 1.000000e+00 : f32
    %336 = vector.broadcast %cst_99 : f32 to vector<8x384xf32>
    %337 = arith.addf %336, %335 : vector<8x384xf32>
    %338 = arith.divf %336, %337 : vector<8x384xf32>
    %339 = vector.extract_strided_slice %332 {offsets = [0, 384], sizes = [8, 128], strides = [1, 1]} : vector<8x512xf32> to vector<8x128xf32>
    %340 = math.tanh %339 : vector<8x128xf32>
    %341 = vector.extract_strided_slice %338 {offsets = [0, 0], sizes = [8, 128], strides = [1, 1]} : vector<8x384xf32> to vector<8x128xf32>
    %342 = vector.extract_strided_slice %338 {offsets = [0, 128], sizes = [8, 128], strides = [1, 1]} : vector<8x384xf32> to vector<8x128xf32>
    %343 = vector.extract_strided_slice %338 {offsets = [0, 256], sizes = [8, 128], strides = [1, 1]} : vector<8x384xf32> to vector<8x128xf32>
    %344 = arith.mulf %342, %324 : vector<8x128xf32>
    %345 = arith.mulf %341, %340 : vector<8x128xf32>
    %346 = arith.addf %344, %345 : vector<8x128xf32>
    %347 = math.tanh %346 : vector<8x128xf32>
    %348 = arith.mulf %343, %347 : vector<8x128xf32>
    %c5_i32_100 = arith.constant 5 : i32
    %349 = arith.index_cast %c5_i32_100 : i32 to index
    %c0_101 = arith.constant 0 : index
    %c0_102 = arith.constant 0 : index
    %350 = vector.load %arg10[%349, %c0_101, %c0_102] : memref<8x8x512xf32, #tpu.memory_space<vmem>>, vector<1x8x512xf32>
    %351 = vector.shape_cast %350 : vector<1x8x512xf32> to vector<8x512xf32>
    %352 = arith.truncf %348 : vector<8x128xf32> to vector<8x128xbf16>
    %cst_103 = arith.constant dense<0.000000e+00> : vector<8x512xf32>
    %353 = tpu.matmul %352, %230, %cst_103 {dimension_numbers = #tpu.dot_dimension_numbers<[1], [0], [0], [1], [0, 0, 1, 1], [], []>} : vector<8x128xbf16>, vector<128x512xbf16>, vector<8x512xf32> -> vector<8x512xf32>
    %354 = arith.addf %351, %353 : vector<8x512xf32>
    %355 = vector.extract_strided_slice %354 {offsets = [0, 0], sizes = [8, 384], strides = [1, 1]} : vector<8x512xf32> to vector<8x384xf32>
    %356 = arith.negf %355 : vector<8x384xf32>
    %357 = math.exp %356 : vector<8x384xf32>
    %cst_104 = arith.constant 1.000000e+00 : f32
    %358 = vector.broadcast %cst_104 : f32 to vector<8x384xf32>
    %359 = arith.addf %358, %357 : vector<8x384xf32>
    %360 = arith.divf %358, %359 : vector<8x384xf32>
    %361 = vector.extract_strided_slice %354 {offsets = [0, 384], sizes = [8, 128], strides = [1, 1]} : vector<8x512xf32> to vector<8x128xf32>
    %362 = math.tanh %361 : vector<8x128xf32>
    %363 = vector.extract_strided_slice %360 {offsets = [0, 0], sizes = [8, 128], strides = [1, 1]} : vector<8x384xf32> to vector<8x128xf32>
    %364 = vector.extract_strided_slice %360 {offsets = [0, 128], sizes = [8, 128], strides = [1, 1]} : vector<8x384xf32> to vector<8x128xf32>
    %365 = vector.extract_strided_slice %360 {offsets = [0, 256], sizes = [8, 128], strides = [1, 1]} : vector<8x384xf32> to vector<8x128xf32>
    %366 = arith.mulf %364, %346 : vector<8x128xf32>
    %367 = arith.mulf %363, %362 : vector<8x128xf32>
    %368 = arith.addf %366, %367 : vector<8x128xf32>
    %369 = math.tanh %368 : vector<8x128xf32>
    %370 = arith.mulf %365, %369 : vector<8x128xf32>
    %c6_i32_105 = arith.constant 6 : i32
    %371 = arith.index_cast %c6_i32_105 : i32 to index
    %c0_106 = arith.constant 0 : index
    %c0_107 = arith.constant 0 : index
    %372 = vector.load %arg10[%371, %c0_106, %c0_107] : memref<8x8x512xf32, #tpu.memory_space<vmem>>, vector<1x8x512xf32>
    %373 = vector.shape_cast %372 : vector<1x8x512xf32> to vector<8x512xf32>
    %374 = arith.truncf %370 : vector<8x128xf32> to vector<8x128xbf16>
    %cst_108 = arith.constant dense<0.000000e+00> : vector<8x512xf32>
    %375 = tpu.matmul %374, %230, %cst_108 {dimension_numbers = #tpu.dot_dimension_numbers<[1], [0], [0], [1], [0, 0, 1, 1], [], []>} : vector<8x128xbf16>, vector<128x512xbf16>, vector<8x512xf32> -> vector<8x512xf32>
    %376 = arith.addf %373, %375 : vector<8x512xf32>
    %377 = vector.extract_strided_slice %376 {offsets = [0, 0], sizes = [8, 384], strides = [1, 1]} : vector<8x512xf32> to vector<8x384xf32>
    %378 = arith.negf %377 : vector<8x384xf32>
    %379 = math.exp %378 : vector<8x384xf32>
    %cst_109 = arith.constant 1.000000e+00 : f32
    %380 = vector.broadcast %cst_109 : f32 to vector<8x384xf32>
    %381 = arith.addf %380, %379 : vector<8x384xf32>
    %382 = arith.divf %380, %381 : vector<8x384xf32>
    %383 = vector.extract_strided_slice %376 {offsets = [0, 384], sizes = [8, 128], strides = [1, 1]} : vector<8x512xf32> to vector<8x128xf32>
    %384 = math.tanh %383 : vector<8x128xf32>
    %385 = vector.extract_strided_slice %382 {offsets = [0, 0], sizes = [8, 128], strides = [1, 1]} : vector<8x384xf32> to vector<8x128xf32>
    %386 = vector.extract_strided_slice %382 {offsets = [0, 128], sizes = [8, 128], strides = [1, 1]} : vector<8x384xf32> to vector<8x128xf32>
    %387 = vector.extract_strided_slice %382 {offsets = [0, 256], sizes = [8, 128], strides = [1, 1]} : vector<8x384xf32> to vector<8x128xf32>
    %388 = arith.mulf %386, %368 : vector<8x128xf32>
    %389 = arith.mulf %385, %384 : vector<8x128xf32>
    %390 = arith.addf %388, %389 : vector<8x128xf32>
    %391 = math.tanh %390 : vector<8x128xf32>
    %392 = arith.mulf %387, %391 : vector<8x128xf32>
    %c7_i32_110 = arith.constant 7 : i32
    %393 = arith.index_cast %c7_i32_110 : i32 to index
    %c0_111 = arith.constant 0 : index
    %c0_112 = arith.constant 0 : index
    %394 = vector.load %arg10[%393, %c0_111, %c0_112] : memref<8x8x512xf32, #tpu.memory_space<vmem>>, vector<1x8x512xf32>
    %395 = vector.shape_cast %394 : vector<1x8x512xf32> to vector<8x512xf32>
    %396 = arith.truncf %392 : vector<8x128xf32> to vector<8x128xbf16>
    %cst_113 = arith.constant dense<0.000000e+00> : vector<8x512xf32>
    %397 = tpu.matmul %396, %230, %cst_113 {dimension_numbers = #tpu.dot_dimension_numbers<[1], [0], [0], [1], [0, 0, 1, 1], [], []>} : vector<8x128xbf16>, vector<128x512xbf16>, vector<8x512xf32> -> vector<8x512xf32>
    %398 = arith.addf %395, %397 : vector<8x512xf32>
    %399 = vector.extract_strided_slice %398 {offsets = [0, 0], sizes = [8, 384], strides = [1, 1]} : vector<8x512xf32> to vector<8x384xf32>
    %400 = arith.negf %399 : vector<8x384xf32>
    %401 = math.exp %400 : vector<8x384xf32>
    %cst_114 = arith.constant 1.000000e+00 : f32
    %402 = vector.broadcast %cst_114 : f32 to vector<8x384xf32>
    %403 = arith.addf %402, %401 : vector<8x384xf32>
    %404 = arith.divf %402, %403 : vector<8x384xf32>
    %405 = vector.extract_strided_slice %398 {offsets = [0, 384], sizes = [8, 128], strides = [1, 1]} : vector<8x512xf32> to vector<8x128xf32>
    %406 = math.tanh %405 : vector<8x128xf32>
    %407 = vector.extract_strided_slice %404 {offsets = [0, 0], sizes = [8, 128], strides = [1, 1]} : vector<8x384xf32> to vector<8x128xf32>
    %408 = vector.extract_strided_slice %404 {offsets = [0, 128], sizes = [8, 128], strides = [1, 1]} : vector<8x384xf32> to vector<8x128xf32>
    %409 = vector.extract_strided_slice %404 {offsets = [0, 256], sizes = [8, 128], strides = [1, 1]} : vector<8x384xf32> to vector<8x128xf32>
    %410 = arith.mulf %408, %390 : vector<8x128xf32>
    %411 = arith.mulf %407, %406 : vector<8x128xf32>
    %412 = arith.addf %410, %411 : vector<8x128xf32>
    %413 = math.tanh %412 : vector<8x128xf32>
    %414 = arith.mulf %409, %413 : vector<8x128xf32>
    %c8_i32_115 = arith.constant 8 : i32
    %415 = arith.truncf %414 : vector<8x128xf32> to vector<8x128xbf16>
    %c0_116 = arith.constant 0 : index
    %c0_117 = arith.constant 0 : index
    %416 = vector.load %arg7[%c0_116, %c0_117] : memref<128x128xbf16, #tpu.memory_space<vmem>>, vector<128x128xbf16>
    %cst_118 = arith.constant dense<0.000000e+00> : vector<8x128xf32>
    %417 = tpu.matmul %415, %416, %cst_118 {dimension_numbers = #tpu.dot_dimension_numbers<[1], [0], [0], [1], [0, 0, 1, 1], [], []>} : vector<8x128xbf16>, vector<128x128xbf16>, vector<8x128xf32> -> vector<8x128xf32>
    %c0_119 = arith.constant 0 : index
    %c0_120 = arith.constant 0 : index
    %418 = vector.load %arg8[%c0_119, %c0_120] : memref<1x128xf32, #tpu.memory_space<vmem>>, vector<1x128xf32>
    %419 = vector.broadcast %418 : vector<1x128xf32> to vector<8x128xf32>
    %420 = arith.addf %417, %419 : vector<8x128xf32>
    %c0_121 = arith.constant 0 : index
    %c0_122 = arith.constant 0 : index
    %421 = vector.load %arg9[%c0_121, %c0_122] : memref<8x128xf32, #tpu.memory_space<vmem>>, vector<8x128xf32>
    tpu.vector_store %arg9[%c0_121, %c0_122], %420 {strides = array<i32>} : memref<8x128xf32, #tpu.memory_space<vmem>>, vector<8x128xf32>,
    return
  }
}

</mosaic_0001>

<llo_original>
// kernel: apt_lstm_forward.1
$region0: #{apt_lstm_forward.1}
  #allocation0 [shape = 'u32[]', space=smem, size = 0x4, offset = 0x4, fixed_abs, tag = 'smem constant byte address 0x4 - core index']
  #allocation1 [shape = 'u32[72,128]{1,0:T(1,128)}', space=vmem, size = 0x9000, scoped, tag = 'internal scratch']
  #allocation2 [shape = 'f32[8,8,512]{2,1,0:T(8,128)}', space=vmem, size = 0x20000, scoped, tag = 'scratch operand']
  #allocation3 [shape = 'bf16[8,8,128]{2,1,0:T(8,128)(2,1)}', space=vmem, size = 0x4000, scoped, tag = 'scratch operand']
  %s0 = inlined_call_operand.vmem [shape: bf16[64,128], index: 0, kind: input, shape index: {}]
  %s1 = inlined_call_operand.vmem [shape: bf16[128,512], index: 1, kind: input, shape index: {}]
  %s2 = inlined_call_operand.vmem [shape: bf16[128,512], index: 2, kind: input, shape index: {}]
  %s3 = inlined_call_operand.vmem [shape: f32[1,512], index: 3, kind: input, shape index: {}]
  %s4 = inlined_call_operand.vmem [shape: bf16[128,512], index: 4, kind: input, shape index: {}]
  %s5 = inlined_call_operand.vmem [shape: bf16[128,512], index: 5, kind: input, shape index: {}]
  %s6 = inlined_call_operand.vmem [shape: f32[1,512], index: 6, kind: input, shape index: {}]
  %s7 = inlined_call_operand.hbm [shape: bf16[128,128], index: 7, kind: input, shape index: {}]
  %s8 = inlined_call_operand.vmem [shape: f32[1,128], index: 8, kind: input, shape index: {}]
  %s9 = inlined_call_operand.vmem [shape: f32[8,128], index: 9, kind: output, shape index: {}]
  %s10 = sld [smem:[#allocation0]]
  $region50: #{apt_lstm_forward.1} parent=0
    _
  %s12 = ssub.s32 1, %s10
  %s13 = scalar_select 0, %s12, %s10
  $region1: #{apt_lstm_forward.1} parent=0
    #allocation4 [shape = 'u8[32768]{0}', space=vmem, size = 0x8000, scoped, tag = 'input window, operand 7, single buffered']
    #allocation5 [shape = 's32[1]{0}', space=sflag, size = 0x4, scoped, tag = 'scoped memory for apt_lstm_forward.1']
    %14 = vsyncpa [#allocation5], 0
    // Predicated region
    $region2: #{apt_lstm_forward.1} parent=1 // pred_check
      _
    $region3: #{apt_lstm_forward.1} parent=1 // pred_check_branch
      %16 = sbr.rel (0) target = $region5
    $region4: #{apt_lstm_forward.1} parent=1 // pred_region
      _
    $region5: #{apt_lstm_forward.1} parent=1 // pred_fallthru
      _
    // Predicated region
    $region6: #{apt_lstm_forward.1} parent=1 // pred_check
      _
    $region7: #{apt_lstm_forward.1} parent=1 // pred_check_branch
      %18 = sbr.rel (0) target = $region9
    $region8: #{apt_lstm_forward.1} parent=1 // pred_region
      _
    $region9: #{apt_lstm_forward.1} parent=1 // pred_fallthru
      _
    // Predicated region
    $region10: #{apt_lstm_forward.1} parent=1 // pred_check
      _
    $region11: #{apt_lstm_forward.1} parent=1 // pred_check_branch
      %20 = sbr.rel (0) target = $region13
    $region12: #{apt_lstm_forward.1} parent=1 // pred_region
      _
    $region13: #{apt_lstm_forward.1} parent=1 // pred_fallthru
      _
    // Predicated region
    $region14: #{apt_lstm_forward.1} parent=1 // pred_check
      _
    $region15: #{apt_lstm_forward.1} parent=1 // pred_check_branch
      %22 = sbr.rel (0) target = $region17
    $region16: #{apt_lstm_forward.1} parent=1 // pred_region
      _
    $region17: #{apt_lstm_forward.1} parent=1 // pred_fallthru
      _
    // Predicated region
    $region18: #{apt_lstm_forward.1} parent=1 // pred_check
      _
    $region19: #{apt_lstm_forward.1} parent=1 // pred_check_branch
      %24 = sbr.rel (0) target = $region21
    $region20: #{apt_lstm_forward.1} parent=1 // pred_region
      _
    $region21: #{apt_lstm_forward.1} parent=1 // pred_fallthru
      _
    // Predicated region
    $region22: #{apt_lstm_forward.1} parent=1 // pred_check
      _
    $region23: #{apt_lstm_forward.1} parent=1 // pred_check_branch
      %26 = sbr.rel (0) target = $region25
    $region24: #{apt_lstm_forward.1} parent=1 // pred_region
      _
    $region25: #{apt_lstm_forward.1} parent=1 // pred_fallthru
      _
    // Predicated region
    $region26: #{apt_lstm_forward.1} parent=1 // pred_check
      _
    $region27: #{apt_lstm_forward.1} parent=1 // pred_check_branch
      %28 = sbr.rel (0) target = $region29
    $region28: #{apt_lstm_forward.1} parent=1 // pred_region
      _
    $region29: #{apt_lstm_forward.1} parent=1 // pred_fallthru
      _
    // Predicated region
    $region30: #{apt_lstm_forward.1} parent=1 // pred_check
      _
    $region31: #{apt_lstm_forward.1} parent=1 // pred_check_branch
      %30 = sbr.rel (0) target = $region33
    $region32: #{apt_lstm_forward.1} parent=1 // pred_region
      %32 = vsyncadd [#allocation5], 0
      %s33 = sshll.u32 %s7, 4
      %s34 = int_to_ptr.hbm [resolvable:$true] %s33
      %s35 = sshll.u32 [#allocation4], 4
      %s36 = int_to_ptr.vmem [resolvable:$true] %s35
      %41 = dma.hbm_to_vmem [thread:$0]  %s34, 1024, %s36, [#allocation5], 64, 64, 4
    $region33: #{apt_lstm_forward.1} parent=1 // pred_fallthru
      _
    // Predicated region
    $region34: #{apt_lstm_forward.1} parent=1 // pred_check
      _
    $region35: #{apt_lstm_forward.1} parent=1 // pred_check_branch
      %43 = sbr.rel (0) target = $region37
    $region36: #{apt_lstm_forward.1} parent=1 // pred_region
      _
    $region37: #{apt_lstm_forward.1} parent=1 // pred_fallthru
      _
    // Predicated region
    $region38: #{apt_lstm_forward.1} parent=1 // pred_check
      _
    $region39: #{apt_lstm_forward.1} parent=1 // pred_check_branch
      %45 = sbr.rel (0) target = $region41
    $region40: #{apt_lstm_forward.1} parent=1 // pred_region
      %47 = dma.done [#allocation5], 1024
    $region41: #{apt_lstm_forward.1} parent=1 // pred_fallthru
      _
    %v49 = vld [vmem:[%s0] sm:$0xf]
    %v50 = vld [vmem:[%s0 + $0x4] sm:$0xf]
    %v51 = vld [vmem:[%s0 + $0x8] sm:$0xf]
    %v52 = vld [vmem:[%s0 + $0xc] sm:$0xf]
    %v53 = vld [vmem:[%s0 + $0x10] sm:$0xf]
    %v54 = vld [vmem:[%s0 + $0x14] sm:$0xf]
    %v55 = vld [vmem:[%s0 + $0x18] sm:$0xf]
    %v56 = vld [vmem:[%s0 + $0x1c] sm:$0xf]
    %v57 = vld [vmem:[%s1] sm:$0xff]
    %v58 = vld [vmem:[%s1 + $0x8] sm:$0xff]
    %v59 = vld [vmem:[%s1 + $0x10] sm:$0xff]
    %v60 = vld [vmem:[%s1 + $0x18] sm:$0xff]
    %v61 = vld [vmem:[%s1 + $0x20] sm:$0xff]
    %v62 = vld [vmem:[%s1 + $0x28] sm:$0xff]
    %v63 = vld [vmem:[%s1 + $0x30] sm:$0xff]
    %v64 = vld [vmem:[%s1 + $0x38] sm:$0xff]
    %v65 = vld [vmem:[%s1 + $0x40] sm:$0xff]
    %v66 = vld [vmem:[%s1 + $0x48] sm:$0xff]
    %v67 = vld [vmem:[%s1 + $0x50] sm:$0xff]
    %v68 = vld [vmem:[%s1 + $0x58] sm:$0xff]
    %v69 = vld [vmem:[%s1 + $0x60] sm:$0xff]
    %v70 = vld [vmem:[%s1 + $0x68] sm:$0xff]
    %v71 = vld [vmem:[%s1 + $0x70] sm:$0xff]
    %v72 = vld [vmem:[%s1 + $0x78] sm:$0xff]
    %v73 = vld [vmem:[%s1 + $0x80] sm:$0xff]
    %v74 = vld [vmem:[%s1 + $0x88] sm:$0xff]
    %v75 = vld [vmem:[%s1 + $0x90] sm:$0xff]
    %v76 = vld [vmem:[%s1 + $0x98] sm:$0xff]
    %v77 = vld [vmem:[%s1 + $0xa0] sm:$0xff]
    %v78 = vld [vmem:[%s1 + $0xa8] sm:$0xff]
    %v79 = vld [vmem:[%s1 + $0xb0] sm:$0xff]
    %v80 = vld [vmem:[%s1 + $0xb8] sm:$0xff]
    %v81 = vld [vmem:[%s1 + $0xc0] sm:$0xff]
    %v82 = vld [vmem:[%s1 + $0xc8] sm:$0xff]
    %v83 = vld [vmem:[%s1 + $0xd0] sm:$0xff]
    %v84 = vld [vmem:[%s1 + $0xd8] sm:$0xff]
    %v85 = vld [vmem:[%s1 + $0xe0] sm:$0xff]
    %v86 = vld [vmem:[%s1 + $0xe8] sm:$0xff]
    %v87 = vld [vmem:[%s1 + $0xf0] sm:$0xff]
    %v88 = vld [vmem:[%s1 + $0xf8] sm:$0xff]
    %v89 = vld [vmem:[%s2] sm:$0xff]
    %v90 = vld [vmem:[%s2 + $0x8] sm:$0xff]
    %v91 = vld [vmem:[%s2 + $0x10] sm:$0xff]
    %v92 = vld [vmem:[%s2 + $0x18] sm:$0xff]
    %v93 = vld [vmem:[%s2 + $0x20] sm:$0xff]
    %v94 = vld [vmem:[%s2 + $0x28] sm:$0xff]
    %v95 = vld [vmem:[%s2 + $0x30] sm:$0xff]
    %v96 = vld [vmem:[%s2 + $0x38] sm:$0xff]
    %v97 = vld [vmem:[%s2 + $0x40] sm:$0xff]
    %v98 = vld [vmem:[%s2 + $0x48] sm:$0xff]
    %v99 = vld [vmem:[%s2 + $0x50] sm:$0xff]
    %v100 = vld [vmem:[%s2 + $0x58] sm:$0xff]
    %v101 = vld [vmem:[%s2 + $0x60] sm:$0xff]
    %v102 = vld [vmem:[%s2 + $0x68] sm:$0xff]
    %v103 = vld [vmem:[%s2 + $0x70] sm:$0xff]
    %v104 = vld [vmem:[%s2 + $0x78] sm:$0xff]
    %v105 = vld [vmem:[%s2 + $0x80] sm:$0xff]
    %v106 = vld [vmem:[%s2 + $0x88] sm:$0xff]
    %v107 = vld [vmem:[%s2 + $0x90] sm:$0xff]
    %v108 = vld [vmem:[%s2 + $0x98] sm:$0xff]
    %v109 = vld [vmem:[%s2 + $0xa0] sm:$0xff]
    %v110 = vld [vmem:[%s2 + $0xa8] sm:$0xff]
    %v111 = vld [vmem:[%s2 + $0xb0] sm:$0xff]
    %v112 = vld [vmem:[%s2 + $0xb8] sm:$0xff]
    %v113 = vld [vmem:[%s2 + $0xc0] sm:$0xff]
    %v114 = vld [vmem:[%s2 + $0xc8] sm:$0xff]
    %v115 = vld [vmem:[%s2 + $0xd0] sm:$0xff]
    %v116 = vld [vmem:[%s2 + $0xd8] sm:$0xff]
    %v117 = vld [vmem:[%s2 + $0xe0] sm:$0xff]
    %v118 = vld [vmem:[%s2 + $0xe8] sm:$0xff]
    %v119 = vld [vmem:[%s2 + $0xf0] sm:$0xff]
    %v120 = vld [vmem:[%s2 + $0xf8] sm:$0xff]
    %v121 = vld [vmem:[%s3] sm:$0xf]
    %v123 = vperm.slane %v121, 0
    %v124 = vperm.slane %v121, 1
    %v125 = vperm.slane %v121, 2
    %v126 = vperm.slane %v121, 3
    %v139 = vunpack.c.l.b16 %v49
    %v140 = vunpack.c.l.b16 %v50
    %v141 = vunpack.c.l.b16 %v51
    %v142 = vunpack.c.l.b16 %v52
    %v143 = vunpack.c.l.b16 %v53
    %v144 = vunpack.c.l.b16 %v54
    %v145 = vunpack.c.l.b16 %v55
    %v146 = vunpack.c.l.b16 %v56
    %v147 = vpack.c.b16 %v140, %v139
    %v148 = vpack.c.b16 %v142, %v141
    %v149 = vpack.c.b16 %v144, %v143
    %v150 = vpack.c.b16 %v146, %v145
    %v187 = vunpack.c.l.b16 %v57
    %v188 = vunpack.c.h.b16 %v57
    %v189 = vunpack.c.l.b16 %v58
    %v190 = vunpack.c.h.b16 %v58
    %v191 = vunpack.c.l.b16 %v59
    %v192 = vunpack.c.h.b16 %v59
    %v193 = vunpack.c.l.b16 %v60
    %v194 = vunpack.c.h.b16 %v60
    %v195 = vunpack.c.l.b16 %v61
    %v196 = vunpack.c.h.b16 %v61
    %v197 = vunpack.c.l.b16 %v62
    %v198 = vunpack.c.h.b16 %v62
    %v199 = vunpack.c.l.b16 %v63
    %v200 = vunpack.c.h.b16 %v63
    %v201 = vunpack.c.l.b16 %v64
    %v202 = vunpack.c.h.b16 %v64
    %v203 = vunpack.c.l.b16 %v65
    %v204 = vunpack.c.h.b16 %v65
    %v205 = vunpack.c.l.b16 %v66
    %v206 = vunpack.c.h.b16 %v66
    %v207 = vunpack.c.l.b16 %v67
    %v208 = vunpack.c.h.b16 %v67
    %v209 = vunpack.c.l.b16 %v68
    %v210 = vunpack.c.h.b16 %v68
    %v211 = vunpack.c.l.b16 %v69
    %v212 = vunpack.c.h.b16 %v69
    %v213 = vunpack.c.l.b16 %v70
    %v214 = vunpack.c.h.b16 %v70
    %v215 = vunpack.c.l.b16 %v71
    %v216 = vunpack.c.h.b16 %v71
    %v217 = vunpack.c.l.b16 %v72
    %v218 = vunpack.c.h.b16 %v72
    %v219 = vunpack.c.l.b16 %v73
    %v220 = vunpack.c.h.b16 %v73
    %v221 = vunpack.c.l.b16 %v74
    %v222 = vunpack.c.h.b16 %v74
    %v223 = vunpack.c.l.b16 %v75
    %v224 = vunpack.c.h.b16 %v75
    %v225 = vunpack.c.l.b16 %v76
    %v226 = vunpack.c.h.b16 %v76
    %v227 = vunpack.c.l.b16 %v77
    %v228 = vunpack.c.h.b16 %v77
    %v229 = vunpack.c.l.b16 %v78
    %v230 = vunpack.c.h.b16 %v78
    %v231 = vunpack.c.l.b16 %v79
    %v232 = vunpack.c.h.b16 %v79
    %v233 = vunpack.c.l.b16 %v80
    %v234 = vunpack.c.h.b16 %v80
    %v235 = vunpack.c.l.b16 %v81
    %v236 = vunpack.c.h.b16 %v81
    %v237 = vunpack.c.l.b16 %v82
    %v238 = vunpack.c.h.b16 %v82
    %v239 = vunpack.c.l.b16 %v83
    %v240 = vunpack.c.h.b16 %v83
    %v241 = vunpack.c.l.b16 %v84
    %v242 = vunpack.c.h.b16 %v84
    %v243 = vunpack.c.l.b16 %v85
    %v244 = vunpack.c.h.b16 %v85
    %v245 = vunpack.c.l.b16 %v86
    %v246 = vunpack.c.h.b16 %v86
    %v247 = vunpack.c.l.b16 %v87
    %v248 = vunpack.c.h.b16 %v87
    %v249 = vunpack.c.l.b16 %v88
    %v250 = vunpack.c.h.b16 %v88
    %v251 = vpack.c.b16 %v191, %v187
    %v252 = vpack.c.b16 %v192, %v188
    %v253 = vpack.c.b16 %v193, %v189
    %v254 = vpack.c.b16 %v194, %v190
    %v255 = vpack.c.b16 %v199, %v195
    %v256 = vpack.c.b16 %v200, %v196
    %v257 = vpack.c.b16 %v201, %v197
    %v258 = vpack.c.b16 %v202, %v198
    %v259 = vpack.c.b16 %v207, %v203
    %v260 = vpack.c.b16 %v208, %v204
    %v261 = vpack.c.b16 %v209, %v205
    %v262 = vpack.c.b16 %v210, %v206
    %v263 = vpack.c.b16 %v215, %v211
    %v264 = vpack.c.b16 %v216, %v212
    %v265 = vpack.c.b16 %v217, %v213
    %v266 = vpack.c.b16 %v218, %v214
    %v267 = vpack.c.b16 %v223, %v219
    %v268 = vpack.c.b16 %v224, %v220
    %v269 = vpack.c.b16 %v225, %v221
    %v270 = vpack.c.b16 %v226, %v222
    %v271 = vpack.c.b16 %v231, %v227
    %v272 = vpack.c.b16 %v232, %v228
    %v273 = vpack.c.b16 %v233, %v229
    %v274 = vpack.c.b16 %v234, %v230
    %v275 = vpack.c.b16 %v239, %v235
    %v276 = vpack.c.b16 %v240, %v236
    %v277 = vpack.c.b16 %v241, %v237
    %v278 = vpack.c.b16 %v242, %v238
    %v279 = vpack.c.b16 %v247, %v243
    %v280 = vpack.c.b16 %v248, %v244
    %v281 = vpack.c.b16 %v249, %v245
    %v282 = vpack.c.b16 %v250, %v246
    %315 = vmatpush.bf16.msra.mxu0 %v279
    %316 = vmatpush.bf16.msra.mxu0 %v275
    %317 = vmatpush.bf16.msra.mxu0 %v271
    %318 = vmatpush.bf16.msra.mxu0 %v267
    %319 = vmatpush.bf16.msra.mxu0 %v263
    %320 = vmatpush.bf16.msra.mxu0 %v259
    %321 = vmatpush.bf16.msra.mxu0 %v255
    %322 = vmatpush.bf16.msra.mxu0 %v251
    %323 = vmatmul.bf16.gmra.mxu0 %v147
    %v324 = vpop.f32.mrf.mxu0
    %v325 = vadd.f32 %v123, %v324
    %v326 = vpop.f32.mrf.mxu0
    %v327 = vadd.f32 %v123, %v326
    %328 = vmatmul.bf16.gmra.mxu0 %v148
    %v329 = vpop.f32.mrf.mxu0
    %v330 = vadd.f32 %v123, %v329
    %v331 = vpop.f32.mrf.mxu0
    %v332 = vadd.f32 %v123, %v331
    %333 = vmatmul.bf16.gmra.mxu0 %v149
    %v334 = vpop.f32.mrf.mxu0
    %v335 = vadd.f32 %v123, %v334
    %v336 = vpop.f32.mrf.mxu0
    %v337 = vadd.f32 %v123, %v336
    %338 = vmatmul.bf16.gmra.mxu0 %v150
    %v339 = vpop.f32.mrf.mxu0
    %v340 = vadd.f32 %v123, %v339
    %v341 = vpop.f32.mrf.mxu0
    %v342 = vadd.f32 %v123, %v341
    %343 = vdwg.mxu0
    %344 = vmatpush.bf16.msra.mxu0 %v280
    %345 = vmatpush.bf16.msra.mxu0 %v276
    %346 = vmatpush.bf16.msra.mxu0 %v272
    %347 = vmatpush.bf16.msra.mxu0 %v268
    %348 = vmatpush.bf16.msra.mxu0 %v264
    %349 = vmatpush.bf16.msra.mxu0 %v260
    %350 = vmatpush.bf16.msra.mxu0 %v256
    %351 = vmatpush.bf16.msra.mxu0 %v252
    %352 = vmatmul.bf16.gmra.mxu0 %v147
    %v353 = vpop.f32.mrf.mxu0
    %v354 = vadd.f32 %v124, %v353
    %v355 = vpop.f32.mrf.mxu0
    %v356 = vadd.f32 %v124, %v355
    %357 = vmatmul.bf16.gmra.mxu0 %v148
    %v358 = vpop.f32.mrf.mxu0
    %v359 = vadd.f32 %v124, %v358
    %v360 = vpop.f32.mrf.mxu0
    %v361 = vadd.f32 %v124, %v360
    %362 = vmatmul.bf16.gmra.mxu0 %v149
    %v363 = vpop.f32.mrf.mxu0
    %v364 = vadd.f32 %v124, %v363
    %v365 = vpop.f32.mrf.mxu0
    %v366 = vadd.f32 %v124, %v365
    %367 = vmatmul.bf16.gmra.mxu0 %v150
    %v368 = vpop.f32.mrf.mxu0
    %v369 = vadd.f32 %v124, %v368
    %v370 = vpop.f32.mrf.mxu0
    %v371 = vadd.f32 %v124, %v370
    %372 = vdwg.mxu0
    %373 = vmatpush.bf16.msra.mxu0 %v281
    %374 = vmatpush.bf16.msra.mxu0 %v277
    %375 = vmatpush.bf16.msra.mxu0 %v273
    %376 = vmatpush.bf16.msra.mxu0 %v269
    %377 = vmatpush.bf16.msra.mxu0 %v265
    %378 = vmatpush.bf16.msra.mxu0 %v261
    %379 = vmatpush.bf16.msra.mxu0 %v257
    %380 = vmatpush.bf16.msra.mxu0 %v253
    %381 = vmatmul.bf16.gmra.mxu0 %v147
    %v382 = vpop.f32.mrf.mxu0
    %v383 = vadd.f32 %v125, %v382
    %v384 = vpop.f32.mrf.mxu0
    %v385 = vadd.f32 %v125, %v384
    %386 = vmatmul.bf16.gmra.mxu0 %v148
    %v387 = vpop.f32.mrf.mxu0
    %v388 = vadd.f32 %v125, %v387
    %v389 = vpop.f32.mrf.mxu0
    %v390 = vadd.f32 %v125, %v389
    %391 = vmatmul.bf16.gmra.mxu0 %v149
    %v392 = vpop.f32.mrf.mxu0
    %v393 = vadd.f32 %v125, %v392
    %v394 = vpop.f32.mrf.mxu0
    %v395 = vadd.f32 %v125, %v394
    %396 = vmatmul.bf16.gmra.mxu0 %v150
    %v397 = vpop.f32.mrf.mxu0
    %v398 = vadd.f32 %v125, %v397
    %v399 = vpop.f32.mrf.mxu0
    %v400 = vadd.f32 %v125, %v399
    %401 = vdwg.mxu0
    %402 = vmatpush.bf16.msra.mxu0 %v282
    %403 = vmatpush.bf16.msra.mxu0 %v278
    %404 = vmatpush.bf16.msra.mxu0 %v274
    %405 = vmatpush.bf16.msra.mxu0 %v270
    %406 = vmatpush.bf16.msra.mxu0 %v266
    %407 = vmatpush.bf16.msra.mxu0 %v262
    %408 = vmatpush.bf16.msra.mxu0 %v258
    %409 = vmatpush.bf16.msra.mxu0 %v254
    %410 = vmatmul.bf16.gmra.mxu0 %v147
    %v411 = vpop.f32.mrf.mxu0
    %v412 = vadd.f32 %v126, %v411
    %v413 = vpop.f32.mrf.mxu0
    %v414 = vadd.f32 %v126, %v413
    %415 = vmatmul.bf16.gmra.mxu0 %v148
    %v416 = vpop.f32.mrf.mxu0
    %v417 = vadd.f32 %v126, %v416
    %v418 = vpop.f32.mrf.mxu0
    %v419 = vadd.f32 %v126, %v418
    %420 = vmatmul.bf16.gmra.mxu0 %v149
    %v421 = vpop.f32.mrf.mxu0
    %v422 = vadd.f32 %v126, %v421
    %v423 = vpop.f32.mrf.mxu0
    %v424 = vadd.f32 %v126, %v423
    %425 = vmatmul.bf16.gmra.mxu0 %v150
    %v426 = vpop.f32.mrf.mxu0
    %v427 = vadd.f32 %v126, %v426
    %v428 = vpop.f32.mrf.mxu0
    %v429 = vadd.f32 %v126, %v428
    %430 = vdwg.mxu0
    %431 = vst [vmem:[#allocation2] sm:$0xff] %v325
    %432 = vst [vmem:[#allocation2 + $0x8] sm:$0xff] %v354
    %433 = vst [vmem:[#allocation2 + $0x10] sm:$0xff] %v383
    %434 = vst [vmem:[#allocation2 + $0x18] sm:$0xff] %v412
    %435 = vst [vmem:[#allocation2 + $0x20] sm:$0xff] %v327
    %436 = vst [vmem:[#allocation2 + $0x28] sm:$0xff] %v356
    %437 = vst [vmem:[#allocation2 + $0x30] sm:$0xff] %v385
    %438 = vst [vmem:[#allocation2 + $0x38] sm:$0xff] %v414
    %439 = vst [vmem:[#allocation2 + $0x40] sm:$0xff] %v330
    %440 = vst [vmem:[#allocation2 + $0x48] sm:$0xff] %v359
    %441 = vst [vmem:[#allocation2 + $0x50] sm:$0xff] %v388
    %442 = vst [vmem:[#allocation2 + $0x58] sm:$0xff] %v417
    %443 = vst [vmem:[#allocation2 + $0x60] sm:$0xff] %v332
    %444 = vst [vmem:[#allocation2 + $0x68] sm:$0xff] %v361
    %445 = vst [vmem:[#allocation2 + $0x70] sm:$0xff] %v390
    %446 = vst [vmem:[#allocation2 + $0x78] sm:$0xff] %v419
    %447 = vst [vmem:[#allocation2 + $0x80] sm:$0xff] %v335
    %448 = vst [vmem:[#allocation2 + $0x88] sm:$0xff] %v364
    %449 = vst [vmem:[#allocation2 + $0x90] sm:$0xff] %v393
    %450 = vst [vmem:[#allocation2 + $0x98] sm:$0xff] %v422
    %451 = vst [vmem:[#allocation2 + $0xa0] sm:$0xff] %v337
    %452 = vst [vmem:[#allocation2 + $0xa8] sm:$0xff] %v366
    %453 = vst [vmem:[#allocation2 + $0xb0] sm:$0xff] %v395
    %454 = vst [vmem:[#allocation2 + $0xb8] sm:$0xff] %v424
    %455 = vst [vmem:[#allocation2 + $0xc0] sm:$0xff] %v340
    %456 = vst [vmem:[#allocation2 + $0xc8] sm:$0xff] %v369
    %457 = vst [vmem:[#allocation2 + $0xd0] sm:$0xff] %v398
    %458 = vst [vmem:[#allocation2 + $0xd8] sm:$0xff] %v427
    %459 = vst [vmem:[#allocation2 + $0xe0] sm:$0xff] %v342
    %460 = vst [vmem:[#allocation2 + $0xe8] sm:$0xff] %v371
    %461 = vst [vmem:[#allocation2 + $0xf0] sm:$0xff] %v400
    %462 = vst [vmem:[#allocation2 + $0xf8] sm:$0xff] %v429
    %v463 = vld [vmem:[#allocation2] sm:$0xff]
    %v464 = vld [vmem:[#allocation2 + $0x8] sm:$0xff]
    %v465 = vld [vmem:[#allocation2 + $0x10] sm:$0xff]
    %v466 = vld [vmem:[#allocation2 + $0x18] sm:$0xff]
    %v499 = vunpack.c.l.b16 %v89
    %v500 = vunpack.c.h.b16 %v89
    %v501 = vunpack.c.l.b16 %v90
    %v502 = vunpack.c.h.b16 %v90
    %v503 = vunpack.c.l.b16 %v91
    %v504 = vunpack.c.h.b16 %v91
    %v505 = vunpack.c.l.b16 %v92
    %v506 = vunpack.c.h.b16 %v92
    %v507 = vunpack.c.l.b16 %v93
    %v508 = vunpack.c.h.b16 %v93
    %v509 = vunpack.c.l.b16 %v94
    %v510 = vunpack.c.h.b16 %v94
    %v511 = vunpack.c.l.b16 %v95
    %v512 = vunpack.c.h.b16 %v95
    %v513 = vunpack.c.l.b16 %v96
    %v514 = vunpack.c.h.b16 %v96
    %v515 = vunpack.c.l.b16 %v97
    %v516 = vunpack.c.h.b16 %v97
    %v517 = vunpack.c.l.b16 %v98
    %v518 = vunpack.c.h.b16 %v98
    %v519 = vunpack.c.l.b16 %v99
    %v520 = vunpack.c.h.b16 %v99
    %v521 = vunpack.c.l.b16 %v100
    %v522 = vunpack.c.h.b16 %v100
    %v523 = vunpack.c.l.b16 %v101
    %v524 = vunpack.c.h.b16 %v101
    %v525 = vunpack.c.l.b16 %v102
    %v526 = vunpack.c.h.b16 %v102
    %v527 = vunpack.c.l.b16 %v103
    %v528 = vunpack.c.h.b16 %v103
    %v529 = vunpack.c.l.b16 %v104
    %v530 = vunpack.c.h.b16 %v104
    %v531 = vunpack.c.l.b16 %v105
    %v532 = vunpack.c.h.b16 %v105
    %v533 = vunpack.c.l.b16 %v106
    %v534 = vunpack.c.h.b16 %v106
    %v535 = vunpack.c.l.b16 %v107
    %v536 = vunpack.c.h.b16 %v107
    %v537 = vunpack.c.l.b16 %v108
    %v538 = vunpack.c.h.b16 %v108
    %v539 = vunpack.c.l.b16 %v109
    %v540 = vunpack.c.h.b16 %v109
    %v541 = vunpack.c.l.b16 %v110
    %v542 = vunpack.c.h.b16 %v110
    %v543 = vunpack.c.l.b16 %v111
    %v544 = vunpack.c.h.b16 %v111
    %v545 = vunpack.c.l.b16 %v112
    %v546 = vunpack.c.h.b16 %v112
    %v547 = vunpack.c.l.b16 %v113
    %v548 = vunpack.c.h.b16 %v113
    %v549 = vunpack.c.l.b16 %v114
    %v550 = vunpack.c.h.b16 %v114
    %v551 = vunpack.c.l.b16 %v115
    %v552 = vunpack.c.h.b16 %v115
    %v553 = vunpack.c.l.b16 %v116
    %v554 = vunpack.c.h.b16 %v116
    %v555 = vunpack.c.l.b16 %v117
    %v556 = vunpack.c.h.b16 %v117
    %v557 = vunpack.c.l.b16 %v118
    %v558 = vunpack.c.h.b16 %v118
    %v559 = vunpack.c.l.b16 %v119
    %v560 = vunpack.c.h.b16 %v119
    %v561 = vunpack.c.l.b16 %v120
    %v562 = vunpack.c.h.b16 %v120
    %v563 = vpack.c.b16 %v503, %v499
    %v564 = vpack.c.b16 %v504, %v500
    %v565 = vpack.c.b16 %v505, %v501
    %v566 = vpack.c.b16 %v506, %v502
    %v567 = vpack.c.b16 %v511, %v507
    %v568 = vpack.c.b16 %v512, %v508
    %v569 = vpack.c.b16 %v513, %v509
    %v570 = vpack.c.b16 %v514, %v510
    %v571 = vpack.c.b16 %v519, %v515
    %v572 = vpack.c.b16 %v520, %v516
    %v573 = vpack.c.b16 %v521, %v517
    %v574 = vpack.c.b16 %v522, %v518
    %v575 = vpack.c.b16 %v527, %v523
    %v576 = vpack.c.b16 %v528, %v524
    %v577 = vpack.c.b16 %v529, %v525
    %v578 = vpack.c.b16 %v530, %v526
    %v579 = vpack.c.b16 %v535, %v531
    %v580 = vpack.c.b16 %v536, %v532
    %v581 = vpack.c.b16 %v537, %v533
    %v582 = vpack.c.b16 %v538, %v534
    %v583 = vpack.c.b16 %v543, %v539
    %v584 = vpack.c.b16 %v544, %v540
    %v585 = vpack.c.b16 %v545, %v541
    %v586 = vpack.c.b16 %v546, %v542
    %v587 = vpack.c.b16 %v551, %v547
    %v588 = vpack.c.b16 %v552, %v548
    %v589 = vpack.c.b16 %v553, %v549
    %v590 = vpack.c.b16 %v554, %v550
    %v591 = vpack.c.b16 %v559, %v555
    %v592 = vpack.c.b16 %v560, %v556
    %v593 = vpack.c.b16 %v561, %v557
    %v594 = vpack.c.b16 %v562, %v558
    %627 = vmatpush.bf16.msra.mxu0 %v591
    %628 = vmatpush.bf16.msra.mxu0 %v587
    %629 = vmatpush.bf16.msra.mxu0 %v583
    %630 = vmatpush.bf16.msra.mxu0 %v579
    %631 = vmatpush.bf16.msra.mxu0 %v575
    %632 = vmatpush.bf16.msra.mxu0 %v571
    %633 = vmatpush.bf16.msra.mxu0 %v567
    %634 = vmatpush.bf16.msra.mxu0 %v563
    %635 = vmatmul.bf16.gmra.mxu0 0
    %v636 = vpop.f32.mrf.mxu0
    %v637 = vadd.f32 0.0, %v636
    %v638 = vpop.f32.mrf.mxu0
    %639 = vdwg.mxu0
    %640 = vmatpush.bf16.msra.mxu0 %v592
    %641 = vmatpush.bf16.msra.mxu0 %v588
    %642 = vmatpush.bf16.msra.mxu0 %v584
    %643 = vmatpush.bf16.msra.mxu0 %v580
    %644 = vmatpush.bf16.msra.mxu0 %v576
    %645 = vmatpush.bf16.msra.mxu0 %v572
    %646 = vmatpush.bf16.msra.mxu0 %v568
    %647 = vmatpush.bf16.msra.mxu0 %v564
    %648 = vmatmul.bf16.gmra.mxu0 0
    %v649 = vpop.f32.mrf.mxu0
    %v650 = vadd.f32 0.0, %v649
    %v651 = vpop.f32.mrf.mxu0
    %652 = vdwg.mxu0
    %653 = vmatpush.bf16.msra.mxu0 %v593
    %654 = vmatpush.bf16.msra.mxu0 %v589
    %655 = vmatpush.bf16.msra.mxu0 %v585
    %656 = vmatpush.bf16.msra.mxu0 %v581
    %657 = vmatpush.bf16.msra.mxu0 %v577
    %658 = vmatpush.bf16.msra.mxu0 %v573
    %659 = vmatpush.bf16.msra.mxu0 %v569
    %660 = vmatpush.bf16.msra.mxu0 %v565
    %661 = vmatmul.bf16.gmra.mxu0 0
    %v662 = vpop.f32.mrf.mxu0
    %v663 = vadd.f32 0.0, %v662
    %v664 = vpop.f32.mrf.mxu0
    %665 = vdwg.mxu0
    %666 = vmatpush.bf16.msra.mxu0 %v594
    %667 = vmatpush.bf16.msra.mxu0 %v590
    %668 = vmatpush.bf16.msra.mxu0 %v586
    %669 = vmatpush.bf16.msra.mxu0 %v582
    %670 = vmatpush.bf16.msra.mxu0 %v578
    %671 = vmatpush.bf16.msra.mxu0 %v574
    %672 = vmatpush.bf16.msra.mxu0 %v570
    %673 = vmatpush.bf16.msra.mxu0 %v566
    %674 = vmatmul.bf16.gmra.mxu0 0
    %v675 = vpop.f32.mrf.mxu0
    %v676 = vadd.f32 0.0, %v675
    %v677 = vpop.f32.mrf.mxu0
    %678 = vdwg.mxu0
    %v679 = vadd.f32 %v463, %v637
    %v680 = vadd.f32 %v464, %v650
    %v681 = vadd.f32 %v465, %v663
    %v682 = vadd.f32 %v466, %v676
    %v683 = vxor.u32 %v679, 2147483648
    %v684 = vxor.u32 %v680, 2147483648
    %v685 = vxor.u32 %v681, 2147483648
    %v686 = vmul.f32 %v683, 1.442695
    %v687 = vpow.pop %v686
    %v688 = vmul.f32 %v684, 1.442695
    %v689 = vpow.pop %v688
    %v690 = vmul.f32 %v685, 1.442695
    %v691 = vpow.pop %v690
    %v692 = vadd.f32 %v687, 1.0
    %v693 = vadd.f32 %v689, 1.0
    %v694 = vadd.f32 %v691, 1.0
    %v695 = vrcp.pop %v692
    %v696 = vmul.f32 %v692, %v695
    %v697 = vsub.f32 1.0, %v696
    %v698 = vmul.f32 %v695, %v697
    %v699 = vadd.f32 %v695, %v698
    %vm700 = vweird.f32 %v692
    %vm701 = vweird.f32 %v695
    %vm702 = vmor %vm700, %vm701
    %v703 = vsel %vm702, %v695, %v699
    %v704 = vand.u32 2147483647, %v692
    %vm705 = vcmp.eq.f32.partialorder %v704, 8.507059e+37
    %v706 = vand.u32 %v692, 2147483648
    %v707 = vor.u32 1.1754944e-38, %v706
    %v708 = vsel %vm705, %v707, %v703
    %v709 = vmul.f32 1.0, %v708
    %v710 = vrcp.pop %v693
    %v711 = vmul.f32 %v693, %v710
    %v712 = vsub.f32 1.0, %v711
    %v713 = vmul.f32 %v710, %v712
    %v714 = vadd.f32 %v710, %v713
    %vm715 = vweird.f32 %v693
    %vm716 = vweird.f32 %v710
    %vm717 = vmor %vm715, %vm716
    %v718 = vsel %vm717, %v710, %v714
    %v719 = vand.u32 2147483647, %v693
    %vm720 = vcmp.eq.f32.partialorder %v719, 8.507059e+37
    %v721 = vand.u32 %v693, 2147483648
    %v722 = vor.u32 1.1754944e-38, %v721
    %v723 = vsel %vm720, %v722, %v718
    %v724 = vmul.f32 1.0, %v723
    %v725 = vrcp.pop %v694
    %v726 = vmul.f32 %v694, %v725
    %v727 = vsub.f32 1.0, %v726
    %v728 = vmul.f32 %v725, %v727
    %v729 = vadd.f32 %v725, %v728
    %vm730 = vweird.f32 %v694
    %vm731 = vweird.f32 %v725
    %vm732 = vmor %vm730, %vm731
    %v733 = vsel %vm732, %v725, %v729
    %v734 = vand.u32 2147483647, %v694
    %vm735 = vcmp.eq.f32.partialorder %v734, 8.507059e+37
    %v736 = vand.u32 %v694, 2147483648
    %v737 = vor.u32 1.1754944e-38, %v736
    %v738 = vsel %vm735, %v737, %v733
    %v739 = vmul.f32 1.0, %v738
    %v740 = vtanh.pop %v682
    %v741 = vmul.f32 %v724, 0.0
    %v742 = vmul.f32 %v709, %v740
    %v743 = vadd.f32 %v741, %v742
    %v744 = vtanh.pop %v743
    %v745 = vmul.f32 %v739, %v744
    %v746 = vpack.c.bf16 %v745, %v745
    %747 = vst [vmem:[#allocation3] sm:$0xf] %v746
    %s748 = scalar_lea.vmem [#allocation2], 32
    %v749 = vld [vmem:[%s748] sm:$0xff]
    %v750 = vld [vmem:[%s748 + $0x8] sm:$0xff]
    %v751 = vld [vmem:[%s748 + $0x10] sm:$0xff]
    %v752 = vld [vmem:[%s748 + $0x18] sm:$0xff]
    %753 = vmatpush.bf16.msra.mxu0 %v591
    %754 = vmatpush.bf16.msra.mxu0 %v587
    %755 = vmatpush.bf16.msra.mxu0 %v583
    %756 = vmatpush.bf16.msra.mxu0 %v579
    %757 = vmatpush.bf16.msra.mxu0 %v575
    %758 = vmatpush.bf16.msra.mxu0 %v571
    %759 = vmatpush.bf16.msra.mxu0 %v567
    %760 = vmatpush.bf16.msra.mxu0 %v563
    %761 = vmatmul.bf16.gmra.mxu0 %v746
    %v762 = vpop.f32.mrf.mxu0
    %v763 = vadd.f32 0.0, %v762
    %v764 = vpop.f32.mrf.mxu0
    %765 = vdwg.mxu0
    %766 = vmatpush.bf16.msra.mxu0 %v592
    %767 = vmatpush.bf16.msra.mxu0 %v588
    %768 = vmatpush.bf16.msra.mxu0 %v584
    %769 = vmatpush.bf16.msra.mxu0 %v580
    %770 = vmatpush.bf16.msra.mxu0 %v576
    %771 = vmatpush.bf16.msra.mxu0 %v572
    %772 = vmatpush.bf16.msra.mxu0 %v568
    %773 = vmatpush.bf16.msra.mxu0 %v564
    %774 = vmatmul.bf16.gmra.mxu0 %v746
    %v775 = vpop.f32.mrf.mxu0
    %v776 = vadd.f32 0.0, %v775
    %v777 = vpop.f32.mrf.mxu0
    %778 = vdwg.mxu0
    %779 = vmatpush.bf16.msra.mxu0 %v593
    %780 = vmatpush.bf16.msra.mxu0 %v589
    %781 = vmatpush.bf16.msra.mxu0 %v585
    %782 = vmatpush.bf16.msra.mxu0 %v581
    %783 = vmatpush.bf16.msra.mxu0 %v577
    %784 = vmatpush.bf16.msra.mxu0 %v573
    %785 = vmatpush.bf16.msra.mxu0 %v569
    %786 = vmatpush.bf16.msra.mxu0 %v565
    %787 = vmatmul.bf16.gmra.mxu0 %v746
    %v788 = vpop.f32.mrf.mxu0
    %v789 = vadd.f32 0.0, %v788
    %v790 = vpop.f32.mrf.mxu0
    %791 = vdwg.mxu0
    %792 = vmatpush.bf16.msra.mxu0 %v594
    %793 = vmatpush.bf16.msra.mxu0 %v590
    %794 = vmatpush.bf16.msra.mxu0 %v586
    %795 = vmatpush.bf16.msra.mxu0 %v582
    %796 = vmatpush.bf16.msra.mxu0 %v578
    %797 = vmatpush.bf16.msra.mxu0 %v574
    %798 = vmatpush.bf16.msra.mxu0 %v570
    %799 = vmatpush.bf16.msra.mxu0 %v566
    %800 = vmatmul.bf16.gmra.mxu0 %v746
    %v801 = vpop.f32.mrf.mxu0
    %v802 = vadd.f32 0.0, %v801
    %v803 = vpop.f32.mrf.mxu0
    %804 = vdwg.mxu0
    %v805 = vadd.f32 %v749, %v763
    %v806 = vadd.f32 %v750, %v776
    %v807 = vadd.f32 %v751, %v789
    %v808 = vadd.f32 %v752, %v802
    %v809 = vxor.u32 %v805, 2147483648
    %v810 = vxor.u32 %v806, 2147483648
    %v811 = vxor.u32 %v807, 2147483648
    %v812 = vmul.f32 %v809, 1.442695
    %v813 = vpow.pop %v812
    %v814 = vmul.f32 %v810, 1.442695
    %v815 = vpow.pop %v814
    %v816 = vmul.f32 %v811, 1.442695
    %v817 = vpow.pop %v816
    %v818 = vadd.f32 %v813, 1.0
    %v819 = vadd.f32 %v815, 1.0
    %v820 = vadd.f32 %v817, 1.0
    %v821 = vrcp.pop %v818
    %v822 = vmul.f32 %v818, %v821
    %v823 = vsub.f32 1.0, %v822
    %v824 = vmul.f32 %v821, %v823
    %v825 = vadd.f32 %v821, %v824
    %vm826 = vweird.f32 %v818
    %vm827 = vweird.f32 %v821
    %vm828 = vmor %vm826, %vm827
    %v829 = vsel %vm828, %v821, %v825
    %v830 = vand.u32 2147483647, %v818
    %vm831 = vcmp.eq.f32.partialorder %v830, 8.507059e+37
    %v832 = vand.u32 %v818, 2147483648
    %v833 = vor.u32 1.1754944e-38, %v832
    %v834 = vsel %vm831, %v833, %v829
    %v835 = vmul.f32 1.0, %v834
    %v836 = vrcp.pop %v819
    %v837 = vmul.f32 %v819, %v836
    %v838 = vsub.f32 1.0, %v837
    %v839 = vmul.f32 %v836, %v838
    %v840 = vadd.f32 %v836, %v839
    %vm841 = vweird.f32 %v819
    %vm842 = vweird.f32 %v836
    %vm843 = vmor %vm841, %vm842
    %v844 = vsel %vm843, %v836, %v840
    %v845 = vand.u32 2147483647, %v819
    %vm846 = vcmp.eq.f32.partialorder %v845, 8.507059e+37
    %v847 = vand.u32 %v819, 2147483648
    %v848 = vor.u32 1.1754944e-38, %v847
    %v849 = vsel %vm846, %v848, %v844
    %v850 = vmul.f32 1.0, %v849
    %v851 = vrcp.pop %v820
    %v852 = vmul.f32 %v820, %v851
    %v853 = vsub.f32 1.0, %v852
    %v854 = vmul.f32 %v851, %v853
    %v855 = vadd.f32 %v851, %v854
    %vm856 = vweird.f32 %v820
    %vm857 = vweird.f32 %v851
    %vm858 = vmor %vm856, %vm857
    %v859 = vsel %vm858, %v851, %v855
    %v860 = vand.u32 2147483647, %v820
    %vm861 = vcmp.eq.f32.partialorder %v860, 8.507059e+37
    %v862 = vand.u32 %v820, 2147483648
    %v863 = vor.u32 1.1754944e-38, %v862
    %v864 = vsel %vm861, %v863, %v859
    %v865 = vmul.f32 1.0, %v864
    %v866 = vtanh.pop %v808
    %v867 = vmul.f32 %v850, %v743
    %v868 = vmul.f32 %v835, %v866
    %v869 = vadd.f32 %v867, %v868
    %v870 = vtanh.pop %v869
    %v871 = vmul.f32 %v865, %v870
    %v872 = vpack.c.bf16 %v871, %v871
    %s873 = scalar_lea.vmem [#allocation3], 4
    %874 = vst [vmem:[%s873] sm:$0xf] %v872
    %s875 = scalar_lea.vmem [#allocation2], 64
    %v876 = vld [vmem:[%s875] sm:$0xff]
    %v877 = vld [vmem:[%s875 + $0x8] sm:$0xff]
    %v878 = vld [vmem:[%s875 + $0x10] sm:$0xff]
    %v879 = vld [vmem:[%s875 + $0x18] sm:$0xff]
    %880 = vmatpush.bf16.msra.mxu0 %v591
    %881 = vmatpush.bf16.msra.mxu0 %v587
    %882 = vmatpush.bf16.msra.mxu0 %v583
    %883 = vmatpush.bf16.msra.mxu0 %v579
    %884 = vmatpush.bf16.msra.mxu0 %v575
    %885 = vmatpush.bf16.msra.mxu0 %v571
    %886 = vmatpush.bf16.msra.mxu0 %v567
    %887 = vmatpush.bf16.msra.mxu0 %v563
    %888 = vmatmul.bf16.gmra.mxu0 %v872
    %v889 = vpop.f32.mrf.mxu0
    %v890 = vadd.f32 0.0, %v889
    %v891 = vpop.f32.mrf.mxu0
    %892 = vdwg.mxu0
    %893 = vmatpush.bf16.msra.mxu0 %v592
    %894 = vmatpush.bf16.msra.mxu0 %v588
    %895 = vmatpush.bf16.msra.mxu0 %v584
    %896 = vmatpush.bf16.msra.mxu0 %v580
    %897 = vmatpush.bf16.msra.mxu0 %v576
    %898 = vmatpush.bf16.msra.mxu0 %v572
    %899 = vmatpush.bf16.msra.mxu0 %v568
    %900 = vmatpush.bf16.msra.mxu0 %v564
    %901 = vmatmul.bf16.gmra.mxu0 %v872
    %v902 = vpop.f32.mrf.mxu0
    %v903 = vadd.f32 0.0, %v902
    %v904 = vpop.f32.mrf.mxu0
    %905 = vdwg.mxu0
    %906 = vmatpush.bf16.msra.mxu0 %v593
    %907 = vmatpush.bf16.msra.mxu0 %v589
    %908 = vmatpush.bf16.msra.mxu0 %v585
    %909 = vmatpush.bf16.msra.mxu0 %v581
    %910 = vmatpush.bf16.msra.mxu0 %v577
    %911 = vmatpush.bf16.msra.mxu0 %v573
    %912 = vmatpush.bf16.msra.mxu0 %v569
    %913 = vmatpush.bf16.msra.mxu0 %v565
    %914 = vmatmul.bf16.gmra.mxu0 %v872
    %v915 = vpop.f32.mrf.mxu0
    %v916 = vadd.f32 0.0, %v915
    %v917 = vpop.f32.mrf.mxu0
    %918 = vdwg.mxu0
    %919 = vmatpush.bf16.msra.mxu0 %v594
    %920 = vmatpush.bf16.msra.mxu0 %v590
    %921 = vmatpush.bf16.msra.mxu0 %v586
    %922 = vmatpush.bf16.msra.mxu0 %v582
    %923 = vmatpush.bf16.msra.mxu0 %v578
    %924 = vmatpush.bf16.msra.mxu0 %v574
    %925 = vmatpush.bf16.msra.mxu0 %v570
    %926 = vmatpush.bf16.msra.mxu0 %v566
    %927 = vmatmul.bf16.gmra.mxu0 %v872
    %v928 = vpop.f32.mrf.mxu0
    %v929 = vadd.f32 0.0, %v928
    %v930 = vpop.f32.mrf.mxu0
    %931 = vdwg.mxu0
    %v932 = vadd.f32 %v876, %v890
    %v933 = vadd.f32 %v877, %v903
    %v934 = vadd.f32 %v878, %v916
    %v935 = vadd.f32 %v879, %v929
    %v936 = vxor.u32 %v932, 2147483648
    %v937 = vxor.u32 %v933, 2147483648
    %v938 = vxor.u32 %v934, 2147483648
    %v939 = vmul.f32 %v936, 1.442695
    %v940 = vpow.pop %v939
    %v941 = vmul.f32 %v937, 1.442695
    %v942 = vpow.pop %v941
    %v943 = vmul.f32 %v938, 1.442695
    %v944 = vpow.pop %v943
    %v945 = vadd.f32 %v940, 1.0
    %v946 = vadd.f32 %v942, 1.0
    %v947 = vadd.f32 %v944, 1.0
    %v948 = vrcp.pop %v945
    %v949 = vmul.f32 %v945, %v948
    %v950 = vsub.f32 1.0, %v949
    %v951 = vmul.f32 %v948, %v950
    %v952 = vadd.f32 %v948, %v951
    %vm953 = vweird.f32 %v945
    %vm954 = vweird.f32 %v948
    %vm955 = vmor %vm953, %vm954
    %v956 = vsel %vm955, %v948, %v952
    %v957 = vand.u32 2147483647, %v945
    %vm958 = vcmp.eq.f32.partialorder %v957, 8.507059e+37
    %v959 = vand.u32 %v945, 2147483648
    %v960 = vor.u32 1.1754944e-38, %v959
    %v961 = vsel %vm958, %v960, %v956
    %v962 = vmul.f32 1.0, %v961
    %v963 = vrcp.pop %v946
    %v964 = vmul.f32 %v946, %v963
    %v965 = vsub.f32 1.0, %v964
    %v966 = vmul.f32 %v963, %v965
    %v967 = vadd.f32 %v963, %v966
    %vm968 = vweird.f32 %v946
    %vm969 = vweird.f32 %v963
    %vm970 = vmor %vm968, %vm969
    %v971 = vsel %vm970, %v963, %v967
    %v972 = vand.u32 2147483647, %v946
    %vm973 = vcmp.eq.f32.partialorder %v972, 8.507059e+37
    %v974 = vand.u32 %v946, 2147483648
    %v975 = vor.u32 1.1754944e-38, %v974
    %v976 = vsel %vm973, %v975, %v971
    %v977 = vmul.f32 1.0, %v976
    %v978 = vrcp.pop %v947
    %v979 = vmul.f32 %v947, %v978
    %v980 = vsub.f32 1.0, %v979
    %v981 = vmul.f32 %v978, %v980
    %v982 = vadd.f32 %v978, %v981
    %vm983 = vweird.f32 %v947
    %vm984 = vweird.f32 %v978
    %vm985 = vmor %vm983, %vm984
    %v986 = vsel %vm985, %v978, %v982
    %v987 = vand.u32 2147483647, %v947
    %vm988 = vcmp.eq.f32.partialorder %v987, 8.507059e+37
    %v989 = vand.u32 %v947, 2147483648
    %v990 = vor.u32 1.1754944e-38, %v989
    %v991 = vsel %vm988, %v990, %v986
    %v992 = vmul.f32 1.0, %v991
    %v993 = vtanh.pop %v935
    %v994 = vmul.f32 %v977, %v869
    %v995 = vmul.f32 %v962, %v993
    %v996 = vadd.f32 %v994, %v995
    %v997 = vtanh.pop %v996
    %v998 = vmul.f32 %v992, %v997
    %v999 = vpack.c.bf16 %v998, %v998
    %s1000 = scalar_lea.vmem [#allocation3], 8
    %1001 = vst [vmem:[%s1000] sm:$0xf] %v999
    %s1002 = scalar_lea.vmem [#allocation2], 96
    %v1003 = vld [vmem:[%s1002] sm:$0xff]
    %v1004 = vld [vmem:[%s1002 + $0x8] sm:$0xff]
    %v1005 = vld [vmem:[%s1002 + $0x10] sm:$0xff]
    %v1006 = vld [vmem:[%s1002 + $0x18] sm:$0xff]
    %1007 = vmatpush.bf16.msra.mxu0 %v591
    %1008 = vmatpush.bf16.msra.mxu0 %v587
    %1009 = vmatpush.bf16.msra.mxu0 %v583
    %1010 = vmatpush.bf16.msra.mxu0 %v579
    %1011 = vmatpush.bf16.msra.mxu0 %v575
    %1012 = vmatpush.bf16.msra.mxu0 %v571
    %1013 = vmatpush.bf16.msra.mxu0 %v567
    %1014 = vmatpush.bf16.msra.mxu0 %v563
    %1015 = vmatmul.bf16.gmra.mxu0 %v999
    %v1016 = vpop.f32.mrf.mxu0
    %v1017 = vadd.f32 0.0, %v1016
    %v1018 = vpop.f32.mrf.mxu0
    %1019 = vdwg.mxu0
    %1020 = vmatpush.bf16.msra.mxu0 %v592
    %1021 = vmatpush.bf16.msra.mxu0 %v588
    %1022 = vmatpush.bf16.msra.mxu0 %v584
    %1023 = vmatpush.bf16.msra.mxu0 %v580
    %1024 = vmatpush.bf16.msra.mxu0 %v576
    %1025 = vmatpush.bf16.msra.mxu0 %v572
    %1026 = vmatpush.bf16.msra.mxu0 %v568
    %1027 = vmatpush.bf16.msra.mxu0 %v564
    %1028 = vmatmul.bf16.gmra.mxu0 %v999
    %v1029 = vpop.f32.mrf.mxu0
    %v1030 = vadd.f32 0.0, %v1029
    %v1031 = vpop.f32.mrf.mxu0
    %1032 = vdwg.mxu0
    %1033 = vmatpush.bf16.msra.mxu0 %v593
    %1034 = vmatpush.bf16.msra.mxu0 %v589
    %1035 = vmatpush.bf16.msra.mxu0 %v585
    %1036 = vmatpush.bf16.msra.mxu0 %v581
    %1037 = vmatpush.bf16.msra.mxu0 %v577
    %1038 = vmatpush.bf16.msra.mxu0 %v573
    %1039 = vmatpush.bf16.msra.mxu0 %v569
    %1040 = vmatpush.bf16.msra.mxu0 %v565
    %1041 = vmatmul.bf16.gmra.mxu0 %v999
    %v1042 = vpop.f32.mrf.mxu0
    %v1043 = vadd.f32 0.0, %v1042
    %v1044 = vpop.f32.mrf.mxu0
    %1045 = vdwg.mxu0
    %1046 = vmatpush.bf16.msra.mxu0 %v594
    %1047 = vmatpush.bf16.msra.mxu0 %v590
    %1048 = vmatpush.bf16.msra.mxu0 %v586
    %1049 = vmatpush.bf16.msra.mxu0 %v582
    %1050 = vmatpush.bf16.msra.mxu0 %v578
    %1051 = vmatpush.bf16.msra.mxu0 %v574
    %1052 = vmatpush.bf16.msra.mxu0 %v570
    %1053 = vmatpush.bf16.msra.mxu0 %v566
    %1054 = vmatmul.bf16.gmra.mxu0 %v999
    %v1055 = vpop.f32.mrf.mxu0
    %v1056 = vadd.f32 0.0, %v1055
    %v1057 = vpop.f32.mrf.mxu0
    %1058 = vdwg.mxu0
    %v1059 = vadd.f32 %v1003, %v1017
    %v1060 = vadd.f32 %v1004, %v1030
    %v1061 = vadd.f32 %v1005, %v1043
    %v1062 = vadd.f32 %v1006, %v1056
    %v1063 = vxor.u32 %v1059, 2147483648
    %v1064 = vxor.u32 %v1060, 2147483648
    %v1065 = vxor.u32 %v1061, 2147483648
    %v1066 = vmul.f32 %v1063, 1.442695
    %v1067 = vpow.pop %v1066
    %v1068 = vmul.f32 %v1064, 1.442695
    %v1069 = vpow.pop %v1068
    %v1070 = vmul.f32 %v1065, 1.442695
    %v1071 = vpow.pop %v1070
    %v1072 = vadd.f32 %v1067, 1.0
    %v1073 = vadd.f32 %v1069, 1.0
    %v1074 = vadd.f32 %v1071, 1.0
    %v1075 = vrcp.pop %v1072
    %v1076 = vmul.f32 %v1072, %v1075
    %v1077 = vsub.f32 1.0, %v1076
    %v1078 = vmul.f32 %v1075, %v1077
    %v1079 = vadd.f32 %v1075, %v1078
    %vm1080 = vweird.f32 %v1072
    %vm1081 = vweird.f32 %v1075
    %vm1082 = vmor %vm1080, %vm1081
    %v1083 = vsel %vm1082, %v1075, %v1079
    %v1084 = vand.u32 2147483647, %v1072
    %vm1085 = vcmp.eq.f32.partialorder %v1084, 8.507059e+37
    %v1086 = vand.u32 %v1072, 2147483648
    %v1087 = vor.u32 1.1754944e-38, %v1086
    %v1088 = vsel %vm1085, %v1087, %v1083
    %v1089 = vmul.f32 1.0, %v1088
    %v1090 = vrcp.pop %v1073
    %v1091 = vmul.f32 %v1073, %v1090
    %v1092 = vsub.f32 1.0, %v1091
    %v1093 = vmul.f32 %v1090, %v1092
    %v1094 = vadd.f32 %v1090, %v1093
    %vm1095 = vweird.f32 %v1073
    %vm1096 = vweird.f32 %v1090
    %vm1097 = vmor %vm1095, %vm1096
    %v1098 = vsel %vm1097, %v1090, %v1094
    %v1099 = vand.u32 2147483647, %v1073
    %vm1100 = vcmp.eq.f32.partialorder %v1099, 8.507059e+37
    %v1101 = vand.u32 %v1073, 2147483648
    %v1102 = vor.u32 1.1754944e-38, %v1101
    %v1103 = vsel %vm1100, %v1102, %v1098
    %v1104 = vmul.f32 1.0, %v1103
    %v1105 = vrcp.pop %v1074
    %v1106 = vmul.f32 %v1074, %v1105
    %v1107 = vsub.f32 1.0, %v1106
    %v1108 = vmul.f32 %v1105, %v1107
    %v1109 = vadd.f32 %v1105, %v1108
    %vm1110 = vweird.f32 %v1074
    %vm1111 = vweird.f32 %v1105
    %vm1112 = vmor %vm1110, %vm1111
    %v1113 = vsel %vm1112, %v1105, %v1109
    %v1114 = vand.u32 2147483647, %v1074
    %vm1115 = vcmp.eq.f32.partialorder %v1114, 8.507059e+37
    %v1116 = vand.u32 %v1074, 2147483648
    %v1117 = vor.u32 1.1754944e-38, %v1116
    %v1118 = vsel %vm1115, %v1117, %v1113
    %v1119 = vmul.f32 1.0, %v1118
    %v1120 = vtanh.pop %v1062
    %v1121 = vmul.f32 %v1104, %v996
    %v1122 = vmul.f32 %v1089, %v1120
    %v1123 = vadd.f32 %v1121, %v1122
    %v1124 = vtanh.pop %v1123
    %v1125 = vmul.f32 %v1119, %v1124
    %v1126 = vpack.c.bf16 %v1125, %v1125
    %s1127 = scalar_lea.vmem [#allocation3], 12
    %1128 = vst [vmem:[%s1127] sm:$0xf] %v1126
    %s1129 = scalar_lea.vmem [#allocation2], 128
    %v1130 = vld [vmem:[%s1129] sm:$0xff]
    %v1131 = vld [vmem:[%s1129 + $0x8] sm:$0xff]
    %v1132 = vld [vmem:[%s1129 + $0x10] sm:$0xff]
    %v1133 = vld [vmem:[%s1129 + $0x18] sm:$0xff]
    %1134 = vmatpush.bf16.msra.mxu0 %v591
    %1135 = vmatpush.bf16.msra.mxu0 %v587
    %1136 = vmatpush.bf16.msra.mxu0 %v583
    %1137 = vmatpush.bf16.msra.mxu0 %v579
    %1138 = vmatpush.bf16.msra.mxu0 %v575
    %1139 = vmatpush.bf16.msra.mxu0 %v571
    %1140 = vmatpush.bf16.msra.mxu0 %v567
    %1141 = vmatpush.bf16.msra.mxu0 %v563
    %1142 = vmatmul.bf16.gmra.mxu0 %v1126
    %v1143 = vpop.f32.mrf.mxu0
    %v1144 = vadd.f32 0.0, %v1143
    %v1145 = vpop.f32.mrf.mxu0
    %1146 = vdwg.mxu0
    %1147 = vmatpush.bf16.msra.mxu0 %v592
    %1148 = vmatpush.bf16.msra.mxu0 %v588
    %1149 = vmatpush.bf16.msra.mxu0 %v584
    %1150 = vmatpush.bf16.msra.mxu0 %v580
    %1151 = vmatpush.bf16.msra.mxu0 %v576
    %1152 = vmatpush.bf16.msra.mxu0 %v572
    %1153 = vmatpush.bf16.msra.mxu0 %v568
    %1154 = vmatpush.bf16.msra.mxu0 %v564
    %1155 = vmatmul.bf16.gmra.mxu0 %v1126
    %v1156 = vpop.f32.mrf.mxu0
    %v1157 = vadd.f32 0.0, %v1156
    %v1158 = vpop.f32.mrf.mxu0
    %1159 = vdwg.mxu0
    %1160 = vmatpush.bf16.msra.mxu0 %v593
    %1161 = vmatpush.bf16.msra.mxu0 %v589
    %1162 = vmatpush.bf16.msra.mxu0 %v585
    %1163 = vmatpush.bf16.msra.mxu0 %v581
    %1164 = vmatpush.bf16.msra.mxu0 %v577
    %1165 = vmatpush.bf16.msra.mxu0 %v573
    %1166 = vmatpush.bf16.msra.mxu0 %v569
    %1167 = vmatpush.bf16.msra.mxu0 %v565
    %1168 = vmatmul.bf16.gmra.mxu0 %v1126
    %v1169 = vpop.f32.mrf.mxu0
    %v1170 = vadd.f32 0.0, %v1169
    %v1171 = vpop.f32.mrf.mxu0
    %1172 = vdwg.mxu0
    %1173 = vmatpush.bf16.msra.mxu0 %v594
    %1174 = vmatpush.bf16.msra.mxu0 %v590
    %1175 = vmatpush.bf16.msra.mxu0 %v586
    %1176 = vmatpush.bf16.msra.mxu0 %v582
    %1177 = vmatpush.bf16.msra.mxu0 %v578
    %1178 = vmatpush.bf16.msra.mxu0 %v574
    %1179 = vmatpush.bf16.msra.mxu0 %v570
    %1180 = vmatpush.bf16.msra.mxu0 %v566
    %1181 = vmatmul.bf16.gmra.mxu0 %v1126
    %v1182 = vpop.f32.mrf.mxu0
    %v1183 = vadd.f32 0.0, %v1182
    %v1184 = vpop.f32.mrf.mxu0
    %1185 = vdwg.mxu0
    %v1186 = vadd.f32 %v1130, %v1144
    %v1187 = vadd.f32 %v1131, %v1157
    %v1188 = vadd.f32 %v1132, %v1170
    %v1189 = vadd.f32 %v1133, %v1183
    %v1190 = vxor.u32 %v1186, 2147483648
    %v1191 = vxor.u32 %v1187, 2147483648
    %v1192 = vxor.u32 %v1188, 2147483648
    %v1193 = vmul.f32 %v1190, 1.442695
    %v1194 = vpow.pop %v1193
    %v1195 = vmul.f32 %v1191, 1.442695
    %v1196 = vpow.pop %v1195
    %v1197 = vmul.f32 %v1192, 1.442695
    %v1198 = vpow.pop %v1197
    %v1199 = vadd.f32 %v1194, 1.0
    %v1200 = vadd.f32 %v1196, 1.0
    %v1201 = vadd.f32 %v1198, 1.0
    %v1202 = vrcp.pop %v1199
    %v1203 = vmul.f32 %v1199, %v1202
    %v1204 = vsub.f32 1.0, %v1203
    %v1205 = vmul.f32 %v1202, %v1204
    %v1206 = vadd.f32 %v1202, %v1205
    %vm1207 = vweird.f32 %v1199
    %vm1208 = vweird.f32 %v1202
    %vm1209 = vmor %vm1207, %vm1208
    %v1210 = vsel %vm1209, %v1202, %v1206
    %v1211 = vand.u32 2147483647, %v1199
    %vm1212 = vcmp.eq.f32.partialorder %v1211, 8.507059e+37
    %v1213 = vand.u32 %v1199, 2147483648
    %v1214 = vor.u32 1.1754944e-38, %v1213
    %v1215 = vsel %vm1212, %v1214, %v1210
    %v1216 = vmul.f32 1.0, %v1215
    %v1217 = vrcp.pop %v1200
    %v1218 = vmul.f32 %v1200, %v1217
    %v1219 = vsub.f32 1.0, %v1218
    %v1220 = vmul.f32 %v1217, %v1219
    %v1221 = vadd.f32 %v1217, %v1220
    %vm1222 = vweird.f32 %v1200
    %vm1223 = vweird.f32 %v1217
    %vm1224 = vmor %vm1222, %vm1223
    %v1225 = vsel %vm1224, %v1217, %v1221
    %v1226 = vand.u32 2147483647, %v1200
    %vm1227 = vcmp.eq.f32.partialorder %v1226, 8.507059e+37
    %v1228 = vand.u32 %v1200, 2147483648
    %v1229 = vor.u32 1.1754944e-38, %v1228
    %v1230 = vsel %vm1227, %v1229, %v1225
    %v1231 = vmul.f32 1.0, %v1230
    %v1232 = vrcp.pop %v1201
    %v1233 = vmul.f32 %v1201, %v1232
    %v1234 = vsub.f32 1.0, %v1233
    %v1235 = vmul.f32 %v1232, %v1234
    %v1236 = vadd.f32 %v1232, %v1235
    %vm1237 = vweird.f32 %v1201
    %vm1238 = vweird.f32 %v1232
    %vm1239 = vmor %vm1237, %vm1238
    %v1240 = vsel %vm1239, %v1232, %v1236
    %v1241 = vand.u32 2147483647, %v1201
    %vm1242 = vcmp.eq.f32.partialorder %v1241, 8.507059e+37
    %v1243 = vand.u32 %v1201, 2147483648
    %v1244 = vor.u32 1.1754944e-38, %v1243
    %v1245 = vsel %vm1242, %v1244, %v1240
    %v1246 = vmul.f32 1.0, %v1245
    %v1247 = vtanh.pop %v1189
    %v1248 = vmul.f32 %v1231, %v1123
    %v1249 = vmul.f32 %v1216, %v1247
    %v1250 = vadd.f32 %v1248, %v1249
    %v1251 = vtanh.pop %v1250
    %v1252 = vmul.f32 %v1246, %v1251
    %v1253 = vpack.c.bf16 %v1252, %v1252
    %s1254 = scalar_lea.vmem [#allocation3], 16
    %1255 = vst [vmem:[%s1254] sm:$0xf] %v1253
    %s1256 = scalar_lea.vmem [#allocation2], 160
    %v1257 = vld [vmem:[%s1256] sm:$0xff]
    %v1258 = vld [vmem:[%s1256 + $0x8] sm:$0xff]
    %v1259 = vld [vmem:[%s1256 + $0x10] sm:$0xff]
    %v1260 = vld [vmem:[%s1256 + $0x18] sm:$0xff]
    %1261 = vmatpush.bf16.msra.mxu0 %v591
    %1262 = vmatpush.bf16.msra.mxu0 %v587
    %1263 = vmatpush.bf16.msra.mxu0 %v583
    %1264 = vmatpush.bf16.msra.mxu0 %v579
    %1265 = vmatpush.bf16.msra.mxu0 %v575
    %1266 = vmatpush.bf16.msra.mxu0 %v571
    %1267 = vmatpush.bf16.msra.mxu0 %v567
    %1268 = vmatpush.bf16.msra.mxu0 %v563
    %1269 = vmatmul.bf16.gmra.mxu0 %v1253
    %v1270 = vpop.f32.mrf.mxu0
    %v1271 = vadd.f32 0.0, %v1270
    %v1272 = vpop.f32.mrf.mxu0
    %1273 = vdwg.mxu0
    %1274 = vmatpush.bf16.msra.mxu0 %v592
    %1275 = vmatpush.bf16.msra.mxu0 %v588
    %1276 = vmatpush.bf16.msra.mxu0 %v584
    %1277 = vmatpush.bf16.msra.mxu0 %v580
    %1278 = vmatpush.bf16.msra.mxu0 %v576
    %1279 = vmatpush.bf16.msra.mxu0 %v572
    %1280 = vmatpush.bf16.msra.mxu0 %v568
    %1281 = vmatpush.bf16.msra.mxu0 %v564
    %1282 = vmatmul.bf16.gmra.mxu0 %v1253
    %v1283 = vpop.f32.mrf.mxu0
    %v1284 = vadd.f32 0.0, %v1283
    %v1285 = vpop.f32.mrf.mxu0
    %1286 = vdwg.mxu0
    %1287 = vmatpush.bf16.msra.mxu0 %v593
    %1288 = vmatpush.bf16.msra.mxu0 %v589
    %1289 = vmatpush.bf16.msra.mxu0 %v585
    %1290 = vmatpush.bf16.msra.mxu0 %v581
    %1291 = vmatpush.bf16.msra.mxu0 %v577
    %1292 = vmatpush.bf16.msra.mxu0 %v573
    %1293 = vmatpush.bf16.msra.mxu0 %v569
    %1294 = vmatpush.bf16.msra.mxu0 %v565
    %1295 = vmatmul.bf16.gmra.mxu0 %v1253
    %v1296 = vpop.f32.mrf.mxu0
    %v1297 = vadd.f32 0.0, %v1296
    %v1298 = vpop.f32.mrf.mxu0
    %1299 = vdwg.mxu0
    %1300 = vmatpush.bf16.msra.mxu0 %v594
    %1301 = vmatpush.bf16.msra.mxu0 %v590
    %1302 = vmatpush.bf16.msra.mxu0 %v586
    %1303 = vmatpush.bf16.msra.mxu0 %v582
    %1304 = vmatpush.bf16.msra.mxu0 %v578
    %1305 = vmatpush.bf16.msra.mxu0 %v574
    %1306 = vmatpush.bf16.msra.mxu0 %v570
    %1307 = vmatpush.bf16.msra.mxu0 %v566
    %1308 = vmatmul.bf16.gmra.mxu0 %v1253
    %v1309 = vpop.f32.mrf.mxu0
    %v1310 = vadd.f32 0.0, %v1309
    %v1311 = vpop.f32.mrf.mxu0
    %1312 = vdwg.mxu0
    %v1313 = vadd.f32 %v1257, %v1271
    %v1314 = vadd.f32 %v1258, %v1284
    %v1315 = vadd.f32 %v1259, %v1297
    %v1316 = vadd.f32 %v1260, %v1310
    %v1317 = vxor.u32 %v1313, 2147483648
    %v1318 = vxor.u32 %v1314, 2147483648
    %v1319 = vxor.u32 %v1315, 2147483648
    %v1320 = vmul.f32 %v1317, 1.442695
    %v1321 = vpow.pop %v1320
    %v1322 = vmul.f32 %v1318, 1.442695
    %v1323 = vpow.pop %v1322
    %v1324 = vmul.f32 %v1319, 1.442695
    %v1325 = vpow.pop %v1324
    %v1326 = vadd.f32 %v1321, 1.0
    %v1327 = vadd.f32 %v1323, 1.0
    %v1328 = vadd.f32 %v1325, 1.0
    %v1329 = vrcp.pop %v1326
    %v1330 = vmul.f32 %v1326, %v1329
    %v1331 = vsub.f32 1.0, %v1330
    %v1332 = vmul.f32 %v1329, %v1331
    %v1333 = vadd.f32 %v1329, %v1332
    %vm1334 = vweird.f32 %v1326
    %vm1335 = vweird.f32 %v1329
    %vm1336 = vmor %vm1334, %vm1335
    %v1337 = vsel %vm1336, %v1329, %v1333
    %v1338 = vand.u32 2147483647, %v1326
    %vm1339 = vcmp.eq.f32.partialorder %v1338, 8.507059e+37
    %v1340 = vand.u32 %v1326, 2147483648
    %v1341 = vor.u32 1.1754944e-38, %v1340
    %v1342 = vsel %vm1339, %v1341, %v1337
    %v1343 = vmul.f32 1.0, %v1342
    %v1344 = vrcp.pop %v1327
    %v1345 = vmul.f32 %v1327, %v1344
    %v1346 = vsub.f32 1.0, %v1345
    %v1347 = vmul.f32 %v1344, %v1346
    %v1348 = vadd.f32 %v1344, %v1347
    %vm1349 = vweird.f32 %v1327
    %vm1350 = vweird.f32 %v1344
    %vm1351 = vmor %vm1349, %vm1350
    %v1352 = vsel %vm1351, %v1344, %v1348
    %v1353 = vand.u32 2147483647, %v1327
    %vm1354 = vcmp.eq.f32.partialorder %v1353, 8.507059e+37
    %v1355 = vand.u32 %v1327, 2147483648
    %v1356 = vor.u32 1.1754944e-38, %v1355
    %v1357 = vsel %vm1354, %v1356, %v1352
    %v1358 = vmul.f32 1.0, %v1357
    %v1359 = vrcp.pop %v1328
    %v1360 = vmul.f32 %v1328, %v1359
    %v1361 = vsub.f32 1.0, %v1360
    %v1362 = vmul.f32 %v1359, %v1361
    %v1363 = vadd.f32 %v1359, %v1362
    %vm1364 = vweird.f32 %v1328
    %vm1365 = vweird.f32 %v1359
    %vm1366 = vmor %vm1364, %vm1365
    %v1367 = vsel %vm1366, %v1359, %v1363
    %v1368 = vand.u32 2147483647, %v1328
    %vm1369 = vcmp.eq.f32.partialorder %v1368, 8.507059e+37
    %v1370 = vand.u32 %v1328, 2147483648
    %v1371 = vor.u32 1.1754944e-38, %v1370
    %v1372 = vsel %vm1369, %v1371, %v1367
    %v1373 = vmul.f32 1.0, %v1372
    %v1374 = vtanh.pop %v1316
    %v1375 = vmul.f32 %v1358, %v1250
    %v1376 = vmul.f32 %v1343, %v1374
    %v1377 = vadd.f32 %v1375, %v1376
    %v1378 = vtanh.pop %v1377
    %v1379 = vmul.f32 %v1373, %v1378
    %v1380 = vpack.c.bf16 %v1379, %v1379
    %s1381 = scalar_lea.vmem [#allocation3], 20
    %1382 = vst [vmem:[%s1381] sm:$0xf] %v1380
    %s1383 = scalar_lea.vmem [#allocation2], 192
    %v1384 = vld [vmem:[%s1383] sm:$0xff]
    %v1385 = vld [vmem:[%s1383 + $0x8] sm:$0xff]
    %v1386 = vld [vmem:[%s1383 + $0x10] sm:$0xff]
    %v1387 = vld [vmem:[%s1383 + $0x18] sm:$0xff]
    %1388 = vmatpush.bf16.msra.mxu0 %v591
    %1389 = vmatpush.bf16.msra.mxu0 %v587
    %1390 = vmatpush.bf16.msra.mxu0 %v583
    %1391 = vmatpush.bf16.msra.mxu0 %v579
    %1392 = vmatpush.bf16.msra.mxu0 %v575
    %1393 = vmatpush.bf16.msra.mxu0 %v571
    %1394 = vmatpush.bf16.msra.mxu0 %v567
    %1395 = vmatpush.bf16.msra.mxu0 %v563
    %1396 = vmatmul.bf16.gmra.mxu0 %v1380
    %v1397 = vpop.f32.mrf.mxu0
    %v1398 = vadd.f32 0.0, %v1397
    %v1399 = vpop.f32.mrf.mxu0
    %1400 = vdwg.mxu0
    %1401 = vmatpush.bf16.msra.mxu0 %v592
    %1402 = vmatpush.bf16.msra.mxu0 %v588
    %1403 = vmatpush.bf16.msra.mxu0 %v584
    %1404 = vmatpush.bf16.msra.mxu0 %v580
    %1405 = vmatpush.bf16.msra.mxu0 %v576
    %1406 = vmatpush.bf16.msra.mxu0 %v572
    %1407 = vmatpush.bf16.msra.mxu0 %v568
    %1408 = vmatpush.bf16.msra.mxu0 %v564
    %1409 = vmatmul.bf16.gmra.mxu0 %v1380
    %v1410 = vpop.f32.mrf.mxu0
    %v1411 = vadd.f32 0.0, %v1410
    %v1412 = vpop.f32.mrf.mxu0
    %1413 = vdwg.mxu0
    %1414 = vmatpush.bf16.msra.mxu0 %v593
    %1415 = vmatpush.bf16.msra.mxu0 %v589
    %1416 = vmatpush.bf16.msra.mxu0 %v585
    %1417 = vmatpush.bf16.msra.mxu0 %v581
    %1418 = vmatpush.bf16.msra.mxu0 %v577
    %1419 = vmatpush.bf16.msra.mxu0 %v573
    %1420 = vmatpush.bf16.msra.mxu0 %v569
    %1421 = vmatpush.bf16.msra.mxu0 %v565
    %1422 = vmatmul.bf16.gmra.mxu0 %v1380
    %v1423 = vpop.f32.mrf.mxu0
    %v1424 = vadd.f32 0.0, %v1423
    %v1425 = vpop.f32.mrf.mxu0
    %1426 = vdwg.mxu0
    %1427 = vmatpush.bf16.msra.mxu0 %v594
    %1428 = vmatpush.bf16.msra.mxu0 %v590
    %1429 = vmatpush.bf16.msra.mxu0 %v586
    %1430 = vmatpush.bf16.msra.mxu0 %v582
    %1431 = vmatpush.bf16.msra.mxu0 %v578
    %1432 = vmatpush.bf16.msra.mxu0 %v574
    %1433 = vmatpush.bf16.msra.mxu0 %v570
    %1434 = vmatpush.bf16.msra.mxu0 %v566
    %1435 = vmatmul.bf16.gmra.mxu0 %v1380
    %v1436 = vpop.f32.mrf.mxu0
    %v1437 = vadd.f32 0.0, %v1436
    %v1438 = vpop.f32.mrf.mxu0
    %1439 = vdwg.mxu0
    %v1440 = vadd.f32 %v1384, %v1398
    %v1441 = vadd.f32 %v1385, %v1411
    %v1442 = vadd.f32 %v1386, %v1424
    %v1443 = vadd.f32 %v1387, %v1437
    %v1444 = vxor.u32 %v1440, 2147483648
    %v1445 = vxor.u32 %v1441, 2147483648
    %v1446 = vxor.u32 %v1442, 2147483648
    %v1447 = vmul.f32 %v1444, 1.442695
    %v1448 = vpow.pop %v1447
    %v1449 = vmul.f32 %v1445, 1.442695
    %v1450 = vpow.pop %v1449
    %v1451 = vmul.f32 %v1446, 1.442695
    %v1452 = vpow.pop %v1451
    %v1453 = vadd.f32 %v1448, 1.0
    %v1454 = vadd.f32 %v1450, 1.0
    %v1455 = vadd.f32 %v1452, 1.0
    %v1456 = vrcp.pop %v1453
    %v1457 = vmul.f32 %v1453, %v1456
    %v1458 = vsub.f32 1.0, %v1457
    %v1459 = vmul.f32 %v1456, %v1458
    %v1460 = vadd.f32 %v1456, %v1459
    %vm1461 = vweird.f32 %v1453
    %vm1462 = vweird.f32 %v1456
    %vm1463 = vmor %vm1461, %vm1462
    %v1464 = vsel %vm1463, %v1456, %v1460
    %v1465 = vand.u32 2147483647, %v1453
    %vm1466 = vcmp.eq.f32.partialorder %v1465, 8.507059e+37
    %v1467 = vand.u32 %v1453, 2147483648
    %v1468 = vor.u32 1.1754944e-38, %v1467
    %v1469 = vsel %vm1466, %v1468, %v1464
    %v1470 = vmul.f32 1.0, %v1469
    %v1471 = vrcp.pop %v1454
    %v1472 = vmul.f32 %v1454, %v1471
    %v1473 = vsub.f32 1.0, %v1472
    %v1474 = vmul.f32 %v1471, %v1473
    %v1475 = vadd.f32 %v1471, %v1474
    %vm1476 = vweird.f32 %v1454
    %vm1477 = vweird.f32 %v1471
    %vm1478 = vmor %vm1476, %vm1477
    %v1479 = vsel %vm1478, %v1471, %v1475
    %v1480 = vand.u32 2147483647, %v1454
    %vm1481 = vcmp.eq.f32.partialorder %v1480, 8.507059e+37
    %v1482 = vand.u32 %v1454, 2147483648
    %v1483 = vor.u32 1.1754944e-38, %v1482
    %v1484 = vsel %vm1481, %v1483, %v1479
    %v1485 = vmul.f32 1.0, %v1484
    %v1486 = vrcp.pop %v1455
    %v1487 = vmul.f32 %v1455, %v1486
    %v1488 = vsub.f32 1.0, %v1487
    %v1489 = vmul.f32 %v1486, %v1488
    %v1490 = vadd.f32 %v1486, %v1489
    %vm1491 = vweird.f32 %v1455
    %vm1492 = vweird.f32 %v1486
    %vm1493 = vmor %vm1491, %vm1492
    %v1494 = vsel %vm1493, %v1486, %v1490
    %v1495 = vand.u32 2147483647, %v1455
    %vm1496 = vcmp.eq.f32.partialorder %v1495, 8.507059e+37
    %v1497 = vand.u32 %v1455, 2147483648
    %v1498 = vor.u32 1.1754944e-38, %v1497
    %v1499 = vsel %vm1496, %v1498, %v1494
    %v1500 = vmul.f32 1.0, %v1499
    %v1501 = vtanh.pop %v1443
    %v1502 = vmul.f32 %v1485, %v1377
    %v1503 = vmul.f32 %v1470, %v1501
    %v1504 = vadd.f32 %v1502, %v1503
    %v1505 = vtanh.pop %v1504
    %v1506 = vmul.f32 %v1500, %v1505
    %v1507 = vpack.c.bf16 %v1506, %v1506
    %s1508 = scalar_lea.vmem [#allocation3], 24
    %1509 = vst [vmem:[%s1508] sm:$0xf] %v1507
    %s1510 = scalar_lea.vmem [#allocation2], 224
    %v1511 = vld [vmem:[%s1510] sm:$0xff]
    %v1512 = vld [vmem:[%s1510 + $0x8] sm:$0xff]
    %v1513 = vld [vmem:[%s1510 + $0x10] sm:$0xff]
    %v1514 = vld [vmem:[%s1510 + $0x18] sm:$0xff]
    %1515 = vmatpush.bf16.msra.mxu0 %v591
    %1516 = vmatpush.bf16.msra.mxu0 %v587
    %1517 = vmatpush.bf16.msra.mxu0 %v583
    %1518 = vmatpush.bf16.msra.mxu0 %v579
    %1519 = vmatpush.bf16.msra.mxu0 %v575
    %1520 = vmatpush.bf16.msra.mxu0 %v571
    %1521 = vmatpush.bf16.msra.mxu0 %v567
    %1522 = vmatpush.bf16.msra.mxu0 %v563
    %1523 = vmatmul.bf16.gmra.mxu0 %v1507
    %v1524 = vpop.f32.mrf.mxu0
    %v1525 = vadd.f32 0.0, %v1524
    %v1526 = vpop.f32.mrf.mxu0
    %1527 = vdwg.mxu0
    %1528 = vmatpush.bf16.msra.mxu0 %v592
    %1529 = vmatpush.bf16.msra.mxu0 %v588
    %1530 = vmatpush.bf16.msra.mxu0 %v584
    %1531 = vmatpush.bf16.msra.mxu0 %v580
    %1532 = vmatpush.bf16.msra.mxu0 %v576
    %1533 = vmatpush.bf16.msra.mxu0 %v572
    %1534 = vmatpush.bf16.msra.mxu0 %v568
    %1535 = vmatpush.bf16.msra.mxu0 %v564
    %1536 = vmatmul.bf16.gmra.mxu0 %v1507
    %v1537 = vpop.f32.mrf.mxu0
    %v1538 = vadd.f32 0.0, %v1537
    %v1539 = vpop.f32.mrf.mxu0
    %1540 = vdwg.mxu0
    %1541 = vmatpush.bf16.msra.mxu0 %v593
    %1542 = vmatpush.bf16.msra.mxu0 %v589
    %1543 = vmatpush.bf16.msra.mxu0 %v585
    %1544 = vmatpush.bf16.msra.mxu0 %v581
    %1545 = vmatpush.bf16.msra.mxu0 %v577
    %1546 = vmatpush.bf16.msra.mxu0 %v573
    %1547 = vmatpush.bf16.msra.mxu0 %v569
    %1548 = vmatpush.bf16.msra.mxu0 %v565
    %1549 = vmatmul.bf16.gmra.mxu0 %v1507
    %v1550 = vpop.f32.mrf.mxu0
    %v1551 = vadd.f32 0.0, %v1550
    %v1552 = vpop.f32.mrf.mxu0
    %1553 = vdwg.mxu0
    %1554 = vmatpush.bf16.msra.mxu0 %v594
    %1555 = vmatpush.bf16.msra.mxu0 %v590
    %1556 = vmatpush.bf16.msra.mxu0 %v586
    %1557 = vmatpush.bf16.msra.mxu0 %v582
    %1558 = vmatpush.bf16.msra.mxu0 %v578
    %1559 = vmatpush.bf16.msra.mxu0 %v574
    %1560 = vmatpush.bf16.msra.mxu0 %v570
    %1561 = vmatpush.bf16.msra.mxu0 %v566
    %1562 = vmatmul.bf16.gmra.mxu0 %v1507
    %v1563 = vpop.f32.mrf.mxu0
    %v1564 = vadd.f32 0.0, %v1563
    %v1565 = vpop.f32.mrf.mxu0
    %1566 = vdwg.mxu0
    %v1567 = vadd.f32 %v1511, %v1525
    %v1568 = vadd.f32 %v1512, %v1538
    %v1569 = vadd.f32 %v1513, %v1551
    %v1570 = vadd.f32 %v1514, %v1564
    %v1571 = vxor.u32 %v1567, 2147483648
    %v1572 = vxor.u32 %v1568, 2147483648
    %v1573 = vxor.u32 %v1569, 2147483648
    %v1574 = vmul.f32 %v1571, 1.442695
    %v1575 = vpow.pop %v1574
    %v1576 = vmul.f32 %v1572, 1.442695
    %v1577 = vpow.pop %v1576
    %v1578 = vmul.f32 %v1573, 1.442695
    %v1579 = vpow.pop %v1578
    %v1580 = vadd.f32 %v1575, 1.0
    %v1581 = vadd.f32 %v1577, 1.0
    %v1582 = vadd.f32 %v1579, 1.0
    %v1583 = vrcp.pop %v1580
    %v1584 = vmul.f32 %v1580, %v1583
    %v1585 = vsub.f32 1.0, %v1584
    %v1586 = vmul.f32 %v1583, %v1585
    %v1587 = vadd.f32 %v1583, %v1586
    %vm1588 = vweird.f32 %v1580
    %vm1589 = vweird.f32 %v1583
    %vm1590 = vmor %vm1588, %vm1589
    %v1591 = vsel %vm1590, %v1583, %v1587
    %v1592 = vand.u32 2147483647, %v1580
    %vm1593 = vcmp.eq.f32.partialorder %v1592, 8.507059e+37
    %v1594 = vand.u32 %v1580, 2147483648
    %v1595 = vor.u32 1.1754944e-38, %v1594
    %v1596 = vsel %vm1593, %v1595, %v1591
    %v1597 = vmul.f32 1.0, %v1596
    %v1598 = vrcp.pop %v1581
    %v1599 = vmul.f32 %v1581, %v1598
    %v1600 = vsub.f32 1.0, %v1599
    %v1601 = vmul.f32 %v1598, %v1600
    %v1602 = vadd.f32 %v1598, %v1601
    %vm1603 = vweird.f32 %v1581
    %vm1604 = vweird.f32 %v1598
    %vm1605 = vmor %vm1603, %vm1604
    %v1606 = vsel %vm1605, %v1598, %v1602
    %v1607 = vand.u32 2147483647, %v1581
    %vm1608 = vcmp.eq.f32.partialorder %v1607, 8.507059e+37
    %v1609 = vand.u32 %v1581, 2147483648
    %v1610 = vor.u32 1.1754944e-38, %v1609
    %v1611 = vsel %vm1608, %v1610, %v1606
    %v1612 = vmul.f32 1.0, %v1611
    %v1613 = vrcp.pop %v1582
    %v1614 = vmul.f32 %v1582, %v1613
    %v1615 = vsub.f32 1.0, %v1614
    %v1616 = vmul.f32 %v1613, %v1615
    %v1617 = vadd.f32 %v1613, %v1616
    %vm1618 = vweird.f32 %v1582
    %vm1619 = vweird.f32 %v1613
    %vm1620 = vmor %vm1618, %vm1619
    %v1621 = vsel %vm1620, %v1613, %v1617
    %v1622 = vand.u32 2147483647, %v1582
    %vm1623 = vcmp.eq.f32.partialorder %v1622, 8.507059e+37
    %v1624 = vand.u32 %v1582, 2147483648
    %v1625 = vor.u32 1.1754944e-38, %v1624
    %v1626 = vsel %vm1623, %v1625, %v1621
    %v1627 = vmul.f32 1.0, %v1626
    %v1628 = vtanh.pop %v1570
    %v1629 = vmul.f32 %v1612, %v1504
    %v1630 = vmul.f32 %v1597, %v1628
    %v1631 = vadd.f32 %v1629, %v1630
    %v1632 = vtanh.pop %v1631
    %v1633 = vmul.f32 %v1627, %v1632
    %v1634 = vpack.c.bf16 %v1633, %v1633
    %s1635 = scalar_lea.vmem [#allocation3], 28
    %1636 = vst [vmem:[%s1635] sm:$0xf] %v1634
    %v1637 = vld [vmem:[#allocation3] sm:$0xf]
    %v1638 = vld [vmem:[#allocation3 + $0x4] sm:$0xf]
    %v1639 = vld [vmem:[#allocation3 + $0x8] sm:$0xf]
    %v1640 = vld [vmem:[#allocation3 + $0xc] sm:$0xf]
    %v1641 = vld [vmem:[#allocation3 + $0x10] sm:$0xf]
    %v1642 = vld [vmem:[#allocation3 + $0x14] sm:$0xf]
    %v1643 = vld [vmem:[#allocation3 + $0x18] sm:$0xf]
    %v1644 = vld [vmem:[#allocation3 + $0x1c] sm:$0xf]
    %v1645 = vld [vmem:[%s4] sm:$0xff]
    %v1646 = vld [vmem:[%s4 + $0x8] sm:$0xff]
    %v1647 = vld [vmem:[%s4 + $0x10] sm:$0xff]
    %v1648 = vld [vmem:[%s4 + $0x18] sm:$0xff]
    %v1649 = vld [vmem:[%s4 + $0x20] sm:$0xff]
    %v1650 = vld [vmem:[%s4 + $0x28] sm:$0xff]
    %v1651 = vld [vmem:[%s4 + $0x30] sm:$0xff]
    %v1652 = vld [vmem:[%s4 + $0x38] sm:$0xff]
    %v1653 = vld [vmem:[%s4 + $0x40] sm:$0xff]
    %v1654 = vld [vmem:[%s4 + $0x48] sm:$0xff]
    %v1655 = vld [vmem:[%s4 + $0x50] sm:$0xff]
    %v1656 = vld [vmem:[%s4 + $0x58] sm:$0xff]
    %v1657 = vld [vmem:[%s4 + $0x60] sm:$0xff]
    %v1658 = vld [vmem:[%s4 + $0x68] sm:$0xff]
    %v1659 = vld [vmem:[%s4 + $0x70] sm:$0xff]
    %v1660 = vld [vmem:[%s4 + $0x78] sm:$0xff]
    %v1661 = vld [vmem:[%s4 + $0x80] sm:$0xff]
    %v1662 = vld [vmem:[%s4 + $0x88] sm:$0xff]
    %v1663 = vld [vmem:[%s4 + $0x90] sm:$0xff]
    %v1664 = vld [vmem:[%s4 + $0x98] sm:$0xff]
    %v1665 = vld [vmem:[%s4 + $0xa0] sm:$0xff]
    %v1666 = vld [vmem:[%s4 + $0xa8] sm:$0xff]
    %v1667 = vld [vmem:[%s4 + $0xb0] sm:$0xff]
    %v1668 = vld [vmem:[%s4 + $0xb8] sm:$0xff]
    %v1669 = vld [vmem:[%s4 + $0xc0] sm:$0xff]
    %v1670 = vld [vmem:[%s4 + $0xc8] sm:$0xff]
    %v1671 = vld [vmem:[%s4 + $0xd0] sm:$0xff]
    %v1672 = vld [vmem:[%s4 + $0xd8] sm:$0xff]
    %v1673 = vld [vmem:[%s4 + $0xe0] sm:$0xff]
    %v1674 = vld [vmem:[%s4 + $0xe8] sm:$0xff]
    %v1675 = vld [vmem:[%s4 + $0xf0] sm:$0xff]
    %v1676 = vld [vmem:[%s4 + $0xf8] sm:$0xff]
    %v1677 = vld [vmem:[%s5] sm:$0xff]
    %v1678 = vld [vmem:[%s5 + $0x8] sm:$0xff]
    %v1679 = vld [vmem:[%s5 + $0x10] sm:$0xff]
    %v1680 = vld [vmem:[%s5 + $0x18] sm:$0xff]
    %v1681 = vld [vmem:[%s5 + $0x20] sm:$0xff]
    %v1682 = vld [vmem:[%s5 + $0x28] sm:$0xff]
    %v1683 = vld [vmem:[%s5 + $0x30] sm:$0xff]
    %v1684 = vld [vmem:[%s5 + $0x38] sm:$0xff]
    %v1685 = vld [vmem:[%s5 + $0x40] sm:$0xff]
    %v1686 = vld [vmem:[%s5 + $0x48] sm:$0xff]
    %v1687 = vld [vmem:[%s5 + $0x50] sm:$0xff]
    %v1688 = vld [vmem:[%s5 + $0x58] sm:$0xff]
    %v1689 = vld [vmem:[%s5 + $0x60] sm:$0xff]
    %v1690 = vld [vmem:[%s5 + $0x68] sm:$0xff]
    %v1691 = vld [vmem:[%s5 + $0x70] sm:$0xff]
    %v1692 = vld [vmem:[%s5 + $0x78] sm:$0xff]
    %v1693 = vld [vmem:[%s5 + $0x80] sm:$0xff]
    %v1694 = vld [vmem:[%s5 + $0x88] sm:$0xff]
    %v1695 = vld [vmem:[%s5 + $0x90] sm:$0xff]
    %v1696 = vld [vmem:[%s5 + $0x98] sm:$0xff]
    %v1697 = vld [vmem:[%s5 + $0xa0] sm:$0xff]
    %v1698 = vld [vmem:[%s5 + $0xa8] sm:$0xff]
    %v1699 = vld [vmem:[%s5 + $0xb0] sm:$0xff]
    %v1700 = vld [vmem:[%s5 + $0xb8] sm:$0xff]
    %v1701 = vld [vmem:[%s5 + $0xc0] sm:$0xff]
    %v1702 = vld [vmem:[%s5 + $0xc8] sm:$0xff]
    %v1703 = vld [vmem:[%s5 + $0xd0] sm:$0xff]
    %v1704 = vld [vmem:[%s5 + $0xd8] sm:$0xff]
    %v1705 = vld [vmem:[%s5 + $0xe0] sm:$0xff]
    %v1706 = vld [vmem:[%s5 + $0xe8] sm:$0xff]
    %v1707 = vld [vmem:[%s5 + $0xf0] sm:$0xff]
    %v1708 = vld [vmem:[%s5 + $0xf8] sm:$0xff]
    %v1709 = vld [vmem:[%s6] sm:$0xf]
    %v1711 = vperm.slane %v1709, 0
    %v1712 = vperm.slane %v1709, 1
    %v1713 = vperm.slane %v1709, 2
    %v1714 = vperm.slane %v1709, 3
    %v1727 = vunpack.c.l.b16 %v1637
    %v1728 = vunpack.c.l.b16 %v1638
    %v1729 = vunpack.c.l.b16 %v1639
    %v1730 = vunpack.c.l.b16 %v1640
    %v1731 = vunpack.c.l.b16 %v1641
    %v1732 = vunpack.c.l.b16 %v1642
    %v1733 = vunpack.c.l.b16 %v1643
    %v1734 = vunpack.c.l.b16 %v1644
    %v1735 = vpack.c.b16 %v1728, %v1727
    %v1736 = vpack.c.b16 %v1730, %v1729
    %v1737 = vpack.c.b16 %v1732, %v1731
    %v1738 = vpack.c.b16 %v1734, %v1733
    %v1775 = vunpack.c.l.b16 %v1645
    %v1776 = vunpack.c.h.b16 %v1645
    %v1777 = vunpack.c.l.b16 %v1646
    %v1778 = vunpack.c.h.b16 %v1646
    %v1779 = vunpack.c.l.b16 %v1647
    %v1780 = vunpack.c.h.b16 %v1647
    %v1781 = vunpack.c.l.b16 %v1648
    %v1782 = vunpack.c.h.b16 %v1648
    %v1783 = vunpack.c.l.b16 %v1649
    %v1784 = vunpack.c.h.b16 %v1649
    %v1785 = vunpack.c.l.b16 %v1650
    %v1786 = vunpack.c.h.b16 %v1650
    %v1787 = vunpack.c.l.b16 %v1651
    %v1788 = vunpack.c.h.b16 %v1651
    %v1789 = vunpack.c.l.b16 %v1652
    %v1790 = vunpack.c.h.b16 %v1652
    %v1791 = vunpack.c.l.b16 %v1653
    %v1792 = vunpack.c.h.b16 %v1653
    %v1793 = vunpack.c.l.b16 %v1654
    %v1794 = vunpack.c.h.b16 %v1654
    %v1795 = vunpack.c.l.b16 %v1655
    %v1796 = vunpack.c.h.b16 %v1655
    %v1797 = vunpack.c.l.b16 %v1656
    %v1798 = vunpack.c.h.b16 %v1656
    %v1799 = vunpack.c.l.b16 %v1657
    %v1800 = vunpack.c.h.b16 %v1657
    %v1801 = vunpack.c.l.b16 %v1658
    %v1802 = vunpack.c.h.b16 %v1658
    %v1803 = vunpack.c.l.b16 %v1659
    %v1804 = vunpack.c.h.b16 %v1659
    %v1805 = vunpack.c.l.b16 %v1660
    %v1806 = vunpack.c.h.b16 %v1660
    %v1807 = vunpack.c.l.b16 %v1661
    %v1808 = vunpack.c.h.b16 %v1661
    %v1809 = vunpack.c.l.b16 %v1662
    %v1810 = vunpack.c.h.b16 %v1662
    %v1811 = vunpack.c.l.b16 %v1663
    %v1812 = vunpack.c.h.b16 %v1663
    %v1813 = vunpack.c.l.b16 %v1664
    %v1814 = vunpack.c.h.b16 %v1664
    %v1815 = vunpack.c.l.b16 %v1665
    %v1816 = vunpack.c.h.b16 %v1665
    %v1817 = vunpack.c.l.b16 %v1666
    %v1818 = vunpack.c.h.b16 %v1666
    %v1819 = vunpack.c.l.b16 %v1667
    %v1820 = vunpack.c.h.b16 %v1667
    %v1821 = vunpack.c.l.b16 %v1668
    %v1822 = vunpack.c.h.b16 %v1668
    %v1823 = vunpack.c.l.b16 %v1669
    %v1824 = vunpack.c.h.b16 %v1669
    %v1825 = vunpack.c.l.b16 %v1670
    %v1826 = vunpack.c.h.b16 %v1670
    %v1827 = vunpack.c.l.b16 %v1671
    %v1828 = vunpack.c.h.b16 %v1671
    %v1829 = vunpack.c.l.b16 %v1672
    %v1830 = vunpack.c.h.b16 %v1672
    %v1831 = vunpack.c.l.b16 %v1673
    %v1832 = vunpack.c.h.b16 %v1673
    %v1833 = vunpack.c.l.b16 %v1674
    %v1834 = vunpack.c.h.b16 %v1674
    %v1835 = vunpack.c.l.b16 %v1675
    %v1836 = vunpack.c.h.b16 %v1675
    %v1837 = vunpack.c.l.b16 %v1676
    %v1838 = vunpack.c.h.b16 %v1676
    %v1839 = vpack.c.b16 %v1779, %v1775
    %v1840 = vpack.c.b16 %v1780, %v1776
    %v1841 = vpack.c.b16 %v1781, %v1777
    %v1842 = vpack.c.b16 %v1782, %v1778
    %v1843 = vpack.c.b16 %v1787, %v1783
    %v1844 = vpack.c.b16 %v1788, %v1784
    %v1845 = vpack.c.b16 %v1789, %v1785
    %v1846 = vpack.c.b16 %v1790, %v1786
    %v1847 = vpack.c.b16 %v1795, %v1791
    %v1848 = vpack.c.b16 %v1796, %v1792
    %v1849 = vpack.c.b16 %v1797, %v1793
    %v1850 = vpack.c.b16 %v1798, %v1794
    %v1851 = vpack.c.b16 %v1803, %v1799
    %v1852 = vpack.c.b16 %v1804, %v1800
    %v1853 = vpack.c.b16 %v1805, %v1801
    %v1854 = vpack.c.b16 %v1806, %v1802
    %v1855 = vpack.c.b16 %v1811, %v1807
    %v1856 = vpack.c.b16 %v1812, %v1808
    %v1857 = vpack.c.b16 %v1813, %v1809
    %v1858 = vpack.c.b16 %v1814, %v1810
    %v1859 = vpack.c.b16 %v1819, %v1815
    %v1860 = vpack.c.b16 %v1820, %v1816
    %v1861 = vpack.c.b16 %v1821, %v1817
    %v1862 = vpack.c.b16 %v1822, %v1818
    %v1863 = vpack.c.b16 %v1827, %v1823
    %v1864 = vpack.c.b16 %v1828, %v1824
    %v1865 = vpack.c.b16 %v1829, %v1825
    %v1866 = vpack.c.b16 %v1830, %v1826
    %v1867 = vpack.c.b16 %v1835, %v1831
    %v1868 = vpack.c.b16 %v1836, %v1832
    %v1869 = vpack.c.b16 %v1837, %v1833
    %v1870 = vpack.c.b16 %v1838, %v1834
    %1903 = vmatpush.bf16.msra.mxu0 %v1867
    %1904 = vmatpush.bf16.msra.mxu0 %v1863
    %1905 = vmatpush.bf16.msra.mxu0 %v1859
    %1906 = vmatpush.bf16.msra.mxu0 %v1855
    %1907 = vmatpush.bf16.msra.mxu0 %v1851
    %1908 = vmatpush.bf16.msra.mxu0 %v1847
    %1909 = vmatpush.bf16.msra.mxu0 %v1843
    %1910 = vmatpush.bf16.msra.mxu0 %v1839
    %1911 = vmatmul.bf16.gmra.mxu0 %v1735
    %v1912 = vpop.f32.mrf.mxu0
    %v1913 = vadd.f32 %v1711, %v1912
    %v1914 = vpop.f32.mrf.mxu0
    %v1915 = vadd.f32 %v1711, %v1914
    %1916 = vmatmul.bf16.gmra.mxu0 %v1736
    %v1917 = vpop.f32.mrf.mxu0
    %v1918 = vadd.f32 %v1711, %v1917
    %v1919 = vpop.f32.mrf.mxu0
    %v1920 = vadd.f32 %v1711, %v1919
    %1921 = vmatmul.bf16.gmra.mxu0 %v1737
    %v1922 = vpop.f32.mrf.mxu0
    %v1923 = vadd.f32 %v1711, %v1922
    %v1924 = vpop.f32.mrf.mxu0
    %v1925 = vadd.f32 %v1711, %v1924
    %1926 = vmatmul.bf16.gmra.mxu0 %v1738
    %v1927 = vpop.f32.mrf.mxu0
    %v1928 = vadd.f32 %v1711, %v1927
    %v1929 = vpop.f32.mrf.mxu0
    %v1930 = vadd.f32 %v1711, %v1929
    %1931 = vdwg.mxu0
    %1932 = vmatpush.bf16.msra.mxu0 %v1868
    %1933 = vmatpush.bf16.msra.mxu0 %v1864
    %1934 = vmatpush.bf16.msra.mxu0 %v1860
    %1935 = vmatpush.bf16.msra.mxu0 %v1856
    %1936 = vmatpush.bf16.msra.mxu0 %v1852
    %1937 = vmatpush.bf16.msra.mxu0 %v1848
    %1938 = vmatpush.bf16.msra.mxu0 %v1844
    %1939 = vmatpush.bf16.msra.mxu0 %v1840
    %1940 = vmatmul.bf16.gmra.mxu0 %v1735
    %v1941 = vpop.f32.mrf.mxu0
    %v1942 = vadd.f32 %v1712, %v1941
    %v1943 = vpop.f32.mrf.mxu0
    %v1944 = vadd.f32 %v1712, %v1943
    %1945 = vmatmul.bf16.gmra.mxu0 %v1736
    %v1946 = vpop.f32.mrf.mxu0
    %v1947 = vadd.f32 %v1712, %v1946
    %v1948 = vpop.f32.mrf.mxu0
    %v1949 = vadd.f32 %v1712, %v1948
    %1950 = vmatmul.bf16.gmra.mxu0 %v1737
    %v1951 = vpop.f32.mrf.mxu0
    %v1952 = vadd.f32 %v1712, %v1951
    %v1953 = vpop.f32.mrf.mxu0
    %v1954 = vadd.f32 %v1712, %v1953
    %1955 = vmatmul.bf16.gmra.mxu0 %v1738
    %v1956 = vpop.f32.mrf.mxu0
    %v1957 = vadd.f32 %v1712, %v1956
    %v1958 = vpop.f32.mrf.mxu0
    %v1959 = vadd.f32 %v1712, %v1958
    %1960 = vdwg.mxu0
    %1961 = vmatpush.bf16.msra.mxu0 %v1869
    %1962 = vmatpush.bf16.msra.mxu0 %v1865
    %1963 = vmatpush.bf16.msra.mxu0 %v1861
    %1964 = vmatpush.bf16.msra.mxu0 %v1857
    %1965 = vmatpush.bf16.msra.mxu0 %v1853
    %1966 = vmatpush.bf16.msra.mxu0 %v1849
    %1967 = vmatpush.bf16.msra.mxu0 %v1845
    %1968 = vmatpush.bf16.msra.mxu0 %v1841
    %1969 = vmatmul.bf16.gmra.mxu0 %v1735
    %v1970 = vpop.f32.mrf.mxu0
    %v1971 = vadd.f32 %v1713, %v1970
    %v1972 = vpop.f32.mrf.mxu0
    %v1973 = vadd.f32 %v1713, %v1972
    %1974 = vmatmul.bf16.gmra.mxu0 %v1736
    %v1975 = vpop.f32.mrf.mxu0
    %v1976 = vadd.f32 %v1713, %v1975
    %v1977 = vpop.f32.mrf.mxu0
    %v1978 = vadd.f32 %v1713, %v1977
    %1979 = vmatmul.bf16.gmra.mxu0 %v1737
    %v1980 = vpop.f32.mrf.mxu0
    %v1981 = vadd.f32 %v1713, %v1980
    %v1982 = vpop.f32.mrf.mxu0
    %v1983 = vadd.f32 %v1713, %v1982
    %1984 = vmatmul.bf16.gmra.mxu0 %v1738
    %v1985 = vpop.f32.mrf.mxu0
    %v1986 = vadd.f32 %v1713, %v1985
    %v1987 = vpop.f32.mrf.mxu0
    %v1988 = vadd.f32 %v1713, %v1987
    %1989 = vdwg.mxu0
    %1990 = vmatpush.bf16.msra.mxu0 %v1870
    %1991 = vmatpush.bf16.msra.mxu0 %v1866
    %1992 = vmatpush.bf16.msra.mxu0 %v1862
    %1993 = vmatpush.bf16.msra.mxu0 %v1858
    %1994 = vmatpush.bf16.msra.mxu0 %v1854
    %1995 = vmatpush.bf16.msra.mxu0 %v1850
    %1996 = vmatpush.bf16.msra.mxu0 %v1846
    %1997 = vmatpush.bf16.msra.mxu0 %v1842
    %1998 = vmatmul.bf16.gmra.mxu0 %v1735
    %v1999 = vpop.f32.mrf.mxu0
    %v2000 = vadd.f32 %v1714, %v1999
    %v2001 = vpop.f32.mrf.mxu0
    %v2002 = vadd.f32 %v1714, %v2001
    %2003 = vmatmul.bf16.gmra.mxu0 %v1736
    %v2004 = vpop.f32.mrf.mxu0
    %v2005 = vadd.f32 %v1714, %v2004
    %v2006 = vpop.f32.mrf.mxu0
    %v2007 = vadd.f32 %v1714, %v2006
    %2008 = vmatmul.bf16.gmra.mxu0 %v1737
    %v2009 = vpop.f32.mrf.mxu0
    %v2010 = vadd.f32 %v1714, %v2009
    %v2011 = vpop.f32.mrf.mxu0
    %v2012 = vadd.f32 %v1714, %v2011
    %2013 = vmatmul.bf16.gmra.mxu0 %v1738
    %v2014 = vpop.f32.mrf.mxu0
    %v2015 = vadd.f32 %v1714, %v2014
    %v2016 = vpop.f32.mrf.mxu0
    %v2017 = vadd.f32 %v1714, %v2016
    %2018 = vdwg.mxu0
    %2019 = vst [vmem:[#allocation2] sm:$0xff] %v1913
    %2020 = vst [vmem:[#allocation2 + $0x8] sm:$0xff] %v1942
    %2021 = vst [vmem:[#allocation2 + $0x10] sm:$0xff] %v1971
    %2022 = vst [vmem:[#allocation2 + $0x18] sm:$0xff] %v2000
    %2023 = vst [vmem:[#allocation2 + $0x20] sm:$0xff] %v1915
    %2024 = vst [vmem:[#allocation2 + $0x28] sm:$0xff] %v1944
    %2025 = vst [vmem:[#allocation2 + $0x30] sm:$0xff] %v1973
    %2026 = vst [vmem:[#allocation2 + $0x38] sm:$0xff] %v2002
    %2027 = vst [vmem:[#allocation2 + $0x40] sm:$0xff] %v1918
    %2028 = vst [vmem:[#allocation2 + $0x48] sm:$0xff] %v1947
    %2029 = vst [vmem:[#allocation2 + $0x50] sm:$0xff] %v1976
    %2030 = vst [vmem:[#allocation2 + $0x58] sm:$0xff] %v2005
    %2031 = vst [vmem:[#allocation2 + $0x60] sm:$0xff] %v1920
    %2032 = vst [vmem:[#allocation2 + $0x68] sm:$0xff] %v1949
    %2033 = vst [vmem:[#allocation2 + $0x70] sm:$0xff] %v1978
    %2034 = vst [vmem:[#allocation2 + $0x78] sm:$0xff] %v2007
    %2035 = vst [vmem:[#allocation2 + $0x80] sm:$0xff] %v1923
    %2036 = vst [vmem:[#allocation2 + $0x88] sm:$0xff] %v1952
    %2037 = vst [vmem:[#allocation2 + $0x90] sm:$0xff] %v1981
    %2038 = vst [vmem:[#allocation2 + $0x98] sm:$0xff] %v2010
    %2039 = vst [vmem:[#allocation2 + $0xa0] sm:$0xff] %v1925
    %2040 = vst [vmem:[#allocation2 + $0xa8] sm:$0xff] %v1954
    %2041 = vst [vmem:[#allocation2 + $0xb0] sm:$0xff] %v1983
    %2042 = vst [vmem:[#allocation2 + $0xb8] sm:$0xff] %v2012
    %2043 = vst [vmem:[#allocation2 + $0xc0] sm:$0xff] %v1928
    %2044 = vst [vmem:[#allocation2 + $0xc8] sm:$0xff] %v1957
    %2045 = vst [vmem:[#allocation2 + $0xd0] sm:$0xff] %v1986
    %2046 = vst [vmem:[#allocation2 + $0xd8] sm:$0xff] %v2015
    %2047 = vst [vmem:[#allocation2 + $0xe0] sm:$0xff] %v1930
    %2048 = vst [vmem:[#allocation2 + $0xe8] sm:$0xff] %v1959
    %2049 = vst [vmem:[#allocation2 + $0xf0] sm:$0xff] %v1988
    %2050 = vst [vmem:[#allocation2 + $0xf8] sm:$0xff] %v2017
    %v2051 = vld [vmem:[#allocation2] sm:$0xff]
    %v2052 = vld [vmem:[#allocation2 + $0x8] sm:$0xff]
    %v2053 = vld [vmem:[#allocation2 + $0x10] sm:$0xff]
    %v2054 = vld [vmem:[#allocation2 + $0x18] sm:$0xff]
    %v2087 = vunpack.c.l.b16 %v1677
    %v2088 = vunpack.c.h.b16 %v1677
    %v2089 = vunpack.c.l.b16 %v1678
    %v2090 = vunpack.c.h.b16 %v1678
    %v2091 = vunpack.c.l.b16 %v1679
    %v2092 = vunpack.c.h.b16 %v1679
    %v2093 = vunpack.c.l.b16 %v1680
    %v2094 = vunpack.c.h.b16 %v1680
    %v2095 = vunpack.c.l.b16 %v1681
    %v2096 = vunpack.c.h.b16 %v1681
    %v2097 = vunpack.c.l.b16 %v1682
    %v2098 = vunpack.c.h.b16 %v1682
    %v2099 = vunpack.c.l.b16 %v1683
    %v2100 = vunpack.c.h.b16 %v1683
    %v2101 = vunpack.c.l.b16 %v1684
    %v2102 = vunpack.c.h.b16 %v1684
    %v2103 = vunpack.c.l.b16 %v1685
    %v2104 = vunpack.c.h.b16 %v1685
    %v2105 = vunpack.c.l.b16 %v1686
    %v2106 = vunpack.c.h.b16 %v1686
    %v2107 = vunpack.c.l.b16 %v1687
    %v2108 = vunpack.c.h.b16 %v1687
    %v2109 = vunpack.c.l.b16 %v1688
    %v2110 = vunpack.c.h.b16 %v1688
    %v2111 = vunpack.c.l.b16 %v1689
    %v2112 = vunpack.c.h.b16 %v1689
    %v2113 = vunpack.c.l.b16 %v1690
    %v2114 = vunpack.c.h.b16 %v1690
    %v2115 = vunpack.c.l.b16 %v1691
    %v2116 = vunpack.c.h.b16 %v1691
    %v2117 = vunpack.c.l.b16 %v1692
    %v2118 = vunpack.c.h.b16 %v1692
    %v2119 = vunpack.c.l.b16 %v1693
    %v2120 = vunpack.c.h.b16 %v1693
    %v2121 = vunpack.c.l.b16 %v1694
    %v2122 = vunpack.c.h.b16 %v1694
    %v2123 = vunpack.c.l.b16 %v1695
    %v2124 = vunpack.c.h.b16 %v1695
    %v2125 = vunpack.c.l.b16 %v1696
    %v2126 = vunpack.c.h.b16 %v1696
    %v2127 = vunpack.c.l.b16 %v1697
    %v2128 = vunpack.c.h.b16 %v1697
    %v2129 = vunpack.c.l.b16 %v1698
    %v2130 = vunpack.c.h.b16 %v1698
    %v2131 = vunpack.c.l.b16 %v1699
    %v2132 = vunpack.c.h.b16 %v1699
    %v2133 = vunpack.c.l.b16 %v1700
    %v2134 = vunpack.c.h.b16 %v1700
    %v2135 = vunpack.c.l.b16 %v1701
    %v2136 = vunpack.c.h.b16 %v1701
    %v2137 = vunpack.c.l.b16 %v1702
    %v2138 = vunpack.c.h.b16 %v1702
    %v2139 = vunpack.c.l.b16 %v1703
    %v2140 = vunpack.c.h.b16 %v1703
    %v2141 = vunpack.c.l.b16 %v1704
    %v2142 = vunpack.c.h.b16 %v1704
    %v2143 = vunpack.c.l.b16 %v1705
    %v2144 = vunpack.c.h.b16 %v1705
    %v2145 = vunpack.c.l.b16 %v1706
    %v2146 = vunpack.c.h.b16 %v1706
    %v2147 = vunpack.c.l.b16 %v1707
    %v2148 = vunpack.c.h.b16 %v1707
    %v2149 = vunpack.c.l.b16 %v1708
    %v2150 = vunpack.c.h.b16 %v1708
    %v2151 = vpack.c.b16 %v2091, %v2087
    %v2152 = vpack.c.b16 %v2092, %v2088
    %v2153 = vpack.c.b16 %v2093, %v2089
    %v2154 = vpack.c.b16 %v2094, %v2090
    %v2155 = vpack.c.b16 %v2099, %v2095
    %v2156 = vpack.c.b16 %v2100, %v2096
    %v2157 = vpack.c.b16 %v2101, %v2097
    %v2158 = vpack.c.b16 %v2102, %v2098
    %v2159 = vpack.c.b16 %v2107, %v2103
    %v2160 = vpack.c.b16 %v2108, %v2104
    %v2161 = vpack.c.b16 %v2109, %v2105
    %v2162 = vpack.c.b16 %v2110, %v2106
    %v2163 = vpack.c.b16 %v2115, %v2111
    %v2164 = vpack.c.b16 %v2116, %v2112
    %v2165 = vpack.c.b16 %v2117, %v2113
    %v2166 = vpack.c.b16 %v2118, %v2114
    %v2167 = vpack.c.b16 %v2123, %v2119
    %v2168 = vpack.c.b16 %v2124, %v2120
    %v2169 = vpack.c.b16 %v2125, %v2121
    %v2170 = vpack.c.b16 %v2126, %v2122
    %v2171 = vpack.c.b16 %v2131, %v2127
    %v2172 = vpack.c.b16 %v2132, %v2128
    %v2173 = vpack.c.b16 %v2133, %v2129
    %v2174 = vpack.c.b16 %v2134, %v2130
    %v2175 = vpack.c.b16 %v2139, %v2135
    %v2176 = vpack.c.b16 %v2140, %v2136
    %v2177 = vpack.c.b16 %v2141, %v2137
    %v2178 = vpack.c.b16 %v2142, %v2138
    %v2179 = vpack.c.b16 %v2147, %v2143
    %v2180 = vpack.c.b16 %v2148, %v2144
    %v2181 = vpack.c.b16 %v2149, %v2145
    %v2182 = vpack.c.b16 %v2150, %v2146
    %2215 = vmatpush.bf16.msra.mxu0 %v2179
    %2216 = vmatpush.bf16.msra.mxu0 %v2175
    %2217 = vmatpush.bf16.msra.mxu0 %v2171
    %2218 = vmatpush.bf16.msra.mxu0 %v2167
    %2219 = vmatpush.bf16.msra.mxu0 %v2163
    %2220 = vmatpush.bf16.msra.mxu0 %v2159
    %2221 = vmatpush.bf16.msra.mxu0 %v2155
    %2222 = vmatpush.bf16.msra.mxu0 %v2151
    %2223 = vmatmul.bf16.gmra.mxu0 0
    %v2224 = vpop.f32.mrf.mxu0
    %v2225 = vadd.f32 0.0, %v2224
    %v2226 = vpop.f32.mrf.mxu0
    %2227 = vdwg.mxu0
    %2228 = vmatpush.bf16.msra.mxu0 %v2180
    %2229 = vmatpush.bf16.msra.mxu0 %v2176
    %2230 = vmatpush.bf16.msra.mxu0 %v2172
    %2231 = vmatpush.bf16.msra.mxu0 %v2168
    %2232 = vmatpush.bf16.msra.mxu0 %v2164
    %2233 = vmatpush.bf16.msra.mxu0 %v2160
    %2234 = vmatpush.bf16.msra.mxu0 %v2156
    %2235 = vmatpush.bf16.msra.mxu0 %v2152
    %2236 = vmatmul.bf16.gmra.mxu0 0
    %v2237 = vpop.f32.mrf.mxu0
    %v2238 = vadd.f32 0.0, %v2237
    %v2239 = vpop.f32.mrf.mxu0
    %2240 = vdwg.mxu0
    %2241 = vmatpush.bf16.msra.mxu0 %v2181
    %2242 = vmatpush.bf16.msra.mxu0 %v2177
    %2243 = vmatpush.bf16.msra.mxu0 %v2173
    %2244 = vmatpush.bf16.msra.mxu0 %v2169
    %2245 = vmatpush.bf16.msra.mxu0 %v2165
    %2246 = vmatpush.bf16.msra.mxu0 %v2161
    %2247 = vmatpush.bf16.msra.mxu0 %v2157
    %2248 = vmatpush.bf16.msra.mxu0 %v2153
    %2249 = vmatmul.bf16.gmra.mxu0 0
    %v2250 = vpop.f32.mrf.mxu0
    %v2251 = vadd.f32 0.0, %v2250
    %v2252 = vpop.f32.mrf.mxu0
    %2253 = vdwg.mxu0
    %2254 = vmatpush.bf16.msra.mxu0 %v2182
    %2255 = vmatpush.bf16.msra.mxu0 %v2178
    %2256 = vmatpush.bf16.msra.mxu0 %v2174
    %2257 = vmatpush.bf16.msra.mxu0 %v2170
    %2258 = vmatpush.bf16.msra.mxu0 %v2166
    %2259 = vmatpush.bf16.msra.mxu0 %v2162
    %2260 = vmatpush.bf16.msra.mxu0 %v2158
    %2261 = vmatpush.bf16.msra.mxu0 %v2154
    %2262 = vmatmul.bf16.gmra.mxu0 0
    %v2263 = vpop.f32.mrf.mxu0
    %v2264 = vadd.f32 0.0, %v2263
    %v2265 = vpop.f32.mrf.mxu0
    %2266 = vdwg.mxu0
    %v2267 = vadd.f32 %v2051, %v2225
    %v2268 = vadd.f32 %v2052, %v2238
    %v2269 = vadd.f32 %v2053, %v2251
    %v2270 = vadd.f32 %v2054, %v2264
    %v2271 = vxor.u32 %v2267, 2147483648
    %v2272 = vxor.u32 %v2268, 2147483648
    %v2273 = vxor.u32 %v2269, 2147483648
    %v2274 = vmul.f32 %v2271, 1.442695
    %v2275 = vpow.pop %v2274
    %v2276 = vmul.f32 %v2272, 1.442695
    %v2277 = vpow.pop %v2276
    %v2278 = vmul.f32 %v2273, 1.442695
    %v2279 = vpow.pop %v2278
    %v2280 = vadd.f32 %v2275, 1.0
    %v2281 = vadd.f32 %v2277, 1.0
    %v2282 = vadd.f32 %v2279, 1.0
    %v2283 = vrcp.pop %v2280
    %v2284 = vmul.f32 %v2280, %v2283
    %v2285 = vsub.f32 1.0, %v2284
    %v2286 = vmul.f32 %v2283, %v2285
    %v2287 = vadd.f32 %v2283, %v2286
    %vm2288 = vweird.f32 %v2280
    %vm2289 = vweird.f32 %v2283
    %vm2290 = vmor %vm2288, %vm2289
    %v2291 = vsel %vm2290, %v2283, %v2287
    %v2292 = vand.u32 2147483647, %v2280
    %vm2293 = vcmp.eq.f32.partialorder %v2292, 8.507059e+37
    %v2294 = vand.u32 %v2280, 2147483648
    %v2295 = vor.u32 1.1754944e-38, %v2294
    %v2296 = vsel %vm2293, %v2295, %v2291
    %v2297 = vmul.f32 1.0, %v2296
    %v2298 = vrcp.pop %v2281
    %v2299 = vmul.f32 %v2281, %v2298
    %v2300 = vsub.f32 1.0, %v2299
    %v2301 = vmul.f32 %v2298, %v2300
    %v2302 = vadd.f32 %v2298, %v2301
    %vm2303 = vweird.f32 %v2281
    %vm2304 = vweird.f32 %v2298
    %vm2305 = vmor %vm2303, %vm2304
    %v2306 = vsel %vm2305, %v2298, %v2302
    %v2307 = vand.u32 2147483647, %v2281
    %vm2308 = vcmp.eq.f32.partialorder %v2307, 8.507059e+37
    %v2309 = vand.u32 %v2281, 2147483648
    %v2310 = vor.u32 1.1754944e-38, %v2309
    %v2311 = vsel %vm2308, %v2310, %v2306
    %v2312 = vmul.f32 1.0, %v2311
    %v2313 = vrcp.pop %v2282
    %v2314 = vmul.f32 %v2282, %v2313
    %v2315 = vsub.f32 1.0, %v2314
    %v2316 = vmul.f32 %v2313, %v2315
    %v2317 = vadd.f32 %v2313, %v2316
    %vm2318 = vweird.f32 %v2282
    %vm2319 = vweird.f32 %v2313
    %vm2320 = vmor %vm2318, %vm2319
    %v2321 = vsel %vm2320, %v2313, %v2317
    %v2322 = vand.u32 2147483647, %v2282
    %vm2323 = vcmp.eq.f32.partialorder %v2322, 8.507059e+37
    %v2324 = vand.u32 %v2282, 2147483648
    %v2325 = vor.u32 1.1754944e-38, %v2324
    %v2326 = vsel %vm2323, %v2325, %v2321
    %v2327 = vmul.f32 1.0, %v2326
    %v2328 = vtanh.pop %v2270
    %v2329 = vmul.f32 %v2312, 0.0
    %v2330 = vmul.f32 %v2297, %v2328
    %v2331 = vadd.f32 %v2329, %v2330
    %v2332 = vtanh.pop %v2331
    %v2333 = vmul.f32 %v2327, %v2332
    %v2334 = vld [vmem:[%s748] sm:$0xff]
    %v2335 = vld [vmem:[%s748 + $0x8] sm:$0xff]
    %v2336 = vld [vmem:[%s748 + $0x10] sm:$0xff]
    %v2337 = vld [vmem:[%s748 + $0x18] sm:$0xff]
    %v2338 = vpack.c.bf16 %v2333, %v2333
    %2339 = vmatpush.bf16.msra.mxu0 %v2179
    %2340 = vmatpush.bf16.msra.mxu0 %v2175
    %2341 = vmatpush.bf16.msra.mxu0 %v2171
    %2342 = vmatpush.bf16.msra.mxu0 %v2167
    %2343 = vmatpush.bf16.msra.mxu0 %v2163
    %2344 = vmatpush.bf16.msra.mxu0 %v2159
    %2345 = vmatpush.bf16.msra.mxu0 %v2155
    %2346 = vmatpush.bf16.msra.mxu0 %v2151
    %2347 = vmatmul.bf16.gmra.mxu0 %v2338
    %v2348 = vpop.f32.mrf.mxu0
    %v2349 = vadd.f32 0.0, %v2348
    %v2350 = vpop.f32.mrf.mxu0
    %2351 = vdwg.mxu0
    %2352 = vmatpush.bf16.msra.mxu0 %v2180
    %2353 = vmatpush.bf16.msra.mxu0 %v2176
    %2354 = vmatpush.bf16.msra.mxu0 %v2172
    %2355 = vmatpush.bf16.msra.mxu0 %v2168
    %2356 = vmatpush.bf16.msra.mxu0 %v2164
    %2357 = vmatpush.bf16.msra.mxu0 %v2160
    %2358 = vmatpush.bf16.msra.mxu0 %v2156
    %2359 = vmatpush.bf16.msra.mxu0 %v2152
    %2360 = vmatmul.bf16.gmra.mxu0 %v2338
    %v2361 = vpop.f32.mrf.mxu0
    %v2362 = vadd.f32 0.0, %v2361
    %v2363 = vpop.f32.mrf.mxu0
    %2364 = vdwg.mxu0
    %2365 = vmatpush.bf16.msra.mxu0 %v2181
    %2366 = vmatpush.bf16.msra.mxu0 %v2177
    %2367 = vmatpush.bf16.msra.mxu0 %v2173
    %2368 = vmatpush.bf16.msra.mxu0 %v2169
    %2369 = vmatpush.bf16.msra.mxu0 %v2165
    %2370 = vmatpush.bf16.msra.mxu0 %v2161
    %2371 = vmatpush.bf16.msra.mxu0 %v2157
    %2372 = vmatpush.bf16.msra.mxu0 %v2153
    %2373 = vmatmul.bf16.gmra.mxu0 %v2338
    %v2374 = vpop.f32.mrf.mxu0
    %v2375 = vadd.f32 0.0, %v2374
    %v2376 = vpop.f32.mrf.mxu0
    %2377 = vdwg.mxu0
    %2378 = vmatpush.bf16.msra.mxu0 %v2182
    %2379 = vmatpush.bf16.msra.mxu0 %v2178
    %2380 = vmatpush.bf16.msra.mxu0 %v2174
    %2381 = vmatpush.bf16.msra.mxu0 %v2170
    %2382 = vmatpush.bf16.msra.mxu0 %v2166
    %2383 = vmatpush.bf16.msra.mxu0 %v2162
    %2384 = vmatpush.bf16.msra.mxu0 %v2158
    %2385 = vmatpush.bf16.msra.mxu0 %v2154
    %2386 = vmatmul.bf16.gmra.mxu0 %v2338
    %v2387 = vpop.f32.mrf.mxu0
    %v2388 = vadd.f32 0.0, %v2387
    %v2389 = vpop.f32.mrf.mxu0
    %2390 = vdwg.mxu0
    %v2391 = vadd.f32 %v2334, %v2349
    %v2392 = vadd.f32 %v2335, %v2362
    %v2393 = vadd.f32 %v2336, %v2375
    %v2394 = vadd.f32 %v2337, %v2388
    %v2395 = vxor.u32 %v2391, 2147483648
    %v2396 = vxor.u32 %v2392, 2147483648
    %v2397 = vxor.u32 %v2393, 2147483648
    %v2398 = vmul.f32 %v2395, 1.442695
    %v2399 = vpow.pop %v2398
    %v2400 = vmul.f32 %v2396, 1.442695
    %v2401 = vpow.pop %v2400
    %v2402 = vmul.f32 %v2397, 1.442695
    %v2403 = vpow.pop %v2402
    %v2404 = vadd.f32 %v2399, 1.0
    %v2405 = vadd.f32 %v2401, 1.0
    %v2406 = vadd.f32 %v2403, 1.0
    %v2407 = vrcp.pop %v2404
    %v2408 = vmul.f32 %v2404, %v2407
    %v2409 = vsub.f32 1.0, %v2408
    %v2410 = vmul.f32 %v2407, %v2409
    %v2411 = vadd.f32 %v2407, %v2410
    %vm2412 = vweird.f32 %v2404
    %vm2413 = vweird.f32 %v2407
    %vm2414 = vmor %vm2412, %vm2413
    %v2415 = vsel %vm2414, %v2407, %v2411
    %v2416 = vand.u32 2147483647, %v2404
    %vm2417 = vcmp.eq.f32.partialorder %v2416, 8.507059e+37
    %v2418 = vand.u32 %v2404, 2147483648
    %v2419 = vor.u32 1.1754944e-38, %v2418
    %v2420 = vsel %vm2417, %v2419, %v2415
    %v2421 = vmul.f32 1.0, %v2420
    %v2422 = vrcp.pop %v2405
    %v2423 = vmul.f32 %v2405, %v2422
    %v2424 = vsub.f32 1.0, %v2423
    %v2425 = vmul.f32 %v2422, %v2424
    %v2426 = vadd.f32 %v2422, %v2425
    %vm2427 = vweird.f32 %v2405
    %vm2428 = vweird.f32 %v2422
    %vm2429 = vmor %vm2427, %vm2428
    %v2430 = vsel %vm2429, %v2422, %v2426
    %v2431 = vand.u32 2147483647, %v2405
    %vm2432 = vcmp.eq.f32.partialorder %v2431, 8.507059e+37
    %v2433 = vand.u32 %v2405, 2147483648
    %v2434 = vor.u32 1.1754944e-38, %v2433
    %v2435 = vsel %vm2432, %v2434, %v2430
    %v2436 = vmul.f32 1.0, %v2435
    %v2437 = vrcp.pop %v2406
    %v2438 = vmul.f32 %v2406, %v2437
    %v2439 = vsub.f32 1.0, %v2438
    %v2440 = vmul.f32 %v2437, %v2439
    %v2441 = vadd.f32 %v2437, %v2440
    %vm2442 = vweird.f32 %v2406
    %vm2443 = vweird.f32 %v2437
    %vm2444 = vmor %vm2442, %vm2443
    %v2445 = vsel %vm2444, %v2437, %v2441
    %v2446 = vand.u32 2147483647, %v2406
    %vm2447 = vcmp.eq.f32.partialorder %v2446, 8.507059e+37
    %v2448 = vand.u32 %v2406, 2147483648
    %v2449 = vor.u32 1.1754944e-38, %v2448
    %v2450 = vsel %vm2447, %v2449, %v2445
    %v2451 = vmul.f32 1.0, %v2450
    %v2452 = vtanh.pop %v2394
    %v2453 = vmul.f32 %v2436, %v2331
    %v2454 = vmul.f32 %v2421, %v2452
    %v2455 = vadd.f32 %v2453, %v2454
    %v2456 = vtanh.pop %v2455
    %v2457 = vmul.f32 %v2451, %v2456
    %v2458 = vld [vmem:[%s875] sm:$0xff]
    %v2459 = vld [vmem:[%s875 + $0x8] sm:$0xff]
    %v2460 = vld [vmem:[%s875 + $0x10] sm:$0xff]
    %v2461 = vld [vmem:[%s875 + $0x18] sm:$0xff]
    %v2462 = vpack.c.bf16 %v2457, %v2457
    %2463 = vmatpush.bf16.msra.mxu0 %v2179
    %2464 = vmatpush.bf16.msra.mxu0 %v2175
    %2465 = vmatpush.bf16.msra.mxu0 %v2171
    %2466 = vmatpush.bf16.msra.mxu0 %v2167
    %2467 = vmatpush.bf16.msra.mxu0 %v2163
    %2468 = vmatpush.bf16.msra.mxu0 %v2159
    %2469 = vmatpush.bf16.msra.mxu0 %v2155
    %2470 = vmatpush.bf16.msra.mxu0 %v2151
    %2471 = vmatmul.bf16.gmra.mxu0 %v2462
    %v2472 = vpop.f32.mrf.mxu0
    %v2473 = vadd.f32 0.0, %v2472
    %v2474 = vpop.f32.mrf.mxu0
    %2475 = vdwg.mxu0
    %2476 = vmatpush.bf16.msra.mxu0 %v2180
    %2477 = vmatpush.bf16.msra.mxu0 %v2176
    %2478 = vmatpush.bf16.msra.mxu0 %v2172
    %2479 = vmatpush.bf16.msra.mxu0 %v2168
    %2480 = vmatpush.bf16.msra.mxu0 %v2164
    %2481 = vmatpush.bf16.msra.mxu0 %v2160
    %2482 = vmatpush.bf16.msra.mxu0 %v2156
    %2483 = vmatpush.bf16.msra.mxu0 %v2152
    %2484 = vmatmul.bf16.gmra.mxu0 %v2462
    %v2485 = vpop.f32.mrf.mxu0
    %v2486 = vadd.f32 0.0, %v2485
    %v2487 = vpop.f32.mrf.mxu0
    %2488 = vdwg.mxu0
    %2489 = vmatpush.bf16.msra.mxu0 %v2181
    %2490 = vmatpush.bf16.msra.mxu0 %v2177
    %2491 = vmatpush.bf16.msra.mxu0 %v2173
    %2492 = vmatpush.bf16.msra.mxu0 %v2169
    %2493 = vmatpush.bf16.msra.mxu0 %v2165
    %2494 = vmatpush.bf16.msra.mxu0 %v2161
    %2495 = vmatpush.bf16.msra.mxu0 %v2157
    %2496 = vmatpush.bf16.msra.mxu0 %v2153
    %2497 = vmatmul.bf16.gmra.mxu0 %v2462
    %v2498 = vpop.f32.mrf.mxu0
    %v2499 = vadd.f32 0.0, %v2498
    %v2500 = vpop.f32.mrf.mxu0
    %2501 = vdwg.mxu0
    %2502 = vmatpush.bf16.msra.mxu0 %v2182
    %2503 = vmatpush.bf16.msra.mxu0 %v2178
    %2504 = vmatpush.bf16.msra.mxu0 %v2174
    %2505 = vmatpush.bf16.msra.mxu0 %v2170
    %2506 = vmatpush.bf16.msra.mxu0 %v2166
    %2507 = vmatpush.bf16.msra.mxu0 %v2162
    %2508 = vmatpush.bf16.msra.mxu0 %v2158
    %2509 = vmatpush.bf16.msra.mxu0 %v2154
    %2510 = vmatmul.bf16.gmra.mxu0 %v2462
    %v2511 = vpop.f32.mrf.mxu0
    %v2512 = vadd.f32 0.0, %v2511
    %v2513 = vpop.f32.mrf.mxu0
    %2514 = vdwg.mxu0
    %v2515 = vadd.f32 %v2458, %v2473
    %v2516 = vadd.f32 %v2459, %v2486
    %v2517 = vadd.f32 %v2460, %v2499
    %v2518 = vadd.f32 %v2461, %v2512
    %v2519 = vxor.u32 %v2515, 2147483648
    %v2520 = vxor.u32 %v2516, 2147483648
    %v2521 = vxor.u32 %v2517, 2147483648
    %v2522 = vmul.f32 %v2519, 1.442695
    %v2523 = vpow.pop %v2522
    %v2524 = vmul.f32 %v2520, 1.442695
    %v2525 = vpow.pop %v2524
    %v2526 = vmul.f32 %v2521, 1.442695
    %v2527 = vpow.pop %v2526
    %v2528 = vadd.f32 %v2523, 1.0
    %v2529 = vadd.f32 %v2525, 1.0
    %v2530 = vadd.f32 %v2527, 1.0
    %v2531 = vrcp.pop %v2528
    %v2532 = vmul.f32 %v2528, %v2531
    %v2533 = vsub.f32 1.0, %v2532
    %v2534 = vmul.f32 %v2531, %v2533
    %v2535 = vadd.f32 %v2531, %v2534
    %vm2536 = vweird.f32 %v2528
    %vm2537 = vweird.f32 %v2531
    %vm2538 = vmor %vm2536, %vm2537
    %v2539 = vsel %vm2538, %v2531, %v2535
    %v2540 = vand.u32 2147483647, %v2528
    %vm2541 = vcmp.eq.f32.partialorder %v2540, 8.507059e+37
    %v2542 = vand.u32 %v2528, 2147483648
    %v2543 = vor.u32 1.1754944e-38, %v2542
    %v2544 = vsel %vm2541, %v2543, %v2539
    %v2545 = vmul.f32 1.0, %v2544
    %v2546 = vrcp.pop %v2529
    %v2547 = vmul.f32 %v2529, %v2546
    %v2548 = vsub.f32 1.0, %v2547
    %v2549 = vmul.f32 %v2546, %v2548
    %v2550 = vadd.f32 %v2546, %v2549
    %vm2551 = vweird.f32 %v2529
    %vm2552 = vweird.f32 %v2546
    %vm2553 = vmor %vm2551, %vm2552
    %v2554 = vsel %vm2553, %v2546, %v2550
    %v2555 = vand.u32 2147483647, %v2529
    %vm2556 = vcmp.eq.f32.partialorder %v2555, 8.507059e+37
    %v2557 = vand.u32 %v2529, 2147483648
    %v2558 = vor.u32 1.1754944e-38, %v2557
    %v2559 = vsel %vm2556, %v2558, %v2554
    %v2560 = vmul.f32 1.0, %v2559
    %v2561 = vrcp.pop %v2530
    %v2562 = vmul.f32 %v2530, %v2561
    %v2563 = vsub.f32 1.0, %v2562
    %v2564 = vmul.f32 %v2561, %v2563
    %v2565 = vadd.f32 %v2561, %v2564
    %vm2566 = vweird.f32 %v2530
    %vm2567 = vweird.f32 %v2561
    %vm2568 = vmor %vm2566, %vm2567
    %v2569 = vsel %vm2568, %v2561, %v2565
    %v2570 = vand.u32 2147483647, %v2530
    %vm2571 = vcmp.eq.f32.partialorder %v2570, 8.507059e+37
    %v2572 = vand.u32 %v2530, 2147483648
    %v2573 = vor.u32 1.1754944e-38, %v2572
    %v2574 = vsel %vm2571, %v2573, %v2569
    %v2575 = vmul.f32 1.0, %v2574
    %v2576 = vtanh.pop %v2518
    %v2577 = vmul.f32 %v2560, %v2455
    %v2578 = vmul.f32 %v2545, %v2576
    %v2579 = vadd.f32 %v2577, %v2578
    %v2580 = vtanh.pop %v2579
    %v2581 = vmul.f32 %v2575, %v2580
    %v2582 = vld [vmem:[%s1002] sm:$0xff]
    %v2583 = vld [vmem:[%s1002 + $0x8] sm:$0xff]
    %v2584 = vld [vmem:[%s1002 + $0x10] sm:$0xff]
    %v2585 = vld [vmem:[%s1002 + $0x18] sm:$0xff]
    %v2586 = vpack.c.bf16 %v2581, %v2581
    %2587 = vmatpush.bf16.msra.mxu0 %v2179
    %2588 = vmatpush.bf16.msra.mxu0 %v2175
    %2589 = vmatpush.bf16.msra.mxu0 %v2171
    %2590 = vmatpush.bf16.msra.mxu0 %v2167
    %2591 = vmatpush.bf16.msra.mxu0 %v2163
    %2592 = vmatpush.bf16.msra.mxu0 %v2159
    %2593 = vmatpush.bf16.msra.mxu0 %v2155
    %2594 = vmatpush.bf16.msra.mxu0 %v2151
    %2595 = vmatmul.bf16.gmra.mxu0 %v2586
    %v2596 = vpop.f32.mrf.mxu0
    %v2597 = vadd.f32 0.0, %v2596
    %v2598 = vpop.f32.mrf.mxu0
    %2599 = vdwg.mxu0
    %2600 = vmatpush.bf16.msra.mxu0 %v2180
    %2601 = vmatpush.bf16.msra.mxu0 %v2176
    %2602 = vmatpush.bf16.msra.mxu0 %v2172
    %2603 = vmatpush.bf16.msra.mxu0 %v2168
    %2604 = vmatpush.bf16.msra.mxu0 %v2164
    %2605 = vmatpush.bf16.msra.mxu0 %v2160
    %2606 = vmatpush.bf16.msra.mxu0 %v2156
    %2607 = vmatpush.bf16.msra.mxu0 %v2152
    %2608 = vmatmul.bf16.gmra.mxu0 %v2586
    %v2609 = vpop.f32.mrf.mxu0
    %v2610 = vadd.f32 0.0, %v2609
    %v2611 = vpop.f32.mrf.mxu0
    %2612 = vdwg.mxu0
    %2613 = vmatpush.bf16.msra.mxu0 %v2181
    %2614 = vmatpush.bf16.msra.mxu0 %v2177
    %2615 = vmatpush.bf16.msra.mxu0 %v2173
    %2616 = vmatpush.bf16.msra.mxu0 %v2169
    %2617 = vmatpush.bf16.msra.mxu0 %v2165
    %2618 = vmatpush.bf16.msra.mxu0 %v2161
    %2619 = vmatpush.bf16.msra.mxu0 %v2157
    %2620 = vmatpush.bf16.msra.mxu0 %v2153
    %2621 = vmatmul.bf16.gmra.mxu0 %v2586
    %v2622 = vpop.f32.mrf.mxu0
    %v2623 = vadd.f32 0.0, %v2622
    %v2624 = vpop.f32.mrf.mxu0
    %2625 = vdwg.mxu0
    %2626 = vmatpush.bf16.msra.mxu0 %v2182
    %2627 = vmatpush.bf16.msra.mxu0 %v2178
    %2628 = vmatpush.bf16.msra.mxu0 %v2174
    %2629 = vmatpush.bf16.msra.mxu0 %v2170
    %2630 = vmatpush.bf16.msra.mxu0 %v2166
    %2631 = vmatpush.bf16.msra.mxu0 %v2162
    %2632 = vmatpush.bf16.msra.mxu0 %v2158
    %2633 = vmatpush.bf16.msra.mxu0 %v2154
    %2634 = vmatmul.bf16.gmra.mxu0 %v2586
    %v2635 = vpop.f32.mrf.mxu0
    %v2636 = vadd.f32 0.0, %v2635
    %v2637 = vpop.f32.mrf.mxu0
    %2638 = vdwg.mxu0
    %v2639 = vadd.f32 %v2582, %v2597
    %v2640 = vadd.f32 %v2583, %v2610
    %v2641 = vadd.f32 %v2584, %v2623
    %v2642 = vadd.f32 %v2585, %v2636
    %v2643 = vxor.u32 %v2639, 2147483648
    %v2644 = vxor.u32 %v2640, 2147483648
    %v2645 = vxor.u32 %v2641, 2147483648
    %v2646 = vmul.f32 %v2643, 1.442695
    %v2647 = vpow.pop %v2646
    %v2648 = vmul.f32 %v2644, 1.442695
    %v2649 = vpow.pop %v2648
    %v2650 = vmul.f32 %v2645, 1.442695
    %v2651 = vpow.pop %v2650
    %v2652 = vadd.f32 %v2647, 1.0
    %v2653 = vadd.f32 %v2649, 1.0
    %v2654 = vadd.f32 %v2651, 1.0
    %v2655 = vrcp.pop %v2652
    %v2656 = vmul.f32 %v2652, %v2655
    %v2657 = vsub.f32 1.0, %v2656
    %v2658 = vmul.f32 %v2655, %v2657
    %v2659 = vadd.f32 %v2655, %v2658
    %vm2660 = vweird.f32 %v2652
    %vm2661 = vweird.f32 %v2655
    %vm2662 = vmor %vm2660, %vm2661
    %v2663 = vsel %vm2662, %v2655, %v2659
    %v2664 = vand.u32 2147483647, %v2652
    %vm2665 = vcmp.eq.f32.partialorder %v2664, 8.507059e+37
    %v2666 = vand.u32 %v2652, 2147483648
    %v2667 = vor.u32 1.1754944e-38, %v2666
    %v2668 = vsel %vm2665, %v2667, %v2663
    %v2669 = vmul.f32 1.0, %v2668
    %v2670 = vrcp.pop %v2653
    %v2671 = vmul.f32 %v2653, %v2670
    %v2672 = vsub.f32 1.0, %v2671
    %v2673 = vmul.f32 %v2670, %v2672
    %v2674 = vadd.f32 %v2670, %v2673
    %vm2675 = vweird.f32 %v2653
    %vm2676 = vweird.f32 %v2670
    %vm2677 = vmor %vm2675, %vm2676
    %v2678 = vsel %vm2677, %v2670, %v2674
    %v2679 = vand.u32 2147483647, %v2653
    %vm2680 = vcmp.eq.f32.partialorder %v2679, 8.507059e+37
    %v2681 = vand.u32 %v2653, 2147483648
    %v2682 = vor.u32 1.1754944e-38, %v2681
    %v2683 = vsel %vm2680, %v2682, %v2678
    %v2684 = vmul.f32 1.0, %v2683
    %v2685 = vrcp.pop %v2654
    %v2686 = vmul.f32 %v2654, %v2685
    %v2687 = vsub.f32 1.0, %v2686
    %v2688 = vmul.f32 %v2685, %v2687
    %v2689 = vadd.f32 %v2685, %v2688
    %vm2690 = vweird.f32 %v2654
    %vm2691 = vweird.f32 %v2685
    %vm2692 = vmor %vm2690, %vm2691
    %v2693 = vsel %vm2692, %v2685, %v2689
    %v2694 = vand.u32 2147483647, %v2654
    %vm2695 = vcmp.eq.f32.partialorder %v2694, 8.507059e+37
    %v2696 = vand.u32 %v2654, 2147483648
    %v2697 = vor.u32 1.1754944e-38, %v2696
    %v2698 = vsel %vm2695, %v2697, %v2693
    %v2699 = vmul.f32 1.0, %v2698
    %v2700 = vtanh.pop %v2642
    %v2701 = vmul.f32 %v2684, %v2579
    %v2702 = vmul.f32 %v2669, %v2700
    %v2703 = vadd.f32 %v2701, %v2702
    %v2704 = vtanh.pop %v2703
    %v2705 = vmul.f32 %v2699, %v2704
    %v2706 = vld [vmem:[%s1129] sm:$0xff]
    %v2707 = vld [vmem:[%s1129 + $0x8] sm:$0xff]
    %v2708 = vld [vmem:[%s1129 + $0x10] sm:$0xff]
    %v2709 = vld [vmem:[%s1129 + $0x18] sm:$0xff]
    %v2710 = vpack.c.bf16 %v2705, %v2705
    %2711 = vmatpush.bf16.msra.mxu0 %v2179
    %2712 = vmatpush.bf16.msra.mxu0 %v2175
    %2713 = vmatpush.bf16.msra.mxu0 %v2171
    %2714 = vmatpush.bf16.msra.mxu0 %v2167
    %2715 = vmatpush.bf16.msra.mxu0 %v2163
    %2716 = vmatpush.bf16.msra.mxu0 %v2159
    %2717 = vmatpush.bf16.msra.mxu0 %v2155
    %2718 = vmatpush.bf16.msra.mxu0 %v2151
    %2719 = vmatmul.bf16.gmra.mxu0 %v2710
    %v2720 = vpop.f32.mrf.mxu0
    %v2721 = vadd.f32 0.0, %v2720
    %v2722 = vpop.f32.mrf.mxu0
    %2723 = vdwg.mxu0
    %2724 = vmatpush.bf16.msra.mxu0 %v2180
    %2725 = vmatpush.bf16.msra.mxu0 %v2176
    %2726 = vmatpush.bf16.msra.mxu0 %v2172
    %2727 = vmatpush.bf16.msra.mxu0 %v2168
    %2728 = vmatpush.bf16.msra.mxu0 %v2164
    %2729 = vmatpush.bf16.msra.mxu0 %v2160
    %2730 = vmatpush.bf16.msra.mxu0 %v2156
    %2731 = vmatpush.bf16.msra.mxu0 %v2152
    %2732 = vmatmul.bf16.gmra.mxu0 %v2710
    %v2733 = vpop.f32.mrf.mxu0
    %v2734 = vadd.f32 0.0, %v2733
    %v2735 = vpop.f32.mrf.mxu0
    %2736 = vdwg.mxu0
    %2737 = vmatpush.bf16.msra.mxu0 %v2181
    %2738 = vmatpush.bf16.msra.mxu0 %v2177
    %2739 = vmatpush.bf16.msra.mxu0 %v2173
    %2740 = vmatpush.bf16.msra.mxu0 %v2169
    %2741 = vmatpush.bf16.msra.mxu0 %v2165
    %2742 = vmatpush.bf16.msra.mxu0 %v2161
    %2743 = vmatpush.bf16.msra.mxu0 %v2157
    %2744 = vmatpush.bf16.msra.mxu0 %v2153
    %2745 = vmatmul.bf16.gmra.mxu0 %v2710
    %v2746 = vpop.f32.mrf.mxu0
    %v2747 = vadd.f32 0.0, %v2746
    %v2748 = vpop.f32.mrf.mxu0
    %2749 = vdwg.mxu0
    %2750 = vmatpush.bf16.msra.mxu0 %v2182
    %2751 = vmatpush.bf16.msra.mxu0 %v2178
    %2752 = vmatpush.bf16.msra.mxu0 %v2174
    %2753 = vmatpush.bf16.msra.mxu0 %v2170
    %2754 = vmatpush.bf16.msra.mxu0 %v2166
    %2755 = vmatpush.bf16.msra.mxu0 %v2162
    %2756 = vmatpush.bf16.msra.mxu0 %v2158
    %2757 = vmatpush.bf16.msra.mxu0 %v2154
    %2758 = vmatmul.bf16.gmra.mxu0 %v2710
    %v2759 = vpop.f32.mrf.mxu0
    %v2760 = vadd.f32 0.0, %v2759
    %v2761 = vpop.f32.mrf.mxu0
    %2762 = vdwg.mxu0
    %v2763 = vadd.f32 %v2706, %v2721
    %v2764 = vadd.f32 %v2707, %v2734
    %v2765 = vadd.f32 %v2708, %v2747
    %v2766 = vadd.f32 %v2709, %v2760
    %v2767 = vxor.u32 %v2763, 2147483648
    %v2768 = vxor.u32 %v2764, 2147483648
    %v2769 = vxor.u32 %v2765, 2147483648
    %v2770 = vmul.f32 %v2767, 1.442695
    %v2771 = vpow.pop %v2770
    %v2772 = vmul.f32 %v2768, 1.442695
    %v2773 = vpow.pop %v2772
    %v2774 = vmul.f32 %v2769, 1.442695
    %v2775 = vpow.pop %v2774
    %v2776 = vadd.f32 %v2771, 1.0
    %v2777 = vadd.f32 %v2773, 1.0
    %v2778 = vadd.f32 %v2775, 1.0
    %v2779 = vrcp.pop %v2776
    %v2780 = vmul.f32 %v2776, %v2779
    %v2781 = vsub.f32 1.0, %v2780
    %v2782 = vmul.f32 %v2779, %v2781
    %v2783 = vadd.f32 %v2779, %v2782
    %vm2784 = vweird.f32 %v2776
    %vm2785 = vweird.f32 %v2779
    %vm2786 = vmor %vm2784, %vm2785
    %v2787 = vsel %vm2786, %v2779, %v2783
    %v2788 = vand.u32 2147483647, %v2776
    %vm2789 = vcmp.eq.f32.partialorder %v2788, 8.507059e+37
    %v2790 = vand.u32 %v2776, 2147483648
    %v2791 = vor.u32 1.1754944e-38, %v2790
    %v2792 = vsel %vm2789, %v2791, %v2787
    %v2793 = vmul.f32 1.0, %v2792
    %v2794 = vrcp.pop %v2777
    %v2795 = vmul.f32 %v2777, %v2794
    %v2796 = vsub.f32 1.0, %v2795
    %v2797 = vmul.f32 %v2794, %v2796
    %v2798 = vadd.f32 %v2794, %v2797
    %vm2799 = vweird.f32 %v2777
    %vm2800 = vweird.f32 %v2794
    %vm2801 = vmor %vm2799, %vm2800
    %v2802 = vsel %vm2801, %v2794, %v2798
    %v2803 = vand.u32 2147483647, %v2777
    %vm2804 = vcmp.eq.f32.partialorder %v2803, 8.507059e+37
    %v2805 = vand.u32 %v2777, 2147483648
    %v2806 = vor.u32 1.1754944e-38, %v2805
    %v2807 = vsel %vm2804, %v2806, %v2802
    %v2808 = vmul.f32 1.0, %v2807
    %v2809 = vrcp.pop %v2778
    %v2810 = vmul.f32 %v2778, %v2809
    %v2811 = vsub.f32 1.0, %v2810
    %v2812 = vmul.f32 %v2809, %v2811
    %v2813 = vadd.f32 %v2809, %v2812
    %vm2814 = vweird.f32 %v2778
    %vm2815 = vweird.f32 %v2809
    %vm2816 = vmor %vm2814, %vm2815
    %v2817 = vsel %vm2816, %v2809, %v2813
    %v2818 = vand.u32 2147483647, %v2778
    %vm2819 = vcmp.eq.f32.partialorder %v2818, 8.507059e+37
    %v2820 = vand.u32 %v2778, 2147483648
    %v2821 = vor.u32 1.1754944e-38, %v2820
    %v2822 = vsel %vm2819, %v2821, %v2817
    %v2823 = vmul.f32 1.0, %v2822
    %v2824 = vtanh.pop %v2766
    %v2825 = vmul.f32 %v2808, %v2703
    %v2826 = vmul.f32 %v2793, %v2824
    %v2827 = vadd.f32 %v2825, %v2826
    %v2828 = vtanh.pop %v2827
    %v2829 = vmul.f32 %v2823, %v2828
    %v2830 = vld [vmem:[%s1256] sm:$0xff]
    %v2831 = vld [vmem:[%s1256 + $0x8] sm:$0xff]
    %v2832 = vld [vmem:[%s1256 + $0x10] sm:$0xff]
    %v2833 = vld [vmem:[%s1256 + $0x18] sm:$0xff]
    %v2834 = vpack.c.bf16 %v2829, %v2829
    %2835 = vmatpush.bf16.msra.mxu0 %v2179
    %2836 = vmatpush.bf16.msra.mxu0 %v2175
    %2837 = vmatpush.bf16.msra.mxu0 %v2171
    %2838 = vmatpush.bf16.msra.mxu0 %v2167
    %2839 = vmatpush.bf16.msra.mxu0 %v2163
    %2840 = vmatpush.bf16.msra.mxu0 %v2159
    %2841 = vmatpush.bf16.msra.mxu0 %v2155
    %2842 = vmatpush.bf16.msra.mxu0 %v2151
    %2843 = vmatmul.bf16.gmra.mxu0 %v2834
    %v2844 = vpop.f32.mrf.mxu0
    %v2845 = vadd.f32 0.0, %v2844
    %v2846 = vpop.f32.mrf.mxu0
    %2847 = vdwg.mxu0
    %2848 = vmatpush.bf16.msra.mxu0 %v2180
    %2849 = vmatpush.bf16.msra.mxu0 %v2176
    %2850 = vmatpush.bf16.msra.mxu0 %v2172
    %2851 = vmatpush.bf16.msra.mxu0 %v2168
    %2852 = vmatpush.bf16.msra.mxu0 %v2164
    %2853 = vmatpush.bf16.msra.mxu0 %v2160
    %2854 = vmatpush.bf16.msra.mxu0 %v2156
    %2855 = vmatpush.bf16.msra.mxu0 %v2152
    %2856 = vmatmul.bf16.gmra.mxu0 %v2834
    %v2857 = vpop.f32.mrf.mxu0
    %v2858 = vadd.f32 0.0, %v2857
    %v2859 = vpop.f32.mrf.mxu0
    %2860 = vdwg.mxu0
    %2861 = vmatpush.bf16.msra.mxu0 %v2181
    %2862 = vmatpush.bf16.msra.mxu0 %v2177
    %2863 = vmatpush.bf16.msra.mxu0 %v2173
    %2864 = vmatpush.bf16.msra.mxu0 %v2169
    %2865 = vmatpush.bf16.msra.mxu0 %v2165
    %2866 = vmatpush.bf16.msra.mxu0 %v2161
    %2867 = vmatpush.bf16.msra.mxu0 %v2157
    %2868 = vmatpush.bf16.msra.mxu0 %v2153
    %2869 = vmatmul.bf16.gmra.mxu0 %v2834
    %v2870 = vpop.f32.mrf.mxu0
    %v2871 = vadd.f32 0.0, %v2870
    %v2872 = vpop.f32.mrf.mxu0
    %2873 = vdwg.mxu0
    %2874 = vmatpush.bf16.msra.mxu0 %v2182
    %2875 = vmatpush.bf16.msra.mxu0 %v2178
    %2876 = vmatpush.bf16.msra.mxu0 %v2174
    %2877 = vmatpush.bf16.msra.mxu0 %v2170
    %2878 = vmatpush.bf16.msra.mxu0 %v2166
    %2879 = vmatpush.bf16.msra.mxu0 %v2162
    %2880 = vmatpush.bf16.msra.mxu0 %v2158
    %2881 = vmatpush.bf16.msra.mxu0 %v2154
    %2882 = vmatmul.bf16.gmra.mxu0 %v2834
    %v2883 = vpop.f32.mrf.mxu0
    %v2884 = vadd.f32 0.0, %v2883
    %v2885 = vpop.f32.mrf.mxu0
    %2886 = vdwg.mxu0
    %v2887 = vadd.f32 %v2830, %v2845
    %v2888 = vadd.f32 %v2831, %v2858
    %v2889 = vadd.f32 %v2832, %v2871
    %v2890 = vadd.f32 %v2833, %v2884
    %v2891 = vxor.u32 %v2887, 2147483648
    %v2892 = vxor.u32 %v2888, 2147483648
    %v2893 = vxor.u32 %v2889, 2147483648
    %v2894 = vmul.f32 %v2891, 1.442695
    %v2895 = vpow.pop %v2894
    %v2896 = vmul.f32 %v2892, 1.442695
    %v2897 = vpow.pop %v2896
    %v2898 = vmul.f32 %v2893, 1.442695
    %v2899 = vpow.pop %v2898
    %v2900 = vadd.f32 %v2895, 1.0
    %v2901 = vadd.f32 %v2897, 1.0
    %v2902 = vadd.f32 %v2899, 1.0
    %v2903 = vrcp.pop %v2900
    %v2904 = vmul.f32 %v2900, %v2903
    %v2905 = vsub.f32 1.0, %v2904
    %v2906 = vmul.f32 %v2903, %v2905
    %v2907 = vadd.f32 %v2903, %v2906
    %vm2908 = vweird.f32 %v2900
    %vm2909 = vweird.f32 %v2903
    %vm2910 = vmor %vm2908, %vm2909
    %v2911 = vsel %vm2910, %v2903, %v2907
    %v2912 = vand.u32 2147483647, %v2900
    %vm2913 = vcmp.eq.f32.partialorder %v2912, 8.507059e+37
    %v2914 = vand.u32 %v2900, 2147483648
    %v2915 = vor.u32 1.1754944e-38, %v2914
    %v2916 = vsel %vm2913, %v2915, %v2911
    %v2917 = vmul.f32 1.0, %v2916
    %v2918 = vrcp.pop %v2901
    %v2919 = vmul.f32 %v2901, %v2918
    %v2920 = vsub.f32 1.0, %v2919
    %v2921 = vmul.f32 %v2918, %v2920
    %v2922 = vadd.f32 %v2918, %v2921
    %vm2923 = vweird.f32 %v2901
    %vm2924 = vweird.f32 %v2918
    %vm2925 = vmor %vm2923, %vm2924
    %v2926 = vsel %vm2925, %v2918, %v2922
    %v2927 = vand.u32 2147483647, %v2901
    %vm2928 = vcmp.eq.f32.partialorder %v2927, 8.507059e+37
    %v2929 = vand.u32 %v2901, 2147483648
    %v2930 = vor.u32 1.1754944e-38, %v2929
    %v2931 = vsel %vm2928, %v2930, %v2926
    %v2932 = vmul.f32 1.0, %v2931
    %v2933 = vrcp.pop %v2902
    %v2934 = vmul.f32 %v2902, %v2933
    %v2935 = vsub.f32 1.0, %v2934
    %v2936 = vmul.f32 %v2933, %v2935
    %v2937 = vadd.f32 %v2933, %v2936
    %vm2938 = vweird.f32 %v2902
    %vm2939 = vweird.f32 %v2933
    %vm2940 = vmor %vm2938, %vm2939
    %v2941 = vsel %vm2940, %v2933, %v2937
    %v2942 = vand.u32 2147483647, %v2902
    %vm2943 = vcmp.eq.f32.partialorder %v2942, 8.507059e+37
    %v2944 = vand.u32 %v2902, 2147483648
    %v2945 = vor.u32 1.1754944e-38, %v2944
    %v2946 = vsel %vm2943, %v2945, %v2941
    %v2947 = vmul.f32 1.0, %v2946
    %v2948 = vtanh.pop %v2890
    %v2949 = vmul.f32 %v2932, %v2827
    %v2950 = vmul.f32 %v2917, %v2948
    %v2951 = vadd.f32 %v2949, %v2950
    %v2952 = vtanh.pop %v2951
    %v2953 = vmul.f32 %v2947, %v2952
    %v2954 = vld [vmem:[%s1383] sm:$0xff]
    %v2955 = vld [vmem:[%s1383 + $0x8] sm:$0xff]
    %v2956 = vld [vmem:[%s1383 + $0x10] sm:$0xff]
    %v2957 = vld [vmem:[%s1383 + $0x18] sm:$0xff]
    %v2958 = vpack.c.bf16 %v2953, %v2953
    %2959 = vmatpush.bf16.msra.mxu0 %v2179
    %2960 = vmatpush.bf16.msra.mxu0 %v2175
    %2961 = vmatpush.bf16.msra.mxu0 %v2171
    %2962 = vmatpush.bf16.msra.mxu0 %v2167
    %2963 = vmatpush.bf16.msra.mxu0 %v2163
    %2964 = vmatpush.bf16.msra.mxu0 %v2159
    %2965 = vmatpush.bf16.msra.mxu0 %v2155
    %2966 = vmatpush.bf16.msra.mxu0 %v2151
    %2967 = vmatmul.bf16.gmra.mxu0 %v2958
    %v2968 = vpop.f32.mrf.mxu0
    %v2969 = vadd.f32 0.0, %v2968
    %v2970 = vpop.f32.mrf.mxu0
    %2971 = vdwg.mxu0
    %2972 = vmatpush.bf16.msra.mxu0 %v2180
    %2973 = vmatpush.bf16.msra.mxu0 %v2176
    %2974 = vmatpush.bf16.msra.mxu0 %v2172
    %2975 = vmatpush.bf16.msra.mxu0 %v2168
    %2976 = vmatpush.bf16.msra.mxu0 %v2164
    %2977 = vmatpush.bf16.msra.mxu0 %v2160
    %2978 = vmatpush.bf16.msra.mxu0 %v2156
    %2979 = vmatpush.bf16.msra.mxu0 %v2152
    %2980 = vmatmul.bf16.gmra.mxu0 %v2958
    %v2981 = vpop.f32.mrf.mxu0
    %v2982 = vadd.f32 0.0, %v2981
    %v2983 = vpop.f32.mrf.mxu0
    %2984 = vdwg.mxu0
    %2985 = vmatpush.bf16.msra.mxu0 %v2181
    %2986 = vmatpush.bf16.msra.mxu0 %v2177
    %2987 = vmatpush.bf16.msra.mxu0 %v2173
    %2988 = vmatpush.bf16.msra.mxu0 %v2169
    %2989 = vmatpush.bf16.msra.mxu0 %v2165
    %2990 = vmatpush.bf16.msra.mxu0 %v2161
    %2991 = vmatpush.bf16.msra.mxu0 %v2157
    %2992 = vmatpush.bf16.msra.mxu0 %v2153
    %2993 = vmatmul.bf16.gmra.mxu0 %v2958
    %v2994 = vpop.f32.mrf.mxu0
    %v2995 = vadd.f32 0.0, %v2994
    %v2996 = vpop.f32.mrf.mxu0
    %2997 = vdwg.mxu0
    %2998 = vmatpush.bf16.msra.mxu0 %v2182
    %2999 = vmatpush.bf16.msra.mxu0 %v2178
    %3000 = vmatpush.bf16.msra.mxu0 %v2174
    %3001 = vmatpush.bf16.msra.mxu0 %v2170
    %3002 = vmatpush.bf16.msra.mxu0 %v2166
    %3003 = vmatpush.bf16.msra.mxu0 %v2162
    %3004 = vmatpush.bf16.msra.mxu0 %v2158
    %3005 = vmatpush.bf16.msra.mxu0 %v2154
    %3006 = vmatmul.bf16.gmra.mxu0 %v2958
    %v3007 = vpop.f32.mrf.mxu0
    %v3008 = vadd.f32 0.0, %v3007
    %v3009 = vpop.f32.mrf.mxu0
    %3010 = vdwg.mxu0
    %v3011 = vadd.f32 %v2954, %v2969
    %v3012 = vadd.f32 %v2955, %v2982
    %v3013 = vadd.f32 %v2956, %v2995
    %v3014 = vadd.f32 %v2957, %v3008
    %v3015 = vxor.u32 %v3011, 2147483648
    %v3016 = vxor.u32 %v3012, 2147483648
    %v3017 = vxor.u32 %v3013, 2147483648
    %v3018 = vmul.f32 %v3015, 1.442695
    %v3019 = vpow.pop %v3018
    %v3020 = vmul.f32 %v3016, 1.442695
    %v3021 = vpow.pop %v3020
    %v3022 = vmul.f32 %v3017, 1.442695
    %v3023 = vpow.pop %v3022
    %v3024 = vadd.f32 %v3019, 1.0
    %v3025 = vadd.f32 %v3021, 1.0
    %v3026 = vadd.f32 %v3023, 1.0
    %v3027 = vrcp.pop %v3024
    %v3028 = vmul.f32 %v3024, %v3027
    %v3029 = vsub.f32 1.0, %v3028
    %v3030 = vmul.f32 %v3027, %v3029
    %v3031 = vadd.f32 %v3027, %v3030
    %vm3032 = vweird.f32 %v3024
    %vm3033 = vweird.f32 %v3027
    %vm3034 = vmor %vm3032, %vm3033
    %v3035 = vsel %vm3034, %v3027, %v3031
    %v3036 = vand.u32 2147483647, %v3024
    %vm3037 = vcmp.eq.f32.partialorder %v3036, 8.507059e+37
    %v3038 = vand.u32 %v3024, 2147483648
    %v3039 = vor.u32 1.1754944e-38, %v3038
    %v3040 = vsel %vm3037, %v3039, %v3035
    %v3041 = vmul.f32 1.0, %v3040
    %v3042 = vrcp.pop %v3025
    %v3043 = vmul.f32 %v3025, %v3042
    %v3044 = vsub.f32 1.0, %v3043
    %v3045 = vmul.f32 %v3042, %v3044
    %v3046 = vadd.f32 %v3042, %v3045
    %vm3047 = vweird.f32 %v3025
    %vm3048 = vweird.f32 %v3042
    %vm3049 = vmor %vm3047, %vm3048
    %v3050 = vsel %vm3049, %v3042, %v3046
    %v3051 = vand.u32 2147483647, %v3025
    %vm3052 = vcmp.eq.f32.partialorder %v3051, 8.507059e+37
    %v3053 = vand.u32 %v3025, 2147483648
    %v3054 = vor.u32 1.1754944e-38, %v3053
    %v3055 = vsel %vm3052, %v3054, %v3050
    %v3056 = vmul.f32 1.0, %v3055
    %v3057 = vrcp.pop %v3026
    %v3058 = vmul.f32 %v3026, %v3057
    %v3059 = vsub.f32 1.0, %v3058
    %v3060 = vmul.f32 %v3057, %v3059
    %v3061 = vadd.f32 %v3057, %v3060
    %vm3062 = vweird.f32 %v3026
    %vm3063 = vweird.f32 %v3057
    %vm3064 = vmor %vm3062, %vm3063
    %v3065 = vsel %vm3064, %v3057, %v3061
    %v3066 = vand.u32 2147483647, %v3026
    %vm3067 = vcmp.eq.f32.partialorder %v3066, 8.507059e+37
    %v3068 = vand.u32 %v3026, 2147483648
    %v3069 = vor.u32 1.1754944e-38, %v3068
    %v3070 = vsel %vm3067, %v3069, %v3065
    %v3071 = vmul.f32 1.0, %v3070
    %v3072 = vtanh.pop %v3014
    %v3073 = vmul.f32 %v3056, %v2951
    %v3074 = vmul.f32 %v3041, %v3072
    %v3075 = vadd.f32 %v3073, %v3074
    %v3076 = vtanh.pop %v3075
    %v3077 = vmul.f32 %v3071, %v3076
    %v3078 = vld [vmem:[%s1510] sm:$0xff]
    %v3079 = vld [vmem:[%s1510 + $0x8] sm:$0xff]
    %v3080 = vld [vmem:[%s1510 + $0x10] sm:$0xff]
    %v3081 = vld [vmem:[%s1510 + $0x18] sm:$0xff]
    %v3082 = vpack.c.bf16 %v3077, %v3077
    %3083 = vmatpush.bf16.msra.mxu0 %v2179
    %3084 = vmatpush.bf16.msra.mxu0 %v2175
    %3085 = vmatpush.bf16.msra.mxu0 %v2171
    %3086 = vmatpush.bf16.msra.mxu0 %v2167
    %3087 = vmatpush.bf16.msra.mxu0 %v2163
    %3088 = vmatpush.bf16.msra.mxu0 %v2159
    %3089 = vmatpush.bf16.msra.mxu0 %v2155
    %3090 = vmatpush.bf16.msra.mxu0 %v2151
    %3091 = vmatmul.bf16.gmra.mxu0 %v3082
    %v3092 = vpop.f32.mrf.mxu0
    %v3093 = vadd.f32 0.0, %v3092
    %v3094 = vpop.f32.mrf.mxu0
    %3095 = vdwg.mxu0
    %3096 = vmatpush.bf16.msra.mxu0 %v2180
    %3097 = vmatpush.bf16.msra.mxu0 %v2176
    %3098 = vmatpush.bf16.msra.mxu0 %v2172
    %3099 = vmatpush.bf16.msra.mxu0 %v2168
    %3100 = vmatpush.bf16.msra.mxu0 %v2164
    %3101 = vmatpush.bf16.msra.mxu0 %v2160
    %3102 = vmatpush.bf16.msra.mxu0 %v2156
    %3103 = vmatpush.bf16.msra.mxu0 %v2152
    %3104 = vmatmul.bf16.gmra.mxu0 %v3082
    %v3105 = vpop.f32.mrf.mxu0
    %v3106 = vadd.f32 0.0, %v3105
    %v3107 = vpop.f32.mrf.mxu0
    %3108 = vdwg.mxu0
    %3109 = vmatpush.bf16.msra.mxu0 %v2181
    %3110 = vmatpush.bf16.msra.mxu0 %v2177
    %3111 = vmatpush.bf16.msra.mxu0 %v2173
    %3112 = vmatpush.bf16.msra.mxu0 %v2169
    %3113 = vmatpush.bf16.msra.mxu0 %v2165
    %3114 = vmatpush.bf16.msra.mxu0 %v2161
    %3115 = vmatpush.bf16.msra.mxu0 %v2157
    %3116 = vmatpush.bf16.msra.mxu0 %v2153
    %3117 = vmatmul.bf16.gmra.mxu0 %v3082
    %v3118 = vpop.f32.mrf.mxu0
    %v3119 = vadd.f32 0.0, %v3118
    %v3120 = vpop.f32.mrf.mxu0
    %3121 = vdwg.mxu0
    %3122 = vmatpush.bf16.msra.mxu0 %v2182
    %3123 = vmatpush.bf16.msra.mxu0 %v2178
    %3124 = vmatpush.bf16.msra.mxu0 %v2174
    %3125 = vmatpush.bf16.msra.mxu0 %v2170
    %3126 = vmatpush.bf16.msra.mxu0 %v2166
    %3127 = vmatpush.bf16.msra.mxu0 %v2162
    %3128 = vmatpush.bf16.msra.mxu0 %v2158
    %3129 = vmatpush.bf16.msra.mxu0 %v2154
    %3130 = vmatmul.bf16.gmra.mxu0 %v3082
    %v3131 = vpop.f32.mrf.mxu0
    %v3132 = vadd.f32 0.0, %v3131
    %v3133 = vpop.f32.mrf.mxu0
    %3134 = vdwg.mxu0
    %v3135 = vadd.f32 %v3078, %v3093
    %v3136 = vadd.f32 %v3079, %v3106
    %v3137 = vadd.f32 %v3080, %v3119
    %v3138 = vadd.f32 %v3081, %v3132
    %v3139 = vxor.u32 %v3135, 2147483648
    %v3140 = vxor.u32 %v3136, 2147483648
    %v3141 = vxor.u32 %v3137, 2147483648
    %v3142 = vmul.f32 %v3139, 1.442695
    %v3143 = vpow.pop %v3142
    %v3144 = vmul.f32 %v3140, 1.442695
    %v3145 = vpow.pop %v3144
    %v3146 = vmul.f32 %v3141, 1.442695
    %v3147 = vpow.pop %v3146
    %v3148 = vadd.f32 %v3143, 1.0
    %v3149 = vadd.f32 %v3145, 1.0
    %v3150 = vadd.f32 %v3147, 1.0
    %v3151 = vrcp.pop %v3148
    %v3152 = vmul.f32 %v3148, %v3151
    %v3153 = vsub.f32 1.0, %v3152
    %v3154 = vmul.f32 %v3151, %v3153
    %v3155 = vadd.f32 %v3151, %v3154
    %vm3156 = vweird.f32 %v3148
    %vm3157 = vweird.f32 %v3151
    %vm3158 = vmor %vm3156, %vm3157
    %v3159 = vsel %vm3158, %v3151, %v3155
    %v3160 = vand.u32 2147483647, %v3148
    %vm3161 = vcmp.eq.f32.partialorder %v3160, 8.507059e+37
    %v3162 = vand.u32 %v3148, 2147483648
    %v3163 = vor.u32 1.1754944e-38, %v3162
    %v3164 = vsel %vm3161, %v3163, %v3159
    %v3165 = vmul.f32 1.0, %v3164
    %v3166 = vrcp.pop %v3149
    %v3167 = vmul.f32 %v3149, %v3166
    %v3168 = vsub.f32 1.0, %v3167
    %v3169 = vmul.f32 %v3166, %v3168
    %v3170 = vadd.f32 %v3166, %v3169
    %vm3171 = vweird.f32 %v3149
    %vm3172 = vweird.f32 %v3166
    %vm3173 = vmor %vm3171, %vm3172
    %v3174 = vsel %vm3173, %v3166, %v3170
    %v3175 = vand.u32 2147483647, %v3149
    %vm3176 = vcmp.eq.f32.partialorder %v3175, 8.507059e+37
    %v3177 = vand.u32 %v3149, 2147483648
    %v3178 = vor.u32 1.1754944e-38, %v3177
    %v3179 = vsel %vm3176, %v3178, %v3174
    %v3180 = vmul.f32 1.0, %v3179
    %v3181 = vrcp.pop %v3150
    %v3182 = vmul.f32 %v3150, %v3181
    %v3183 = vsub.f32 1.0, %v3182
    %v3184 = vmul.f32 %v3181, %v3183
    %v3185 = vadd.f32 %v3181, %v3184
    %vm3186 = vweird.f32 %v3150
    %vm3187 = vweird.f32 %v3181
    %vm3188 = vmor %vm3186, %vm3187
    %v3189 = vsel %vm3188, %v3181, %v3185
    %v3190 = vand.u32 2147483647, %v3150
    %vm3191 = vcmp.eq.f32.partialorder %v3190, 8.507059e+37
    %v3192 = vand.u32 %v3150, 2147483648
    %v3193 = vor.u32 1.1754944e-38, %v3192
    %v3194 = vsel %vm3191, %v3193, %v3189
    %v3195 = vmul.f32 1.0, %v3194
    %v3196 = vtanh.pop %v3138
    %v3197 = vmul.f32 %v3180, %v3075
    %v3198 = vmul.f32 %v3165, %v3196
    %v3199 = vadd.f32 %v3197, %v3198
    %v3200 = vtanh.pop %v3199
    %v3201 = vmul.f32 %v3195, %v3200
    %v3202 = vpack.c.bf16 %v3201, %v3201
    %v3203 = vld [vmem:[#allocation4] sm:$0xf]
    %v3204 = vld [vmem:[#allocation4 + $0x4] sm:$0xf]
    %v3205 = vld [vmem:[#allocation4 + $0x8] sm:$0xf]
    %v3206 = vld [vmem:[#allocation4 + $0xc] sm:$0xf]
    %v3207 = vld [vmem:[#allocation4 + $0x10] sm:$0xf]
    %v3208 = vld [vmem:[#allocation4 + $0x14] sm:$0xf]
    %v3209 = vld [vmem:[#allocation4 + $0x18] sm:$0xf]
    %v3210 = vld [vmem:[#allocation4 + $0x1c] sm:$0xf]
    %v3211 = vld [vmem:[#allocation4 + $0x20] sm:$0xf]
    %v3212 = vld [vmem:[#allocation4 + $0x24] sm:$0xf]
    %v3213 = vld [vmem:[#allocation4 + $0x28] sm:$0xf]
    %v3214 = vld [vmem:[#allocation4 + $0x2c] sm:$0xf]
    %v3215 = vld [vmem:[#allocation4 + $0x30] sm:$0xf]
    %v3216 = vld [vmem:[#allocation4 + $0x34] sm:$0xf]
    %v3217 = vld [vmem:[#allocation4 + $0x38] sm:$0xf]
    %v3218 = vld [vmem:[#allocation4 + $0x3c] sm:$0xf]
    %v3219 = vld [vmem:[%s8] sm:$0x1]
    %v3221 = vperm.slane %v3219, 0
    %v3239 = vunpack.c.l.b16 %v3203
    %v3240 = vunpack.c.l.b16 %v3204
    %v3241 = vunpack.c.l.b16 %v3205
    %v3242 = vunpack.c.l.b16 %v3206
    %v3243 = vunpack.c.l.b16 %v3207
    %v3244 = vunpack.c.l.b16 %v3208
    %v3245 = vunpack.c.l.b16 %v3209
    %v3246 = vunpack.c.l.b16 %v3210
    %v3247 = vunpack.c.l.b16 %v3211
    %v3248 = vunpack.c.l.b16 %v3212
    %v3249 = vunpack.c.l.b16 %v3213
    %v3250 = vunpack.c.l.b16 %v3214
    %v3251 = vunpack.c.l.b16 %v3215
    %v3252 = vunpack.c.l.b16 %v3216
    %v3253 = vunpack.c.l.b16 %v3217
    %v3254 = vunpack.c.l.b16 %v3218
    %v3255 = vpack.c.b16 %v3240, %v3239
    %v3256 = vpack.c.b16 %v3242, %v3241
    %v3257 = vpack.c.b16 %v3244, %v3243
    %v3258 = vpack.c.b16 %v3246, %v3245
    %v3259 = vpack.c.b16 %v3248, %v3247
    %v3260 = vpack.c.b16 %v3250, %v3249
    %v3261 = vpack.c.b16 %v3252, %v3251
    %v3262 = vpack.c.b16 %v3254, %v3253
    %3271 = vmatpush.bf16.msra.mxu0 %v3262
    %3272 = vmatpush.bf16.msra.mxu0 %v3261
    %3273 = vmatpush.bf16.msra.mxu0 %v3260
    %3274 = vmatpush.bf16.msra.mxu0 %v3259
    %3275 = vmatpush.bf16.msra.mxu0 %v3258
    %3276 = vmatpush.bf16.msra.mxu0 %v3257
    %3277 = vmatpush.bf16.msra.mxu0 %v3256
    %3278 = vmatpush.bf16.msra.mxu0 %v3255
    %3279 = vmatmul.bf16.gmra.mxu0 %v3202
    %v3280 = vpop.f32.mrf.mxu0
    %v3281 = vadd.f32 %v3221, %v3280
    %v3282 = vpop.f32.mrf.mxu0
    %3283 = vdwg.mxu0
    %3284 = vst [vmem:[%s9] sm:$0xff] %v3281
    // Predicated region
    $region42: #{apt_lstm_forward.1} parent=1 // pred_check
      _
    $region43: #{apt_lstm_forward.1} parent=1 // pred_check_branch
      %3286 = sbr.rel (0) target = $region45
    $region44: #{apt_lstm_forward.1} parent=1 // pred_region
      _
    $region45: #{apt_lstm_forward.1} parent=1 // pred_fallthru
      _
    // Predicated region
    $region46: #{apt_lstm_forward.1} parent=1 // pred_check
      _
    $region47: #{apt_lstm_forward.1} parent=1 // pred_check_branch
      %3288 = sbr.rel (0) target = $region49
    $region48: #{apt_lstm_forward.1} parent=1 // pred_region
      _
    $region49: #{apt_lstm_forward.1} parent=1 // pred_fallthru
      _
    %3289 = vsyncpa [#allocation5], 1

</llo_original>
